<compile_context>
chip_gen: v7x
topology: tpu7x:2x2x1
jax: 0.10.0
libtpu: 0.0.40
codegen_flags: <defaults>
</compile_context>

<pallas_src>
import functools

import numpy as np
import jax
import jax.numpy as jnp
from jax.experimental import pallas as pl
from jax.experimental.pallas import tpu as pltpu

# Module configuration. inplanes == outplanes is required by the module itself
# (out = poolx * gate and y.expand_as(x)); channels must be >= 16 so that
# channel // reduction >= 1 in the SE MLP.
INPLANES = 32
OUTPLANES = 32
REDUCTION = 16
BATCH_TILE = 4          # samples folded per grid step: 4 * 32 = 128 MXU rows


# ------------------------------ Pallas kernel -------------------------------
def _spb_kernel(x_ref, e12t_ref, sm1_ref, sp1_ref, w12_ref, b12_ref,
                g1_ref, g2_ref, w3_ref, b3_ref, fc1_ref, fc2_ref, o_ref, *, H):
    """SPBDislockv3 forward for BT samples. x_ref / o_ref are (BT*C, HW)."""
    f32 = jnp.float32
    xf = x_ref[...]                                                    # (BT*C, HW)

    # Strip pools for all BT samples in one lane-dense matmul; 1/W and 1/H are
    # folded into the selector.  cols [0:H) = mean over W, cols [H:H+W) = mean
    # over H.
    xp = jnp.dot(xf, e12t_ref[...], preferred_element_type=f32)       # (BT*C, H+W)

    # +/-1 tap shifts of the pooled strips (tiny shift matrices also zero the
    # conv padding borders of each strip).
    xp_m1 = jnp.dot(xp, sm1_ref[...], preferred_element_type=f32)     # value at j-1
    xp_p1 = jnp.dot(xp, sp1_ref[...], preferred_element_type=f32)     # value at j+1

    # Both 3-tap strip convs, for all BT samples, collapsed into ONE matmul
    # against a block-diagonal weight: rows [0:R) -> conv1, rows [R:2R) -> conv2.
    x_all = jnp.concatenate([xp_m1, xp, xp_p1], axis=0)               # (3*BT*C, H+W)
    out12 = jnp.dot(w12_ref[...], x_all, preferred_element_type=f32)  # (2*BT*Cm, H+W)
    out12 = out12 + b12_ref[...]                                      # biases on the small tensor
    r = out12.shape[0] // 2

    # Broadcast conv1 over W and conv2 over H back to the full HW map (the
    # selectors also zero out the cross-branch garbage columns), then ReLU.
    s = jnp.dot(out12[:r], g1_ref[...], preferred_element_type=f32) \
        + jnp.dot(out12[r:], g2_ref[...], preferred_element_type=f32)  # (BT*Cm, HW)
    s = jnp.maximum(s, 0.0)                                            # relu(x1 + x2)

    # 1x1 conv + sigmoid spatial gate (block-diagonal over the batch tile).
    a = jnp.dot(w3_ref[...], s, preferred_element_type=f32) + b3_ref[...]
    a = 1.0 / (1.0 + jnp.exp(-a))                                      # (BT*Co, HW)

    # SE channel gate: the global mean reuses the row-pooled strip.
    y0 = jnp.sum(xp[:, :H], axis=1, keepdims=True) * (1.0 / H)         # (BT*C, 1)
    h1 = jnp.maximum(jnp.dot(fc1_ref[...], y0, preferred_element_type=f32), 0.0)
    yg = jnp.dot(fc2_ref[...], h1, preferred_element_type=f32)
    yg = 1.0 / (1.0 + jnp.exp(-yg))                                    # (BT*C, 1)

    # Apply both gates to the (unmodified) input.
    o_ref[...] = (xf * a * yg).astype(o_ref.dtype)


# ------------------------------- wrapper ------------------------------------
def _const_spec(shape):
    n = len(shape)
    return pl.BlockSpec(shape, lambda b: (0,) * n)


def spbdislock_forward(x, params, *, batch_tile=BATCH_TILE):
    B, C, H, W = x.shape
    HW = H * W
    Cm = params['conv1_w'].shape[0]
    Co = params['conv3_w'].shape[0]
    Cr = params['fc1_w'].shape[0]
    assert Co == C, "SPBDislockv3 requires inplanes == outplanes"
    assert Cm == Co, "midplanes == outplanes in this module"

    BT = batch_tile
    pad = (-B) % BT
    if pad:                                   # pad batch to a multiple of BT
        x = jnp.concatenate([x, jnp.zeros((pad, C, H, W), x.dtype)], axis=0)
    Bp = B + pad
    f32 = jnp.float32

    # ---- host (numpy) selector constants: pooling, tap shifts, broadcast ----
    hh = np.arange(HW) // W                   # row of each flat position
    ww = np.arange(HW) % W                    # col of each flat position
    e12t = np.zeros((HW, H + W), np.float32)  # pooling selector, scales folded
    e12t[np.arange(HW), hh] = 1.0 / W         # mean over W   -> col h
    e12t[np.arange(HW), H + ww] = 1.0 / H     # mean over H   -> col H+w
    g1 = np.zeros((H + W, HW), np.float32)    # broadcast conv1 over W
    g1[:H, :] = (np.arange(H)[:, None] == hh[None, :])
    g2 = np.zeros((H + W, HW), np.float32)    # broadcast conv2 over H
    g2[H:, :] = (np.arange(W)[:, None] == ww[None, :])
    sm1 = np.zeros((H + W, H + W), np.float32)  # col j <- strip value at j-1
    sp1 = np.zeros((H + W, H + W), np.float32)  # col j <- strip value at j+1
    for j in range(H + W):
        if j not in (0, H):
            sm1[j - 1, j] = 1.0
        if j not in (H - 1, H + W - 1):
            sp1[j + 1, j] = 1.0

    # ---- block-diagonal (batch-folded) weights: one MXU push per layer/step ----
    eyeB = jnp.eye(BT, dtype=f32)
    w1k = [params['conv1_w'][:, :, k, 0] for k in range(3)]            # (Cm, C)
    w2k = [params['conv2_w'][:, :, 0, k] for k in range(3)]
    w1_bd = jnp.concatenate([jnp.kron(eyeB, w) for w in w1k], axis=1)  # (BT*Cm, 3*BT*C)
    w2_bd = jnp.concatenate([jnp.kron(eyeB, w) for w in w2k], axis=1)
    w12_bd = jnp.concatenate([w1_bd, w2_bd], axis=0)                   # (2*BT*Cm, 3*BT*C)
    b12_bd = jnp.concatenate([jnp.tile(params['conv1_b'], BT),
                              jnp.tile(params['conv2_b'], BT)]).reshape(2 * BT * Cm, 1)
    w3_bd = jnp.kron(eyeB, params['conv3_w'][:, :, 0, 0])              # (BT*Co, BT*Cm)
    b3_bd = jnp.tile(params['conv3_b'], BT).reshape(BT * Co, 1)
    fc1_bd = jnp.kron(eyeB, params['fc1_w'])                           # (BT*Cr, BT*C)
    fc2_bd = jnp.kron(eyeB, params['fc2_w'])                           # (BT*C, BT*Cr)

    xf = x.reshape(Bp * C, HW)                # free metadata reshape (no transpose)
    io_spec = pl.BlockSpec((BT * C, HW), lambda b: (b, 0))

    out = pl.pallas_call(
        functools.partial(_spb_kernel, H=H),
        grid=(Bp // BT,),
        in_specs=[io_spec,
                  _const_spec((HW, H + W)),
                  _const_spec((H + W, H + W)), _const_spec((H + W, H + W)),
                  _const_spec((2 * BT * Cm, 3 * BT * C)), _const_spec((2 * BT * Cm, 1)),
                  _const_spec((H + W, HW)), _const_spec((H + W, HW)),
                  _const_spec((BT * Co, BT * Cm)), _const_spec((BT * Co, 1)),
                  _const_spec((BT * Cr, BT * C)), _const_spec((BT * C, BT * Cr))],
        out_specs=io_spec,
        out_shape=jax.ShapeDtypeStruct((Bp * C, HW), f32),
        compiler_params=pltpu.CompilerParams(
            dimension_semantics=("parallel",)),       # shard batch steps over TCs
    )(xf, e12t, sm1, sp1, w12_bd, b12_bd, g1, g2, w3_bd, b3_bd, fc1_bd, fc2_bd)

    out = out.reshape(Bp, C, H, W)
    return out[:B] if pad else out


# --------------------------- pure-JAX reference ------------------------------
def reference_forward(x, params):
    hp = jax.lax.Precision.HIGHEST
    B, C, H, W = x.shape
    w1, b1 = params['conv1_w'], params['conv1_b']
    w2, b2 = params['conv2_w'], params['conv2_b']
    w3, b3 = params['conv3_w'], params['conv3_b']
    fc1, fc2 = params['fc1_w'], params['fc2_w']

    y0 = jnp.mean(x, axis=(2, 3))                                         # (B, C)
    h1 = jnp.maximum(jnp.einsum('bc,rc->br', y0, fc1, precision=hp), 0.0)
    y = jax.nn.sigmoid(jnp.einsum('br,cr->bc', h1, fc2, precision=hp))    # (B, C)

    x1p = jnp.mean(x, axis=3)                                             # (B, C, H)
    x2p = jnp.mean(x, axis=2)                                             # (B, C, W)

    x1pad = jnp.pad(x1p, ((0, 0), (0, 0), (1, 1)))
    out1 = b1[None, :, None]
    for k in range(3):
        out1 = out1 + jnp.einsum('mc,bch->bmh', w1[:, :, k, 0],
                                 x1pad[:, :, k:k + H], precision=hp)
    x2pad = jnp.pad(x2p, ((0, 0), (0, 0), (1, 1)))
    out2 = b2[None, :, None]
    for k in range(3):
        out2 = out2 + jnp.einsum('mc,bcw->bmw', w2[:, :, 0, k],
                                 x2pad[:, :, k:k + W], precision=hp)

    s = jnp.maximum(out1[:, :, :, None] + out2[:, :, None, :], 0.0)       # (B, Cm, H, W)
    a = jax.nn.sigmoid(jnp.einsum('om,bmhw->bohw', w3[:, :, 0, 0], s, precision=hp)
                       + b3[None, :, None, None])
    return x * a * y[:, :, None, None]


# ------------------------------ parameter init -------------------------------
def init_params(key):
    Cm, Cin, Co = OUTPLANES, INPLANES, OUTPLANES
    Cr = Co // REDUCTION
    ks = jax.random.split(key, 8)

    def n(k, s, sc):
        return jax.random.normal(k, s, jnp.float32) * sc

    return {
        'conv1_w': n(ks[0], (Cm, Cin, 3, 1), 0.1),
        'conv1_b': n(ks[1], (Cm,), 0.05),
        'conv2_w': n(ks[2], (Cm, Cin, 1, 3), 0.1),
        'conv2_b': n(ks[3], (Cm,), 0.05),
        'conv3_w': n(ks[4], (Co, Cm, 1, 1), 0.1),
        'conv3_b': n(ks[5], (Co,), 0.05),
        'fc1_w': n(ks[6], (Cr, Co), 0.2),
        'fc2_w': n(ks[7], (Co, Cr), 0.2),
    }


# ----------------------------------- main ------------------------------------
if __name__ == "__main__":
    key = jax.random.PRNGKey(0)
    kx, kp = jax.random.split(key)
    # B=8 exercises the batch-folded grid (2 steps of 4 samples = 128 MXU rows).
    x = jax.random.normal(kx, (8, INPLANES, 16, 16), jnp.float32)   # NCHW
    params = init_params(kp)

    fwd = jax.jit(spbdislock_forward)
    out = jax.block_until_ready(fwd(x, params))
    ref = jax.block_until_ready(jax.jit(reference_forward)(x, params))

    assert out.shape == x.shape, out.shape
    assert bool(jnp.all(jnp.isfinite(out)))
    max_err = float(jnp.max(jnp.abs(out - ref)))
    # Tolerance covers the MXU default-precision rounding across the 5-deep
    # f32 matmul chain (pool -> shift -> conv -> broadcast -> 1x1) vs the
    # HIGHEST-precision reference; structural bugs would be >> 0.1.
    assert max_err < 1e-2, f"mismatch vs reference: max abs err = {max_err}"
    print("KERNEL_OK")
</pallas_src>

<mosaic_0001>
module attributes {stable_mosaic.version = 11 : i64} {
  func.func @_spb_kernel(%arg0: i32, %arg1: memref<128x256xf32, #tpu.memory_space<vmem>>, %arg2: memref<256x32xf32, #tpu.memory_space<vmem>>, %arg3: memref<32x32xf32, #tpu.memory_space<vmem>>, %arg4: memref<32x32xf32, #tpu.memory_space<vmem>>, %arg5: memref<256x384xf32, #tpu.memory_space<vmem>>, %arg6: memref<256x1xf32, #tpu.memory_space<vmem>>, %arg7: memref<32x256xf32, #tpu.memory_space<vmem>>, %arg8: memref<32x256xf32, #tpu.memory_space<vmem>>, %arg9: memref<128x128xf32, #tpu.memory_space<vmem>>, %arg10: memref<128x1xf32, #tpu.memory_space<vmem>>, %arg11: memref<8x128xf32, #tpu.memory_space<vmem>>, %arg12: memref<128x8xf32, #tpu.memory_space<vmem>>, %arg13: memref<128x256xf32, #tpu.memory_space<vmem>>) attributes {dimension_semantics = [#tpu.dimension_semantics<parallel>], iteration_bounds = array<i64: 2>, scalar_prefetch = 0 : i64, scratch_operands = 0 : i64, tpu.core_type = #tpu.core_type<tc>, window_params = [{transform_indices = @transform_0, window_bounds = array<i64: 128, 256>}, {pipeline_mode = #tpu.pipeline_mode<synchronous>, transform_indices = @transform_1, window_bounds = array<i64: 256, 32>}, {pipeline_mode = #tpu.pipeline_mode<synchronous>, transform_indices = @transform_2, window_bounds = array<i64: 32, 32>}, {pipeline_mode = #tpu.pipeline_mode<synchronous>, transform_indices = @transform_3, window_bounds = array<i64: 32, 32>}, {pipeline_mode = #tpu.pipeline_mode<synchronous>, transform_indices = @transform_4, window_bounds = array<i64: 256, 384>}, {pipeline_mode = #tpu.pipeline_mode<synchronous>, transform_indices = @transform_5, window_bounds = array<i64: 256, 1>}, {pipeline_mode = #tpu.pipeline_mode<synchronous>, transform_indices = @transform_6, window_bounds = array<i64: 32, 256>}, {pipeline_mode = #tpu.pipeline_mode<synchronous>, transform_indices = @transform_7, window_bounds = array<i64: 32, 256>}, {pipeline_mode = #tpu.pipeline_mode<synchronous>, transform_indices = @transform_8, window_bounds = array<i64: 128, 128>}, {pipeline_mode = #tpu.pipeline_mode<synchronous>, transform_indices = @transform_9, window_bounds = array<i64: 128, 1>}, {pipeline_mode = #tpu.pipeline_mode<synchronous>, transform_indices = @transform_10, window_bounds = array<i64: 8, 128>}, {pipeline_mode = #tpu.pipeline_mode<synchronous>, transform_indices = @transform_11, window_bounds = array<i64: 128, 8>}, {transform_indices = @transform_12, window_bounds = array<i64: 128, 256>}]} {
    %c0 = arith.constant 0 : index
    %c0_0 = arith.constant 0 : index
    %0 = vector.load %arg1[%c0, %c0_0] : memref<128x256xf32, #tpu.memory_space<vmem>>, vector<128x256xf32>
    %c0_1 = arith.constant 0 : index
    %c0_2 = arith.constant 0 : index
    %1 = vector.load %arg2[%c0_1, %c0_2] : memref<256x32xf32, #tpu.memory_space<vmem>>, vector<256x32xf32>
    %cst = arith.constant dense<0.000000e+00> : vector<128x32xf32>
    %2 = tpu.matmul %0, %1, %cst {dimension_numbers = #tpu.dot_dimension_numbers<[1], [0], [0], [1], [0, 0, 1, 1], [], []>} : vector<128x256xf32>, vector<256x32xf32>, vector<128x32xf32> -> vector<128x32xf32>
    %c0_3 = arith.constant 0 : index
    %c0_4 = arith.constant 0 : index
    %3 = vector.load %arg3[%c0_3, %c0_4] : memref<32x32xf32, #tpu.memory_space<vmem>>, vector<32x32xf32>
    %cst_5 = arith.constant dense<0.000000e+00> : vector<128x32xf32>
    %4 = tpu.matmul %2, %3, %cst_5 {dimension_numbers = #tpu.dot_dimension_numbers<[1], [0], [0], [1], [0, 0, 1, 1], [], []>} : vector<128x32xf32>, vector<32x32xf32>, vector<128x32xf32> -> vector<128x32xf32>
    %c0_6 = arith.constant 0 : index
    %c0_7 = arith.constant 0 : index
    %5 = vector.load %arg4[%c0_6, %c0_7] : memref<32x32xf32, #tpu.memory_space<vmem>>, vector<32x32xf32>
    %cst_8 = arith.constant dense<0.000000e+00> : vector<128x32xf32>
    %6 = tpu.matmul %2, %5, %cst_8 {dimension_numbers = #tpu.dot_dimension_numbers<[1], [0], [0], [1], [0, 0, 1, 1], [], []>} : vector<128x32xf32>, vector<32x32xf32>, vector<128x32xf32> -> vector<128x32xf32>
    %7 = tpu.concatenate %4, %2, %6 in 0 : vector<128x32xf32>, vector<128x32xf32>, vector<128x32xf32> -> vector<384x32xf32>
    %c0_9 = arith.constant 0 : index
    %c0_10 = arith.constant 0 : index
    %8 = vector.load %arg5[%c0_9, %c0_10] : memref<256x384xf32, #tpu.memory_space<vmem>>, vector<256x384xf32>
    %cst_11 = arith.constant dense<0.000000e+00> : vector<256x32xf32>
    %9 = tpu.matmul %8, %7, %cst_11 {dimension_numbers = #tpu.dot_dimension_numbers<[1], [0], [0], [1], [0, 0, 1, 1], [], []>} : vector<256x384xf32>, vector<384x32xf32>, vector<256x32xf32> -> vector<256x32xf32>
    %c0_12 = arith.constant 0 : index
    %c0_13 = arith.constant 0 : index
    %10 = vector.load %arg6[%c0_12, %c0_13] : memref<256x1xf32, #tpu.memory_space<vmem>>, vector<256x1xf32>
    %11 = vector.broadcast %10 : vector<256x1xf32> to vector<256x32xf32>
    %12 = arith.addf %9, %11 : vector<256x32xf32>
    %13 = vector.extract_strided_slice %12 {offsets = [0, 0], sizes = [128, 32], strides = [1, 1]} : vector<256x32xf32> to vector<128x32xf32>
    %c0_14 = arith.constant 0 : index
    %c0_15 = arith.constant 0 : index
    %14 = vector.load %arg7[%c0_14, %c0_15] : memref<32x256xf32, #tpu.memory_space<vmem>>, vector<32x256xf32>
    %cst_16 = arith.constant dense<0.000000e+00> : vector<128x256xf32>
    %15 = tpu.matmul %13, %14, %cst_16 {dimension_numbers = #tpu.dot_dimension_numbers<[1], [0], [0], [1], [0, 0, 1, 1], [], []>} : vector<128x32xf32>, vector<32x256xf32>, vector<128x256xf32> -> vector<128x256xf32>
    %16 = vector.extract_strided_slice %12 {offsets = [128, 0], sizes = [128, 32], strides = [1, 1]} : vector<256x32xf32> to vector<128x32xf32>
    %c0_17 = arith.constant 0 : index
    %c0_18 = arith.constant 0 : index
    %17 = vector.load %arg8[%c0_17, %c0_18] : memref<32x256xf32, #tpu.memory_space<vmem>>, vector<32x256xf32>
    %cst_19 = arith.constant dense<0.000000e+00> : vector<128x256xf32>
    %18 = tpu.matmul %16, %17, %cst_19 {dimension_numbers = #tpu.dot_dimension_numbers<[1], [0], [0], [1], [0, 0, 1, 1], [], []>} : vector<128x32xf32>, vector<32x256xf32>, vector<128x256xf32> -> vector<128x256xf32>
    %19 = arith.addf %15, %18 : vector<128x256xf32>
    %cst_20 = arith.constant 0.000000e+00 : f32
    %20 = vector.broadcast %cst_20 : f32 to vector<128x256xf32>
    %21 = arith.maximumf %19, %20 : vector<128x256xf32>
    %c0_21 = arith.constant 0 : index
    %c0_22 = arith.constant 0 : index
    %22 = vector.load %arg9[%c0_21, %c0_22] : memref<128x128xf32, #tpu.memory_space<vmem>>, vector<128x128xf32>
    %cst_23 = arith.constant dense<0.000000e+00> : vector<128x256xf32>
    %23 = tpu.matmul %22, %21, %cst_23 {dimension_numbers = #tpu.dot_dimension_numbers<[1], [0], [0], [1], [0, 0, 1, 1], [], []>} : vector<128x128xf32>, vector<128x256xf32>, vector<128x256xf32> -> vector<128x256xf32>
    %c0_24 = arith.constant 0 : index
    %c0_25 = arith.constant 0 : index
    %24 = vector.load %arg10[%c0_24, %c0_25] : memref<128x1xf32, #tpu.memory_space<vmem>>, vector<128x1xf32>
    %25 = vector.broadcast %24 : vector<128x1xf32> to vector<128x256xf32>
    %26 = arith.addf %23, %25 : vector<128x256xf32>
    %cst_26 = arith.constant 0.000000e+00 : f32
    %27 = vector.broadcast %cst_26 : f32 to vector<128x256xf32>
    %28 = arith.subf %27, %26 : vector<128x256xf32>
    %29 = math.exp %28 : vector<128x256xf32>
    %cst_27 = arith.constant 1.000000e+00 : f32
    %30 = vector.broadcast %cst_27 : f32 to vector<128x256xf32>
    %31 = arith.addf %30, %29 : vector<128x256xf32>
    %cst_28 = arith.constant 1.000000e+00 : f32
    %32 = vector.broadcast %cst_28 : f32 to vector<128x256xf32>
    %33 = arith.divf %32, %31 : vector<128x256xf32>
    %34 = vector.extract_strided_slice %2 {offsets = [0, 0], sizes = [128, 16], strides = [1, 1]} : vector<128x32xf32> to vector<128x16xf32>
    %cst_29 = arith.constant dense<0.000000e+00> : vector<128xf32>
    %35 = vector.multi_reduction <add>, %34, %cst_29 [1] : vector<128x16xf32> to vector<128xf32>
    %36 = vector.shape_cast %35 : vector<128xf32> to vector<128x1xf32>
    %cst_30 = arith.constant 6.250000e-02 : f32
    %37 = vector.broadcast %cst_30 : f32 to vector<128x1xf32>
    %38 = arith.mulf %36, %37 : vector<128x1xf32>
    %c0_31 = arith.constant 0 : index
    %c0_32 = arith.constant 0 : index
    %39 = vector.load %arg11[%c0_31, %c0_32] : memref<8x128xf32, #tpu.memory_space<vmem>>, vector<8x128xf32>
    %cst_33 = arith.constant dense<0.000000e+00> : vector<8x1xf32>
    %40 = tpu.matmul %39, %38, %cst_33 {dimension_numbers = #tpu.dot_dimension_numbers<[1], [0], [0], [1], [0, 0, 1, 1], [], []>} : vector<8x128xf32>, vector<128x1xf32>, vector<8x1xf32> -> vector<8x1xf32>
    %cst_34 = arith.constant 0.000000e+00 : f32
    %41 = vector.broadcast %cst_34 : f32 to vector<8x1xf32>
    %42 = arith.maximumf %40, %41 : vector<8x1xf32>
    %c0_35 = arith.constant 0 : index
    %c0_36 = arith.constant 0 : index
    %43 = vector.load %arg12[%c0_35, %c0_36] : memref<128x8xf32, #tpu.memory_space<vmem>>, vector<128x8xf32>
    %cst_37 = arith.constant dense<0.000000e+00> : vector<128x1xf32>
    %44 = tpu.matmul %43, %42, %cst_37 {dimension_numbers = #tpu.dot_dimension_numbers<[1], [0], [0], [1], [0, 0, 1, 1], [], []>} : vector<128x8xf32>, vector<8x1xf32>, vector<128x1xf32> -> vector<128x1xf32>
    %cst_38 = arith.constant 0.000000e+00 : f32
    %45 = vector.broadcast %cst_38 : f32 to vector<128x1xf32>
    %46 = arith.subf %45, %44 : vector<128x1xf32>
    %47 = math.exp %46 : vector<128x1xf32>
    %cst_39 = arith.constant 1.000000e+00 : f32
    %48 = vector.broadcast %cst_39 : f32 to vector<128x1xf32>
    %49 = arith.addf %48, %47 : vector<128x1xf32>
    %cst_40 = arith.constant 1.000000e+00 : f32
    %50 = vector.broadcast %cst_40 : f32 to vector<128x1xf32>
    %51 = arith.divf %50, %49 : vector<128x1xf32>
    %52 = arith.mulf %0, %33 : vector<128x256xf32>
    %53 = vector.broadcast %51 : vector<128x1xf32> to vector<128x256xf32>
    %54 = arith.mulf %52, %53 : vector<128x256xf32>
    %c0_41 = arith.constant 0 : index
    %c0_42 = arith.constant 0 : index
    %55 = vector.load %arg13[%c0_41, %c0_42] : memref<128x256xf32, #tpu.memory_space<vmem>>, vector<128x256xf32>
    tpu.vector_store %arg13[%c0_41, %c0_42], %54 {strides = array<i32>} : memref<128x256xf32, #tpu.memory_space<vmem>>, vector<128x256xf32>,
    return
  }
  func.func @transform_0(%arg0: i32) -> (i32, i32) {
    %c0_i32 = arith.constant 0 : i32
    %c0_i32_0 = arith.constant 0 : i32
    return %arg0, %c0_i32 : i32, i32
  }
  func.func @transform_1(%arg0: i32) -> (i32, i32) {
    %c0_i32 = arith.constant 0 : i32
    %c0_i32_0 = arith.constant 0 : i32
    %c0_i32_1 = arith.constant 0 : i32
    return %c0_i32, %c0_i32_0 : i32, i32
  }
  func.func @transform_2(%arg0: i32) -> (i32, i32) {
    %c0_i32 = arith.constant 0 : i32
    %c0_i32_0 = arith.constant 0 : i32
    %c0_i32_1 = arith.constant 0 : i32
    return %c0_i32, %c0_i32_0 : i32, i32
  }
  func.func @transform_3(%arg0: i32) -> (i32, i32) {
    %c0_i32 = arith.constant 0 : i32
    %c0_i32_0 = arith.constant 0 : i32
    %c0_i32_1 = arith.constant 0 : i32
    return %c0_i32, %c0_i32_0 : i32, i32
  }
  func.func @transform_4(%arg0: i32) -> (i32, i32) {
    %c0_i32 = arith.constant 0 : i32
    %c0_i32_0 = arith.constant 0 : i32
    %c0_i32_1 = arith.constant 0 : i32
    return %c0_i32, %c0_i32_0 : i32, i32
  }
  func.func @transform_5(%arg0: i32) -> (i32, i32) {
    %c0_i32 = arith.constant 0 : i32
    %c0_i32_0 = arith.constant 0 : i32
    %c0_i32_1 = arith.constant 0 : i32
    return %c0_i32, %c0_i32_0 : i32, i32
  }
  func.func @transform_6(%arg0: i32) -> (i32, i32) {
    %c0_i32 = arith.constant 0 : i32
    %c0_i32_0 = arith.constant 0 : i32
    %c0_i32_1 = arith.constant 0 : i32
    return %c0_i32, %c0_i32_0 : i32, i32
  }
  func.func @transform_7(%arg0: i32) -> (i32, i32) {
    %c0_i32 = arith.constant 0 : i32
    %c0_i32_0 = arith.constant 0 : i32
    %c0_i32_1 = arith.constant 0 : i32
    return %c0_i32, %c0_i32_0 : i32, i32
  }
  func.func @transform_8(%arg0: i32) -> (i32, i32) {
    %c0_i32 = arith.constant 0 : i32
    %c0_i32_0 = arith.constant 0 : i32
    %c0_i32_1 = arith.constant 0 : i32
    return %c0_i32, %c0_i32_0 : i32, i32
  }
  func.func @transform_9(%arg0: i32) -> (i32, i32) {
    %c0_i32 = arith.constant 0 : i32
    %c0_i32_0 = arith.constant 0 : i32
    %c0_i32_1 = arith.constant 0 : i32
    return %c0_i32, %c0_i32_0 : i32, i32
  }
  func.func @transform_10(%arg0: i32) -> (i32, i32) {
    %c0_i32 = arith.constant 0 : i32
    %c0_i32_0 = arith.constant 0 : i32
    %c0_i32_1 = arith.constant 0 : i32
    return %c0_i32, %c0_i32_0 : i32, i32
  }
  func.func @transform_11(%arg0: i32) -> (i32, i32) {
    %c0_i32 = arith.constant 0 : i32
    %c0_i32_0 = arith.constant 0 : i32
    %c0_i32_1 = arith.constant 0 : i32
    return %c0_i32, %c0_i32_0 : i32, i32
  }
  func.func @transform_12(%arg0: i32) -> (i32, i32) {
    %c0_i32 = arith.constant 0 : i32
    %c0_i32_0 = arith.constant 0 : i32
    return %arg0, %c0_i32 : i32, i32
  }
}

</mosaic_0001>

<llo_original>
// kernel: tile.18
$region0: #{tile.18}
  #allocation0 [shape = 's32[1]{0}', space=sflag, size = 0x4, scoped, tag = 'scoped memory for tile.18']
  %s0 = inlined_call_operand.vmem [shape: f32[32], index: 0, kind: input, shape index: {}]
  %s1 = inlined_call_operand.vmem [shape: f32[4,32], index: 1, kind: output, shape index: {}]
  // Predicated region
  $region2: #{tile.18} parent=0 // pred_check
    _
  $region3: #{tile.18} parent=0 // pred_check_branch
    %3 = sbr.rel (0) target = $region5
  $region4: #{tile.18} parent=0 // pred_region
    _
  $region5: #{tile.18} parent=0 // pred_fallthru
    _
  %v4 = vld [vmem:[%s0] ss:$0 sm:$0xff]
  %5 = vst [vmem:[%s1] sm:$0xf] %v4

// kernel: tile.19
$region0: #{tile.19}
  %s0 = inlined_call_operand.vmem [shape: f32[4,32], index: 0, kind: input, shape index: {}]
  %s1 = inlined_call_operand.vmem [shape: f32[128], index: 1, kind: output, shape index: {}]
  $region1: #{tile.19} parent=0
    #allocation0 [shape = 'u8[4096]{0}', space=vmem, size = 0x1000, scoped, tag = 'scoped mem for output reshape']
    #allocation1 [shape = 'u8[4096]{0}', space=vmem, size = 0x1000, scoped, tag = 'scoped mem for input reshape']
    %s3 = sshllo.u32 0, 4
    %v4 = vld [vmem:[%s0] sm:%s3]
    %5 = vst [vmem:[#allocation1] sm:%s3] %v4
    %v6 = vld [vmem:[#allocation1] sm:$0x1]
    %vm7 = vcmask 261120
    %8 = vst.msk [vmem:[#allocation0] sm:$0x1] %vm7, %v6
    %s9 = scalar_lea.vmem [#allocation1], 3
    %v10 = vld [vmem:[%s9] sm:$0x1]
    %11 = vrot.lane.b32.xlu0 %v10, 96
    %v12 = vpop.permute.xlu0 %11
    %vm13 = vcmask 1048320
    %14 = vst.msk [vmem:[#allocation0] sm:$0x1] %vm13, %v12
    %s15 = scalar_lea.vmem [#allocation1], 2
    %v16 = vld [vmem:[%s15] sm:$0x1]
    %17 = vrot.lane.b32.xlu0 %v16, 64
    %v18 = vpop.permute.xlu0 %17
    %vm19 = vcmask 785920
    %20 = vst.msk [vmem:[#allocation0] sm:$0x1] %vm19, %v18
    %s21 = scalar_lea.vmem [#allocation1], 1
    %v22 = vld [vmem:[%s21] sm:$0x1]
    %23 = vrot.lane.b32.xlu0 %v22, 32
    %v24 = vpop.permute.xlu0 %23
    %vm25 = vcmask 523520
    %26 = vst.msk [vmem:[#allocation0] sm:$0x1] %vm25, %v24
    %s28 = sshllo.u32 0, 1
    %v30 = vld [vmem:[#allocation0] sm:%s28]
    %s31 = sshllo.u32 0, 1
    %32 = vst [vmem:[%s1] sm:%s31] %v30

// kernel: tile.0
$region0: #{tile.0}
  %s0 = inlined_call_operand.vmem [shape: f32[4,32], index: 0, kind: input, shape index: {}]
  %s1 = inlined_call_operand.vmem [shape: f32[128,1], index: 1, kind: output, shape index: {}]
  $region1: #{tile.0} parent=0
    #allocation0 [shape = 'u8[4096]{0}', space=vmem, size = 0x1000, scoped, tag = 'scoped mem for input reshape']
    %s3 = sshllo.u32 0, 4
    %v4 = vld [vmem:[%s0] sm:%s3]
    %5 = vst [vmem:[#allocation0] sm:%s3] %v4
    %v6 = vld [vmem:[#allocation0] sm:$0xf]
    %vm7 = vcmask 7168
    %8 = vst.msk [vmem:[%s1] sm:$0x1] %vm7, %v6
    %s9 = scalar_lea.vmem %s1, 31
    %10 = vst.msk [vmem:[%s9] sm:$0x2] %vm7, %v6
    %s11 = scalar_lea.vmem %s1, 62
    %12 = vst.msk [vmem:[%s11] sm:$0x4] %vm7, %v6
    %s13 = scalar_lea.vmem %s1, 93
    %14 = vst.msk [vmem:[%s13] sm:$0x8] %vm7, %v6
    %v15 = vld [vmem:[#allocation0] sm:$0xf]
    %16 = vrot.lane.b32.xlu0 %v15, 127
    %v17 = vpop.permute.xlu0 %16
    %vm18 = vcmask 7168
    %s19 = scalar_lea.vmem %s1, 1
    %20 = vst.msk [vmem:[%s19] sm:$0x1] %vm18, %v17
    %s21 = scalar_lea.vmem %s1, 32
    %22 = vst.msk [vmem:[%s21] sm:$0x2] %vm18, %v17
    %s23 = scalar_lea.vmem %s1, 63
    %24 = vst.msk [vmem:[%s23] sm:$0x4] %vm18, %v17
    %s25 = scalar_lea.vmem %s1, 94
    %26 = vst.msk [vmem:[%s25] sm:$0x8] %vm18, %v17
    %v27 = vld [vmem:[#allocation0] sm:$0xf]
    %28 = vrot.lane.b32.xlu0 %v27, 126
    %v29 = vpop.permute.xlu0 %28
    %vm30 = vcmask 7168
    %s31 = scalar_lea.vmem %s1, 2
    %32 = vst.msk [vmem:[%s31] sm:$0x1] %vm30, %v29
    %s33 = scalar_lea.vmem %s1, 33
    %34 = vst.msk [vmem:[%s33] sm:$0x2] %vm30, %v29
    %s35 = scalar_lea.vmem %s1, 64
    %36 = vst.msk [vmem:[%s35] sm:$0x4] %vm30, %v29
    %s37 = scalar_lea.vmem %s1, 95
    %38 = vst.msk [vmem:[%s37] sm:$0x8] %vm30, %v29
    %v39 = vld [vmem:[#allocation0] sm:$0xf]
    %40 = vrot.lane.b32.xlu0 %v39, 125
    %v41 = vpop.permute.xlu0 %40
    %vm42 = vcmask 7168
    %s43 = scalar_lea.vmem %s1, 3
    %44 = vst.msk [vmem:[%s43] sm:$0x1] %vm42, %v41
    %s45 = scalar_lea.vmem %s1, 34
    %46 = vst.msk [vmem:[%s45] sm:$0x2] %vm42, %v41
    %s47 = scalar_lea.vmem %s1, 65
    %48 = vst.msk [vmem:[%s47] sm:$0x4] %vm42, %v41
    %s49 = scalar_lea.vmem %s1, 96
    %50 = vst.msk [vmem:[%s49] sm:$0x8] %vm42, %v41
    %v51 = vld [vmem:[#allocation0] sm:$0xf]
    %52 = vrot.lane.b32.xlu0 %v51, 124
    %v53 = vpop.permute.xlu0 %52
    %vm54 = vcmask 7168
    %s55 = scalar_lea.vmem %s1, 4
    %56 = vst.msk [vmem:[%s55] sm:$0x1] %vm54, %v53
    %s57 = scalar_lea.vmem %s1, 35
    %58 = vst.msk [vmem:[%s57] sm:$0x2] %vm54, %v53
    %s59 = scalar_lea.vmem %s1, 66
    %60 = vst.msk [vmem:[%s59] sm:$0x4] %vm54, %v53
    %s61 = scalar_lea.vmem %s1, 97
    %62 = vst.msk [vmem:[%s61] sm:$0x8] %vm54, %v53
    %v63 = vld [vmem:[#allocation0] sm:$0xf]
    %64 = vrot.lane.b32.xlu0 %v63, 123
    %v65 = vpop.permute.xlu0 %64
    %vm66 = vcmask 7168
    %s67 = scalar_lea.vmem %s1, 5
    %68 = vst.msk [vmem:[%s67] sm:$0x1] %vm66, %v65
    %s69 = scalar_lea.vmem %s1, 36
    %70 = vst.msk [vmem:[%s69] sm:$0x2] %vm66, %v65
    %s71 = scalar_lea.vmem %s1, 67
    %72 = vst.msk [vmem:[%s71] sm:$0x4] %vm66, %v65
    %s73 = scalar_lea.vmem %s1, 98
    %74 = vst.msk [vmem:[%s73] sm:$0x8] %vm66, %v65
    %v75 = vld [vmem:[#allocation0] sm:$0xf]
    %76 = vrot.lane.b32.xlu0 %v75, 122
    %v77 = vpop.permute.xlu0 %76
    %vm78 = vcmask 7168
    %s79 = scalar_lea.vmem %s1, 6
    %80 = vst.msk [vmem:[%s79] sm:$0x1] %vm78, %v77
    %s81 = scalar_lea.vmem %s1, 37
    %82 = vst.msk [vmem:[%s81] sm:$0x2] %vm78, %v77
    %s83 = scalar_lea.vmem %s1, 68
    %84 = vst.msk [vmem:[%s83] sm:$0x4] %vm78, %v77
    %s85 = scalar_lea.vmem %s1, 99
    %86 = vst.msk [vmem:[%s85] sm:$0x8] %vm78, %v77
    %v87 = vld [vmem:[#allocation0] sm:$0xf]
    %88 = vrot.lane.b32.xlu0 %v87, 121
    %v89 = vpop.permute.xlu0 %88
    %vm90 = vcmask 7168
    %s91 = scalar_lea.vmem %s1, 7
    %92 = vst.msk [vmem:[%s91] sm:$0x1] %vm90, %v89
    %s93 = scalar_lea.vmem %s1, 38
    %94 = vst.msk [vmem:[%s93] sm:$0x2] %vm90, %v89
    %s95 = scalar_lea.vmem %s1, 69
    %96 = vst.msk [vmem:[%s95] sm:$0x4] %vm90, %v89
    %s97 = scalar_lea.vmem %s1, 100
    %98 = vst.msk [vmem:[%s97] sm:$0x8] %vm90, %v89
    %v99 = vld [vmem:[#allocation0] sm:$0xf]
    %100 = vrot.lane.b32.xlu0 %v99, 120
    %v101 = vpop.permute.xlu0 %100
    %vm102 = vcmask 7168
    %s103 = scalar_lea.vmem %s1, 8
    %104 = vst.msk [vmem:[%s103] sm:$0x1] %vm102, %v101
    %s105 = scalar_lea.vmem %s1, 39
    %106 = vst.msk [vmem:[%s105] sm:$0x2] %vm102, %v101
    %s107 = scalar_lea.vmem %s1, 70
    %108 = vst.msk [vmem:[%s107] sm:$0x4] %vm102, %v101
    %s109 = scalar_lea.vmem %s1, 101
    %110 = vst.msk [vmem:[%s109] sm:$0x8] %vm102, %v101
    %v111 = vld [vmem:[#allocation0] sm:$0xf]
    %112 = vrot.lane.b32.xlu0 %v111, 119
    %v113 = vpop.permute.xlu0 %112
    %vm114 = vcmask 7168
    %s115 = scalar_lea.vmem %s1, 9
    %116 = vst.msk [vmem:[%s115] sm:$0x1] %vm114, %v113
    %s117 = scalar_lea.vmem %s1, 40
    %118 = vst.msk [vmem:[%s117] sm:$0x2] %vm114, %v113
    %s119 = scalar_lea.vmem %s1, 71
    %120 = vst.msk [vmem:[%s119] sm:$0x4] %vm114, %v113
    %s121 = scalar_lea.vmem %s1, 102
    %122 = vst.msk [vmem:[%s121] sm:$0x8] %vm114, %v113
    %v123 = vld [vmem:[#allocation0] sm:$0xf]
    %124 = vrot.lane.b32.xlu0 %v123, 118
    %v125 = vpop.permute.xlu0 %124
    %vm126 = vcmask 7168
    %s127 = scalar_lea.vmem %s1, 10
    %128 = vst.msk [vmem:[%s127] sm:$0x1] %vm126, %v125
    %s129 = scalar_lea.vmem %s1, 41
    %130 = vst.msk [vmem:[%s129] sm:$0x2] %vm126, %v125
    %s131 = scalar_lea.vmem %s1, 72
    %132 = vst.msk [vmem:[%s131] sm:$0x4] %vm126, %v125
    %s133 = scalar_lea.vmem %s1, 103
    %134 = vst.msk [vmem:[%s133] sm:$0x8] %vm126, %v125
    %v135 = vld [vmem:[#allocation0] sm:$0xf]
    %136 = vrot.lane.b32.xlu0 %v135, 117
    %v137 = vpop.permute.xlu0 %136
    %vm138 = vcmask 7168
    %s139 = scalar_lea.vmem %s1, 11
    %140 = vst.msk [vmem:[%s139] sm:$0x1] %vm138, %v137
    %s141 = scalar_lea.vmem %s1, 42
    %142 = vst.msk [vmem:[%s141] sm:$0x2] %vm138, %v137
    %s143 = scalar_lea.vmem %s1, 73
    %144 = vst.msk [vmem:[%s143] sm:$0x4] %vm138, %v137
    %s145 = scalar_lea.vmem %s1, 104
    %146 = vst.msk [vmem:[%s145] sm:$0x8] %vm138, %v137
    %v147 = vld [vmem:[#allocation0] sm:$0xf]
    %148 = vrot.lane.b32.xlu0 %v147, 116
    %v149 = vpop.permute.xlu0 %148
    %vm150 = vcmask 7168
    %s151 = scalar_lea.vmem %s1, 12
    %152 = vst.msk [vmem:[%s151] sm:$0x1] %vm150, %v149
    %s153 = scalar_lea.vmem %s1, 43
    %154 = vst.msk [vmem:[%s153] sm:$0x2] %vm150, %v149
    %s155 = scalar_lea.vmem %s1, 74
    %156 = vst.msk [vmem:[%s155] sm:$0x4] %vm150, %v149
    %s157 = scalar_lea.vmem %s1, 105
    %158 = vst.msk [vmem:[%s157] sm:$0x8] %vm150, %v149
    %v159 = vld [vmem:[#allocation0] sm:$0xf]
    %160 = vrot.lane.b32.xlu0 %v159, 115
    %v161 = vpop.permute.xlu0 %160
    %vm162 = vcmask 7168
    %s163 = scalar_lea.vmem %s1, 13
    %164 = vst.msk [vmem:[%s163] sm:$0x1] %vm162, %v161
    %s165 = scalar_lea.vmem %s1, 44
    %166 = vst.msk [vmem:[%s165] sm:$0x2] %vm162, %v161
    %s167 = scalar_lea.vmem %s1, 75
    %168 = vst.msk [vmem:[%s167] sm:$0x4] %vm162, %v161
    %s169 = scalar_lea.vmem %s1, 106
    %170 = vst.msk [vmem:[%s169] sm:$0x8] %vm162, %v161
    %v171 = vld [vmem:[#allocation0] sm:$0xf]
    %172 = vrot.lane.b32.xlu0 %v171, 114
    %v173 = vpop.permute.xlu0 %172
    %vm174 = vcmask 7168
    %s175 = scalar_lea.vmem %s1, 14
    %176 = vst.msk [vmem:[%s175] sm:$0x1] %vm174, %v173
    %s177 = scalar_lea.vmem %s1, 45
    %178 = vst.msk [vmem:[%s177] sm:$0x2] %vm174, %v173
    %s179 = scalar_lea.vmem %s1, 76
    %180 = vst.msk [vmem:[%s179] sm:$0x4] %vm174, %v173
    %s181 = scalar_lea.vmem %s1, 107
    %182 = vst.msk [vmem:[%s181] sm:$0x8] %vm174, %v173
    %v183 = vld [vmem:[#allocation0] sm:$0xf]
    %184 = vrot.lane.b32.xlu0 %v183, 113
    %v185 = vpop.permute.xlu0 %184
    %vm186 = vcmask 7168
    %s187 = scalar_lea.vmem %s1, 15
    %188 = vst.msk [vmem:[%s187] sm:$0x1] %vm186, %v185
    %s189 = scalar_lea.vmem %s1, 46
    %190 = vst.msk [vmem:[%s189] sm:$0x2] %vm186, %v185
    %s191 = scalar_lea.vmem %s1, 77
    %192 = vst.msk [vmem:[%s191] sm:$0x4] %vm186, %v185
    %s193 = scalar_lea.vmem %s1, 108
    %194 = vst.msk [vmem:[%s193] sm:$0x8] %vm186, %v185
    %v195 = vld [vmem:[#allocation0] sm:$0xf]
    %196 = vrot.lane.b32.xlu0 %v195, 112
    %v197 = vpop.permute.xlu0 %196
    %vm198 = vcmask 7168
    %s199 = scalar_lea.vmem %s1, 16
    %200 = vst.msk [vmem:[%s199] sm:$0x1] %vm198, %v197
    %s201 = scalar_lea.vmem %s1, 47
    %202 = vst.msk [vmem:[%s201] sm:$0x2] %vm198, %v197
    %s203 = scalar_lea.vmem %s1, 78
    %204 = vst.msk [vmem:[%s203] sm:$0x4] %vm198, %v197
    %s205 = scalar_lea.vmem %s1, 109
    %206 = vst.msk [vmem:[%s205] sm:$0x8] %vm198, %v197
    %v207 = vld [vmem:[#allocation0] sm:$0xf]
    %208 = vrot.lane.b32.xlu0 %v207, 111
    %v209 = vpop.permute.xlu0 %208
    %vm210 = vcmask 7168
    %s211 = scalar_lea.vmem %s1, 17
    %212 = vst.msk [vmem:[%s211] sm:$0x1] %vm210, %v209
    %s213 = scalar_lea.vmem %s1, 48
    %214 = vst.msk [vmem:[%s213] sm:$0x2] %vm210, %v209
    %s215 = scalar_lea.vmem %s1, 79
    %216 = vst.msk [vmem:[%s215] sm:$0x4] %vm210, %v209
    %s217 = scalar_lea.vmem %s1, 110
    %218 = vst.msk [vmem:[%s217] sm:$0x8] %vm210, %v209
    %v219 = vld [vmem:[#allocation0] sm:$0xf]
    %220 = vrot.lane.b32.xlu0 %v219, 110
    %v221 = vpop.permute.xlu0 %220
    %vm222 = vcmask 7168
    %s223 = scalar_lea.vmem %s1, 18
    %224 = vst.msk [vmem:[%s223] sm:$0x1] %vm222, %v221
    %s225 = scalar_lea.vmem %s1, 49
    %226 = vst.msk [vmem:[%s225] sm:$0x2] %vm222, %v221
    %s227 = scalar_lea.vmem %s1, 80
    %228 = vst.msk [vmem:[%s227] sm:$0x4] %vm222, %v221
    %s229 = scalar_lea.vmem %s1, 111
    %230 = vst.msk [vmem:[%s229] sm:$0x8] %vm222, %v221
    %v231 = vld [vmem:[#allocation0] sm:$0xf]
    %232 = vrot.lane.b32.xlu0 %v231, 109
    %v233 = vpop.permute.xlu0 %232
    %vm234 = vcmask 7168
    %s235 = scalar_lea.vmem %s1, 19
    %236 = vst.msk [vmem:[%s235] sm:$0x1] %vm234, %v233
    %s237 = scalar_lea.vmem %s1, 50
    %238 = vst.msk [vmem:[%s237] sm:$0x2] %vm234, %v233
    %s239 = scalar_lea.vmem %s1, 81
    %240 = vst.msk [vmem:[%s239] sm:$0x4] %vm234, %v233
    %s241 = scalar_lea.vmem %s1, 112
    %242 = vst.msk [vmem:[%s241] sm:$0x8] %vm234, %v233
    %v243 = vld [vmem:[#allocation0] sm:$0xf]
    %244 = vrot.lane.b32.xlu0 %v243, 108
    %v245 = vpop.permute.xlu0 %244
    %vm246 = vcmask 7168
    %s247 = scalar_lea.vmem %s1, 20
    %248 = vst.msk [vmem:[%s247] sm:$0x1] %vm246, %v245
    %s249 = scalar_lea.vmem %s1, 51
    %250 = vst.msk [vmem:[%s249] sm:$0x2] %vm246, %v245
    %s251 = scalar_lea.vmem %s1, 82
    %252 = vst.msk [vmem:[%s251] sm:$0x4] %vm246, %v245
    %s253 = scalar_lea.vmem %s1, 113
    %254 = vst.msk [vmem:[%s253] sm:$0x8] %vm246, %v245
    %v255 = vld [vmem:[#allocation0] sm:$0xf]
    %256 = vrot.lane.b32.xlu0 %v255, 107
    %v257 = vpop.permute.xlu0 %256
    %vm258 = vcmask 7168
    %s259 = scalar_lea.vmem %s1, 21
    %260 = vst.msk [vmem:[%s259] sm:$0x1] %vm258, %v257
    %s261 = scalar_lea.vmem %s1, 52
    %262 = vst.msk [vmem:[%s261] sm:$0x2] %vm258, %v257
    %s263 = scalar_lea.vmem %s1, 83
    %264 = vst.msk [vmem:[%s263] sm:$0x4] %vm258, %v257
    %s265 = scalar_lea.vmem %s1, 114
    %266 = vst.msk [vmem:[%s265] sm:$0x8] %vm258, %v257
    %v267 = vld [vmem:[#allocation0] sm:$0xf]
    %268 = vrot.lane.b32.xlu0 %v267, 106
    %v269 = vpop.permute.xlu0 %268
    %vm270 = vcmask 7168
    %s271 = scalar_lea.vmem %s1, 22
    %272 = vst.msk [vmem:[%s271] sm:$0x1] %vm270, %v269
    %s273 = scalar_lea.vmem %s1, 53
    %274 = vst.msk [vmem:[%s273] sm:$0x2] %vm270, %v269
    %s275 = scalar_lea.vmem %s1, 84
    %276 = vst.msk [vmem:[%s275] sm:$0x4] %vm270, %v269
    %s277 = scalar_lea.vmem %s1, 115
    %278 = vst.msk [vmem:[%s277] sm:$0x8] %vm270, %v269
    %v279 = vld [vmem:[#allocation0] sm:$0xf]
    %280 = vrot.lane.b32.xlu0 %v279, 105
    %v281 = vpop.permute.xlu0 %280
    %vm282 = vcmask 7168
    %s283 = scalar_lea.vmem %s1, 23
    %284 = vst.msk [vmem:[%s283] sm:$0x1] %vm282, %v281
    %s285 = scalar_lea.vmem %s1, 54
    %286 = vst.msk [vmem:[%s285] sm:$0x2] %vm282, %v281
    %s287 = scalar_lea.vmem %s1, 85
    %288 = vst.msk [vmem:[%s287] sm:$0x4] %vm282, %v281
    %s289 = scalar_lea.vmem %s1, 116
    %290 = vst.msk [vmem:[%s289] sm:$0x8] %vm282, %v281
    %v291 = vld [vmem:[#allocation0] sm:$0xf]
    %292 = vrot.lane.b32.xlu0 %v291, 104
    %v293 = vpop.permute.xlu0 %292
    %vm294 = vcmask 7168
    %s295 = scalar_lea.vmem %s1, 24
    %296 = vst.msk [vmem:[%s295] sm:$0x1] %vm294, %v293
    %s297 = scalar_lea.vmem %s1, 55
    %298 = vst.msk [vmem:[%s297] sm:$0x2] %vm294, %v293
    %s299 = scalar_lea.vmem %s1, 86
    %300 = vst.msk [vmem:[%s299] sm:$0x4] %vm294, %v293
    %s301 = scalar_lea.vmem %s1, 117
    %302 = vst.msk [vmem:[%s301] sm:$0x8] %vm294, %v293
    %v303 = vld [vmem:[#allocation0] sm:$0xf]
    %304 = vrot.lane.b32.xlu0 %v303, 103
    %v305 = vpop.permute.xlu0 %304
    %vm306 = vcmask 7168
    %s307 = scalar_lea.vmem %s1, 25
    %308 = vst.msk [vmem:[%s307] sm:$0x1] %vm306, %v305
    %s309 = scalar_lea.vmem %s1, 56
    %310 = vst.msk [vmem:[%s309] sm:$0x2] %vm306, %v305
    %s311 = scalar_lea.vmem %s1, 87
    %312 = vst.msk [vmem:[%s311] sm:$0x4] %vm306, %v305
    %s313 = scalar_lea.vmem %s1, 118
    %314 = vst.msk [vmem:[%s313] sm:$0x8] %vm306, %v305
    %v315 = vld [vmem:[#allocation0] sm:$0xf]
    %316 = vrot.lane.b32.xlu0 %v315, 102
    %v317 = vpop.permute.xlu0 %316
    %vm318 = vcmask 7168
    %s319 = scalar_lea.vmem %s1, 26
    %320 = vst.msk [vmem:[%s319] sm:$0x1] %vm318, %v317
    %s321 = scalar_lea.vmem %s1, 57
    %322 = vst.msk [vmem:[%s321] sm:$0x2] %vm318, %v317
    %s323 = scalar_lea.vmem %s1, 88
    %324 = vst.msk [vmem:[%s323] sm:$0x4] %vm318, %v317
    %s325 = scalar_lea.vmem %s1, 119
    %326 = vst.msk [vmem:[%s325] sm:$0x8] %vm318, %v317
    %v327 = vld [vmem:[#allocation0] sm:$0xf]
    %328 = vrot.lane.b32.xlu0 %v327, 101
    %v329 = vpop.permute.xlu0 %328
    %vm330 = vcmask 7168
    %s331 = scalar_lea.vmem %s1, 27
    %332 = vst.msk [vmem:[%s331] sm:$0x1] %vm330, %v329
    %s333 = scalar_lea.vmem %s1, 58
    %334 = vst.msk [vmem:[%s333] sm:$0x2] %vm330, %v329
    %s335 = scalar_lea.vmem %s1, 89
    %336 = vst.msk [vmem:[%s335] sm:$0x4] %vm330, %v329
    %s337 = scalar_lea.vmem %s1, 120
    %338 = vst.msk [vmem:[%s337] sm:$0x8] %vm330, %v329
    %v339 = vld [vmem:[#allocation0] sm:$0xf]
    %340 = vrot.lane.b32.xlu0 %v339, 100
    %v341 = vpop.permute.xlu0 %340
    %vm342 = vcmask 7168
    %s343 = scalar_lea.vmem %s1, 28
    %344 = vst.msk [vmem:[%s343] sm:$0x1] %vm342, %v341
    %s345 = scalar_lea.vmem %s1, 59
    %346 = vst.msk [vmem:[%s345] sm:$0x2] %vm342, %v341
    %s347 = scalar_lea.vmem %s1, 90
    %348 = vst.msk [vmem:[%s347] sm:$0x4] %vm342, %v341
    %s349 = scalar_lea.vmem %s1, 121
    %350 = vst.msk [vmem:[%s349] sm:$0x8] %vm342, %v341
    %v351 = vld [vmem:[#allocation0] sm:$0xf]
    %352 = vrot.lane.b32.xlu0 %v351, 99
    %v353 = vpop.permute.xlu0 %352
    %vm354 = vcmask 7168
    %s355 = scalar_lea.vmem %s1, 29
    %356 = vst.msk [vmem:[%s355] sm:$0x1] %vm354, %v353
    %s357 = scalar_lea.vmem %s1, 60
    %358 = vst.msk [vmem:[%s357] sm:$0x2] %vm354, %v353
    %s359 = scalar_lea.vmem %s1, 91
    %360 = vst.msk [vmem:[%s359] sm:$0x4] %vm354, %v353
    %s361 = scalar_lea.vmem %s1, 122
    %362 = vst.msk [vmem:[%s361] sm:$0x8] %vm354, %v353
    %v363 = vld [vmem:[#allocation0] sm:$0xf]
    %364 = vrot.lane.b32.xlu0 %v363, 98
    %v365 = vpop.permute.xlu0 %364
    %vm366 = vcmask 7168
    %s367 = scalar_lea.vmem %s1, 30
    %368 = vst.msk [vmem:[%s367] sm:$0x1] %vm366, %v365
    %s369 = scalar_lea.vmem %s1, 61
    %370 = vst.msk [vmem:[%s369] sm:$0x2] %vm366, %v365
    %s371 = scalar_lea.vmem %s1, 92
    %372 = vst.msk [vmem:[%s371] sm:$0x4] %vm366, %v365
    %s373 = scalar_lea.vmem %s1, 123
    %374 = vst.msk [vmem:[%s373] sm:$0x8] %vm366, %v365
    %v375 = vld [vmem:[#allocation0] sm:$0xf]
    %376 = vrot.lane.b32.xlu0 %v375, 97
    %v377 = vpop.permute.xlu0 %376
    %vm378 = vcmask 7168
    %s379 = scalar_lea.vmem %s1, 31
    %380 = vst.msk [vmem:[%s379] sm:$0x1] %vm378, %v377
    %s381 = scalar_lea.vmem %s1, 62
    %382 = vst.msk [vmem:[%s381] sm:$0x2] %vm378, %v377
    %s383 = scalar_lea.vmem %s1, 93
    %384 = vst.msk [vmem:[%s383] sm:$0x4] %vm378, %v377
    %s385 = scalar_lea.vmem %s1, 124
    %386 = vst.msk [vmem:[%s385] sm:$0x8] %vm378, %v377

// kernel: spbdislock_forward.1
$region0: #{spbdislock_forward.1}
  #allocation0 [shape = 'u32[]', space=smem, size = 0x4, offset = 0x4, fixed_abs, tag = 'smem constant byte address 0x4 - core index']
  #allocation1 [shape = 'u32[144,128]{1,0:T(1,128)}', space=vmem, size = 0x12000, scoped, tag = 'internal scratch']
  %s0 = inlined_call_operand.vmem [shape: f32[256,256], index: 0, kind: input, shape index: {}]
  %s1 = inlined_call_operand.vmem [shape: f32[256,32], index: 1, kind: input, shape index: {}]
  %s2 = inlined_call_operand.vmem [shape: f32[32,32], index: 2, kind: input, shape index: {}]
  %s3 = inlined_call_operand.vmem [shape: f32[32,32], index: 3, kind: input, shape index: {}]
  %s4 = inlined_call_operand.vmem [shape: f32[256,384], index: 4, kind: input, shape index: {}]
  %s5 = inlined_call_operand.vmem [shape: f32[256,1], index: 5, kind: input, shape index: {}]
  %s6 = inlined_call_operand.vmem [shape: f32[32,256], index: 6, kind: input, shape index: {}]
  %s7 = inlined_call_operand.vmem [shape: f32[32,256], index: 7, kind: input, shape index: {}]
  %s8 = inlined_call_operand.vmem [shape: f32[128,128], index: 8, kind: input, shape index: {}]
  %s9 = inlined_call_operand.vmem [shape: f32[128,1], index: 9, kind: input, shape index: {}]
  %s10 = inlined_call_operand.vmem [shape: f32[8,128], index: 10, kind: input, shape index: {}]
  %s11 = inlined_call_operand.vmem [shape: f32[128,8], index: 11, kind: input, shape index: {}]
  %s12 = inlined_call_operand.vmem [shape: f32[256,256], index: 12, kind: output, shape index: {}]
  %s13 = sld [smem:[#allocation0]]
  $region81: #{spbdislock_forward.1} parent=0
    _
  %s15 = ssub.s32 1, %s13
  %s16 = scalar_select 0, %s15, %s13
  loop: start=0, step=1, limit=4
  $region2: #{spbdislock_forward.1} parent=0 // loop_pre_header
    _
  $region3: #{spbdislock_forward.1} parent=0 // loop_header
    %s18 = sphi 0, %s22
    %p19 = scmp.ge.s32.totalorder %s18, 4
    %s28 = sphi 0, %s30
    %s31 = sphi 0, %s28
    %s32 = sphi 0, %s31
    %s48 = sphi 0, %s32
    %s52 = sphi 0, %s52
    %s54 = sphi 0, %s52
    %s55 = sphi 0, %s54
    %s69 = sphi 0, %s55
    %s73 = sphi 0, %s73
    %s75 = sphi 0, %s73
    %s76 = sphi 0, %s75
    %s90 = sphi 0, %s76
    %s94 = sphi 0, %s94
    %s96 = sphi 0, %s94
    %s97 = sphi 0, %s96
    %s111 = sphi 0, %s97
    %s115 = sphi 0, %s115
    %s117 = sphi 0, %s115
    %s118 = sphi 0, %s117
    %s132 = sphi 0, %s118
    %s136 = sphi 0, %s136
    %s138 = sphi 0, %s136
    %s139 = sphi 0, %s138
    %s153 = sphi 0, %s139
    %s157 = sphi 0, %s157
    %s159 = sphi 0, %s157
    %s160 = sphi 0, %s159
    %s174 = sphi 0, %s160
    %s178 = sphi 0, %s178
    %s180 = sphi 0, %s178
    %s181 = sphi 0, %s180
    %s195 = sphi 0, %s181
    %s199 = sphi 0, %s199
    %s201 = sphi 0, %s199
    %s202 = sphi 0, %s201
    %s216 = sphi 0, %s202
    %s220 = sphi 0, %s220
    %s222 = sphi 0, %s220
    %s223 = sphi 0, %s222
    %s237 = sphi 0, %s223
    %s241 = sphi 0, %s241
    %s243 = sphi 0, %s241
    %s244 = sphi 0, %s243
    %s258 = sphi 0, %s244
    %s262 = sphi 0, %s262
    %s264 = sphi 0, %s262
    %s265 = sphi 0, %s264
    %s279 = sphi 0, %s265
    %s285 = sphi 0, %s287
    %s288 = sphi 0, %s285
    %s289 = sphi 0, %s288
    %s305 = sphi 0, %s289
  $region4: #{spbdislock_forward.1} parent=0 // loop_header_branch
    %21 = sbr.rel (%p19) target = $region8
  $region5: #{spbdislock_forward.1} parent=0 // loop_body
    %s23 = ssub.s32 %s18, 1
    %s24 = ssub.s32 %s18, 2
    %s25 = sadd.s32 %s18, 1
    %s26 = ssub.s32 %s18, %s25
    %p27 = scmp.eq.s32.totalorder %s26, 0
    %s29 = sadd.s32 %s28, 1
    %s30 = scalar_select %p27, %s28, %s29
    %p33 = pneg %p27
    %p34 = scmp.eq.s32.totalorder %s18, 1
    %p35 = por %p33, %p34
    %p36 = scmp.ne.s32.totalorder %s28, %s31
    %p37 = scmp.eq.s32.totalorder %s18, 0
    %p38 = por %p36, %p37
    %p39 = scmp.ne.s32.totalorder %s28, %s31
    %p40 = scmp.eq.s32.totalorder %s23, 1
    %p41 = por %p39, %p40
    %p42 = scmp.ne.s32.totalorder %s31, %s32
    %p43 = scmp.eq.s32.totalorder %s23, 0
    %p44 = por %p42, %p43
    %p45 = scmp.ne.s32.totalorder %s31, %s32
    %p46 = scmp.eq.s32.totalorder %s24, 1
    %p47 = por %p45, %p46
    %p49 = scmp.ne.s32.totalorder %s32, %s48
    %p50 = scmp.eq.s32.totalorder %s24, 0
    %p51 = por %p49, %p50
    %s53 = sadd.s32 %s52, 1
    %p56 = scmp.eq.s32.totalorder %s18, 1
    %p57 = scmp.ne.s32.totalorder %s52, %s54
    %p58 = scmp.eq.s32.totalorder %s18, 0
    %p59 = por %p57, %p58
    %p60 = scmp.ne.s32.totalorder %s52, %s54
    %p61 = scmp.eq.s32.totalorder %s23, 1
    %p62 = por %p60, %p61
    %p63 = scmp.ne.s32.totalorder %s54, %s55
    %p64 = scmp.eq.s32.totalorder %s23, 0
    %p65 = por %p63, %p64
    %p66 = scmp.ne.s32.totalorder %s54, %s55
    %p67 = scmp.eq.s32.totalorder %s24, 1
    %p68 = por %p66, %p67
    %p70 = scmp.ne.s32.totalorder %s55, %s69
    %p71 = scmp.eq.s32.totalorder %s24, 0
    %p72 = por %p70, %p71
    %s74 = sadd.s32 %s73, 1
    %p77 = scmp.eq.s32.totalorder %s18, 1
    %p78 = scmp.ne.s32.totalorder %s73, %s75
    %p79 = scmp.eq.s32.totalorder %s18, 0
    %p80 = por %p78, %p79
    %p81 = scmp.ne.s32.totalorder %s73, %s75
    %p82 = scmp.eq.s32.totalorder %s23, 1
    %p83 = por %p81, %p82
    %p84 = scmp.ne.s32.totalorder %s75, %s76
    %p85 = scmp.eq.s32.totalorder %s23, 0
    %p86 = por %p84, %p85
    %p87 = scmp.ne.s32.totalorder %s75, %s76
    %p88 = scmp.eq.s32.totalorder %s24, 1
    %p89 = por %p87, %p88
    %p91 = scmp.ne.s32.totalorder %s76, %s90
    %p92 = scmp.eq.s32.totalorder %s24, 0
    %p93 = por %p91, %p92
    %s95 = sadd.s32 %s94, 1
    %p98 = scmp.eq.s32.totalorder %s18, 1
    %p99 = scmp.ne.s32.totalorder %s94, %s96
    %p100 = scmp.eq.s32.totalorder %s18, 0
    %p101 = por %p99, %p100
    %p102 = scmp.ne.s32.totalorder %s94, %s96
    %p103 = scmp.eq.s32.totalorder %s23, 1
    %p104 = por %p102, %p103
    %p105 = scmp.ne.s32.totalorder %s96, %s97
    %p106 = scmp.eq.s32.totalorder %s23, 0
    %p107 = por %p105, %p106
    %p108 = scmp.ne.s32.totalorder %s96, %s97
    %p109 = scmp.eq.s32.totalorder %s24, 1
    %p110 = por %p108, %p109
    %p112 = scmp.ne.s32.totalorder %s97, %s111
    %p113 = scmp.eq.s32.totalorder %s24, 0
    %p114 = por %p112, %p113
    %s116 = sadd.s32 %s115, 1
    %p119 = scmp.eq.s32.totalorder %s18, 1
    %p120 = scmp.ne.s32.totalorder %s115, %s117
    %p121 = scmp.eq.s32.totalorder %s18, 0
    %p122 = por %p120, %p121
    %p123 = scmp.ne.s32.totalorder %s115, %s117
    %p124 = scmp.eq.s32.totalorder %s23, 1
    %p125 = por %p123, %p124
    %p126 = scmp.ne.s32.totalorder %s117, %s118
    %p127 = scmp.eq.s32.totalorder %s23, 0
    %p128 = por %p126, %p127
    %p129 = scmp.ne.s32.totalorder %s117, %s118
    %p130 = scmp.eq.s32.totalorder %s24, 1
    %p131 = por %p129, %p130
    %p133 = scmp.ne.s32.totalorder %s118, %s132
    %p134 = scmp.eq.s32.totalorder %s24, 0
    %p135 = por %p133, %p134
    %s137 = sadd.s32 %s136, 1
    %p140 = scmp.eq.s32.totalorder %s18, 1
    %p141 = scmp.ne.s32.totalorder %s136, %s138
    %p142 = scmp.eq.s32.totalorder %s18, 0
    %p143 = por %p141, %p142
    %p144 = scmp.ne.s32.totalorder %s136, %s138
    %p145 = scmp.eq.s32.totalorder %s23, 1
    %p146 = por %p144, %p145
    %p147 = scmp.ne.s32.totalorder %s138, %s139
    %p148 = scmp.eq.s32.totalorder %s23, 0
    %p149 = por %p147, %p148
    %p150 = scmp.ne.s32.totalorder %s138, %s139
    %p151 = scmp.eq.s32.totalorder %s24, 1
    %p152 = por %p150, %p151
    %p154 = scmp.ne.s32.totalorder %s139, %s153
    %p155 = scmp.eq.s32.totalorder %s24, 0
    %p156 = por %p154, %p155
    %s158 = sadd.s32 %s157, 1
    %p161 = scmp.eq.s32.totalorder %s18, 1
    %p162 = scmp.ne.s32.totalorder %s157, %s159
    %p163 = scmp.eq.s32.totalorder %s18, 0
    %p164 = por %p162, %p163
    %p165 = scmp.ne.s32.totalorder %s157, %s159
    %p166 = scmp.eq.s32.totalorder %s23, 1
    %p167 = por %p165, %p166
    %p168 = scmp.ne.s32.totalorder %s159, %s160
    %p169 = scmp.eq.s32.totalorder %s23, 0
    %p170 = por %p168, %p169
    %p171 = scmp.ne.s32.totalorder %s159, %s160
    %p172 = scmp.eq.s32.totalorder %s24, 1
    %p173 = por %p171, %p172
    %p175 = scmp.ne.s32.totalorder %s160, %s174
    %p176 = scmp.eq.s32.totalorder %s24, 0
    %p177 = por %p175, %p176
    %s179 = sadd.s32 %s178, 1
    %p182 = scmp.eq.s32.totalorder %s18, 1
    %p183 = scmp.ne.s32.totalorder %s178, %s180
    %p184 = scmp.eq.s32.totalorder %s18, 0
    %p185 = por %p183, %p184
    %p186 = scmp.ne.s32.totalorder %s178, %s180
    %p187 = scmp.eq.s32.totalorder %s23, 1
    %p188 = por %p186, %p187
    %p189 = scmp.ne.s32.totalorder %s180, %s181
    %p190 = scmp.eq.s32.totalorder %s23, 0
    %p191 = por %p189, %p190
    %p192 = scmp.ne.s32.totalorder %s180, %s181
    %p193 = scmp.eq.s32.totalorder %s24, 1
    %p194 = por %p192, %p193
    %p196 = scmp.ne.s32.totalorder %s181, %s195
    %p197 = scmp.eq.s32.totalorder %s24, 0
    %p198 = por %p196, %p197
    %s200 = sadd.s32 %s199, 1
    %p203 = scmp.eq.s32.totalorder %s18, 1
    %p204 = scmp.ne.s32.totalorder %s199, %s201
    %p205 = scmp.eq.s32.totalorder %s18, 0
    %p206 = por %p204, %p205
    %p207 = scmp.ne.s32.totalorder %s199, %s201
    %p208 = scmp.eq.s32.totalorder %s23, 1
    %p209 = por %p207, %p208
    %p210 = scmp.ne.s32.totalorder %s201, %s202
    %p211 = scmp.eq.s32.totalorder %s23, 0
    %p212 = por %p210, %p211
    %p213 = scmp.ne.s32.totalorder %s201, %s202
    %p214 = scmp.eq.s32.totalorder %s24, 1
    %p215 = por %p213, %p214
    %p217 = scmp.ne.s32.totalorder %s202, %s216
    %p218 = scmp.eq.s32.totalorder %s24, 0
    %p219 = por %p217, %p218
    %s221 = sadd.s32 %s220, 1
    %p224 = scmp.eq.s32.totalorder %s18, 1
    %p225 = scmp.ne.s32.totalorder %s220, %s222
    %p226 = scmp.eq.s32.totalorder %s18, 0
    %p227 = por %p225, %p226
    %p228 = scmp.ne.s32.totalorder %s220, %s222
    %p229 = scmp.eq.s32.totalorder %s23, 1
    %p230 = por %p228, %p229
    %p231 = scmp.ne.s32.totalorder %s222, %s223
    %p232 = scmp.eq.s32.totalorder %s23, 0
    %p233 = por %p231, %p232
    %p234 = scmp.ne.s32.totalorder %s222, %s223
    %p235 = scmp.eq.s32.totalorder %s24, 1
    %p236 = por %p234, %p235
    %p238 = scmp.ne.s32.totalorder %s223, %s237
    %p239 = scmp.eq.s32.totalorder %s24, 0
    %p240 = por %p238, %p239
    %s242 = sadd.s32 %s241, 1
    %p245 = scmp.eq.s32.totalorder %s18, 1
    %p246 = scmp.ne.s32.totalorder %s241, %s243
    %p247 = scmp.eq.s32.totalorder %s18, 0
    %p248 = por %p246, %p247
    %p249 = scmp.ne.s32.totalorder %s241, %s243
    %p250 = scmp.eq.s32.totalorder %s23, 1
    %p251 = por %p249, %p250
    %p252 = scmp.ne.s32.totalorder %s243, %s244
    %p253 = scmp.eq.s32.totalorder %s23, 0
    %p254 = por %p252, %p253
    %p255 = scmp.ne.s32.totalorder %s243, %s244
    %p256 = scmp.eq.s32.totalorder %s24, 1
    %p257 = por %p255, %p256
    %p259 = scmp.ne.s32.totalorder %s244, %s258
    %p260 = scmp.eq.s32.totalorder %s24, 0
    %p261 = por %p259, %p260
    %s263 = sadd.s32 %s262, 1
    %p266 = scmp.eq.s32.totalorder %s18, 1
    %p267 = scmp.ne.s32.totalorder %s262, %s264
    %p268 = scmp.eq.s32.totalorder %s18, 0
    %p269 = por %p267, %p268
    %p270 = scmp.ne.s32.totalorder %s262, %s264
    %p271 = scmp.eq.s32.totalorder %s23, 1
    %p272 = por %p270, %p271
    %p273 = scmp.ne.s32.totalorder %s264, %s265
    %p274 = scmp.eq.s32.totalorder %s23, 0
    %p275 = por %p273, %p274
    %p276 = scmp.ne.s32.totalorder %s264, %s265
    %p277 = scmp.eq.s32.totalorder %s24, 1
    %p278 = por %p276, %p277
    %p280 = scmp.ne.s32.totalorder %s265, %s279
    %p281 = scmp.eq.s32.totalorder %s24, 0
    %p282 = por %p280, %p281
    %s283 = ssub.s32 %s18, %s25
    %p284 = scmp.eq.s32.totalorder %s283, 0
    %s286 = sadd.s32 %s285, 1
    %s287 = scalar_select %p284, %s285, %s286
    %p290 = pneg %p284
    %p291 = scmp.eq.s32.totalorder %s18, 1
    %p292 = por %p290, %p291
    %p293 = scmp.ne.s32.totalorder %s285, %s288
    %p294 = scmp.eq.s32.totalorder %s18, 0
    %p295 = por %p293, %p294
    %p296 = scmp.ne.s32.totalorder %s285, %s288
    %p297 = scmp.eq.s32.totalorder %s23, 1
    %p298 = por %p296, %p297
    %p299 = scmp.ne.s32.totalorder %s288, %s289
    %p300 = scmp.eq.s32.totalorder %s23, 0
    %p301 = por %p299, %p300
    %p302 = scmp.ne.s32.totalorder %s288, %s289
    %p303 = scmp.eq.s32.totalorder %s24, 1
    %p304 = por %p302, %p303
    %p306 = scmp.ne.s32.totalorder %s289, %s305
    %p307 = scmp.eq.s32.totalorder %s24, 0
    %p308 = por %p306, %p307
    %p309 = scmp.le.s32.totalorder 1, %s18
    %p310 = scmp.lt.s32.totalorder %s18, 3
    %p311 = pnand %p309, %p310
    %p312 = pneg %p311
    // Predicated region
    $region9: #{spbdislock_forward.1} parent=5 // pred_check
      _
    $region10: #{spbdislock_forward.1} parent=5 // pred_check_branch
      %314 = sbr.rel (%p311) target = $region12
    $region11: #{spbdislock_forward.1} parent=5 // pred_region
      %s315 = ssub.s32 %s18, 1
      // Predicated region
      $region13: #{spbdislock_forward.1} parent=11 // pred_check
        %p316 = pneg %p65
      $region14: #{spbdislock_forward.1} parent=11 // pred_check_branch
        %318 = sbr.rel (%p316) target = $region16
      $region15: #{spbdislock_forward.1} parent=11 // pred_region
        _
      $region16: #{spbdislock_forward.1} parent=11 // pred_fallthru
        _
      // Predicated region
      $region17: #{spbdislock_forward.1} parent=11 // pred_check
        %p319 = pneg %p86
      $region18: #{spbdislock_forward.1} parent=11 // pred_check_branch
        %321 = sbr.rel (%p319) target = $region20
      $region19: #{spbdislock_forward.1} parent=11 // pred_region
        _
      $region20: #{spbdislock_forward.1} parent=11 // pred_fallthru
        _
      // Predicated region
      $region21: #{spbdislock_forward.1} parent=11 // pred_check
        %p322 = pneg %p107
      $region22: #{spbdislock_forward.1} parent=11 // pred_check_branch
        %324 = sbr.rel (%p322) target = $region24
      $region23: #{spbdislock_forward.1} parent=11 // pred_region
        _
      $region24: #{spbdislock_forward.1} parent=11 // pred_fallthru
        _
      // Predicated region
      $region25: #{spbdislock_forward.1} parent=11 // pred_check
        %p325 = pneg %p128
      $region26: #{spbdislock_forward.1} parent=11 // pred_check_branch
        %327 = sbr.rel (%p325) target = $region28
      $region27: #{spbdislock_forward.1} parent=11 // pred_region
        _
      $region28: #{spbdislock_forward.1} parent=11 // pred_fallthru
        _
      // Predicated region
      $region29: #{spbdislock_forward.1} parent=11 // pred_check
        %p328 = pneg %p149
      $region30: #{spbdislock_forward.1} parent=11 // pred_check_branch
        %330 = sbr.rel (%p328) target = $region32
      $region31: #{spbdislock_forward.1} parent=11 // pred_region
        _
      $region32: #{spbdislock_forward.1} parent=11 // pred_fallthru
        _
      // Predicated region
      $region33: #{spbdislock_forward.1} parent=11 // pred_check
        %p331 = pneg %p170
      $region34: #{spbdislock_forward.1} parent=11 // pred_check_branch
        %333 = sbr.rel (%p331) target = $region36
      $region35: #{spbdislock_forward.1} parent=11 // pred_region
        _
      $region36: #{spbdislock_forward.1} parent=11 // pred_fallthru
        _
      // Predicated region
      $region37: #{spbdislock_forward.1} parent=11 // pred_check
        %p334 = pneg %p191
      $region38: #{spbdislock_forward.1} parent=11 // pred_check_branch
        %336 = sbr.rel (%p334) target = $region40
      $region39: #{spbdislock_forward.1} parent=11 // pred_region
        _
      $region40: #{spbdislock_forward.1} parent=11 // pred_fallthru
        _
      // Predicated region
      $region41: #{spbdislock_forward.1} parent=11 // pred_check
        %p337 = pneg %p212
      $region42: #{spbdislock_forward.1} parent=11 // pred_check_branch
        %339 = sbr.rel (%p337) target = $region44
      $region43: #{spbdislock_forward.1} parent=11 // pred_region
        _
      $region44: #{spbdislock_forward.1} parent=11 // pred_fallthru
        _
      // Predicated region
      $region45: #{spbdislock_forward.1} parent=11 // pred_check
        %p340 = pneg %p233
      $region46: #{spbdislock_forward.1} parent=11 // pred_check_branch
        %342 = sbr.rel (%p340) target = $region48
      $region47: #{spbdislock_forward.1} parent=11 // pred_region
        _
      $region48: #{spbdislock_forward.1} parent=11 // pred_fallthru
        _
      // Predicated region
      $region49: #{spbdislock_forward.1} parent=11 // pred_check
        %p343 = pneg %p254
      $region50: #{spbdislock_forward.1} parent=11 // pred_check_branch
        %345 = sbr.rel (%p343) target = $region52
      $region51: #{spbdislock_forward.1} parent=11 // pred_region
        _
      $region52: #{spbdislock_forward.1} parent=11 // pred_fallthru
        _
      // Predicated region
      $region53: #{spbdislock_forward.1} parent=11 // pred_check
        %p346 = pneg %p275
      $region54: #{spbdislock_forward.1} parent=11 // pred_check_branch
        %348 = sbr.rel (%p346) target = $region56
      $region55: #{spbdislock_forward.1} parent=11 // pred_region
        _
      $region56: #{spbdislock_forward.1} parent=11 // pred_fallthru
        _
    $region12: #{spbdislock_forward.1} parent=5 // pred_fallthru
      _
    %p349 = scmp.lt.s32.totalorder %s18, 2
    // Predicated region
    $region57: #{spbdislock_forward.1} parent=5 // pred_check
      %p350 = pneg %p349
    $region58: #{spbdislock_forward.1} parent=5 // pred_check_branch
      %352 = sbr.rel (%p350) target = $region60
    $region59: #{spbdislock_forward.1} parent=5 // pred_region
      // Predicated region
      $region61: #{spbdislock_forward.1} parent=59 // pred_check
        %p353 = pneg %p38
      $region62: #{spbdislock_forward.1} parent=59 // pred_check_branch
        %355 = sbr.rel (%p353) target = $region64
      $region63: #{spbdislock_forward.1} parent=59 // pred_region
        %s356 = smul.u32 16, %s18
        %p357 = scmp.lt.s32.totalorder %s356, 31
        %s358 = scalar_select %p357, %s356, 31
        %s359 = smul.addr %s358, 2
        %s360 = smul.addr %s359, 8
        %s361 = scalar_lea.vmem %s0, %s360
        %s362 = smul.u32 16, %s18
      $region64: #{spbdislock_forward.1} parent=59 // pred_fallthru
        _
    $region60: #{spbdislock_forward.1} parent=5 // pred_fallthru
      _
    %p363 = scmp.le.s32.totalorder 1, %s18
    %p364 = scmp.lt.s32.totalorder %s18, 3
    %p365 = pnand %p363, %p364
    %p366 = pneg %p365
    // Predicated region
    $region65: #{spbdislock_forward.1} parent=5 // pred_check
      _
    $region66: #{spbdislock_forward.1} parent=5 // pred_check_branch
      %368 = sbr.rel (%p365) target = $region68
    $region67: #{spbdislock_forward.1} parent=5 // pred_region
      %s369 = ssub.s32 %s18, 1
      %s370 = smul.u32 16, %s23
      %p371 = scmp.lt.s32.totalorder %s370, 31
      %s372 = scalar_select %p371, %s370, 31
      %s373 = smul.addr %s372, 2
      %s374 = smul.addr %s373, 8
      %s375 = scalar_lea.vmem %s0, %s374
      %p376 = pneg %p44
      %p377 = pneg %p41
      %p378 = pneg %p65
      %p379 = pneg %p62
      %p380 = pneg %p86
      %p381 = pneg %p83
      %p382 = pneg %p107
      %p383 = pneg %p104
      %p384 = pneg %p128
      %p385 = pneg %p125
      %p386 = pneg %p149
      %p387 = pneg %p146
      %p388 = pneg %p170
      %p389 = pneg %p167
      %p390 = pneg %p191
      %p391 = pneg %p188
      %p392 = pneg %p212
      %p393 = pneg %p209
      %p394 = pneg %p233
      %p395 = pneg %p230
      %p396 = pneg %p254
      %p397 = pneg %p251
      %p398 = pneg %p275
      %p399 = pneg %p272
      %p400 = pneg %p301
      %p401 = pneg %p298
      %s402 = smul.u32 16, %s23
      %p403 = scmp.lt.s32.totalorder %s402, 31
      %s404 = scalar_select %p403, %s402, 31
      %s405 = smul.addr %s404, 2
      %s406 = smul.addr %s405, 8
      %s407 = scalar_lea.vmem %s12, %s406
      %s408 = smul.u32 16, %s23
      %p409 = scmp.lt.s32.totalorder %s408, 31
      %s410 = scalar_select %p409, %s408, 31
      %s411 = smul.addr %s410, 2
      %s412 = smul.addr %s411, 8
      %s413 = scalar_lea.vmem %s0, %s412
      %s414 = smul.u32 16, %s23
      %s415 = smul.u32 16, %s23
      %p416 = scmp.lt.s32.totalorder %s415, 31
      %s417 = scalar_select %p416, %s415, 31
      %s418 = smul.addr %s417, 2
      %s419 = smul.addr %s418, 8
      %s420 = scalar_lea.vmem %s12, %s419
      %s421 = smul.u32 16, %s23
      %v422 = vld [vmem:[%s413] sm:$0xff]
      %v423 = vld [vmem:[%s413 + $0x8] sm:$0xff]
      %v424 = vld [vmem:[%s413 + $0x10] sm:$0xff]
      %v425 = vld [vmem:[%s413 + $0x18] sm:$0xff]
      %v426 = vld [vmem:[%s413 + $0x20] sm:$0xff]
      %v427 = vld [vmem:[%s413 + $0x28] sm:$0xff]
      %v428 = vld [vmem:[%s413 + $0x30] sm:$0xff]
      %v429 = vld [vmem:[%s413 + $0x38] sm:$0xff]
      %v430 = vld [vmem:[%s413 + $0x40] sm:$0xff]
      %v431 = vld [vmem:[%s413 + $0x48] sm:$0xff]
      %v432 = vld [vmem:[%s413 + $0x50] sm:$0xff]
      %v433 = vld [vmem:[%s413 + $0x58] sm:$0xff]
      %v434 = vld [vmem:[%s413 + $0x60] sm:$0xff]
      %v435 = vld [vmem:[%s413 + $0x68] sm:$0xff]
      %v436 = vld [vmem:[%s413 + $0x70] sm:$0xff]
      %v437 = vld [vmem:[%s413 + $0x78] sm:$0xff]
      %v438 = vld [vmem:[%s413 + $0x80] sm:$0xff]
      %v439 = vld [vmem:[%s413 + $0x88] sm:$0xff]
      %v440 = vld [vmem:[%s413 + $0x90] sm:$0xff]
      %v441 = vld [vmem:[%s413 + $0x98] sm:$0xff]
      %v442 = vld [vmem:[%s413 + $0xa0] sm:$0xff]
      %v443 = vld [vmem:[%s413 + $0xa8] sm:$0xff]
      %v444 = vld [vmem:[%s413 + $0xb0] sm:$0xff]
      %v445 = vld [vmem:[%s413 + $0xb8] sm:$0xff]
      %v446 = vld [vmem:[%s413 + $0xc0] sm:$0xff]
      %v447 = vld [vmem:[%s413 + $0xc8] sm:$0xff]
      %v448 = vld [vmem:[%s413 + $0xd0] sm:$0xff]
      %v449 = vld [vmem:[%s413 + $0xd8] sm:$0xff]
      %v450 = vld [vmem:[%s413 + $0xe0] sm:$0xff]
      %v451 = vld [vmem:[%s413 + $0xe8] sm:$0xff]
      %v452 = vld [vmem:[%s413 + $0xf0] sm:$0xff]
      %v453 = vld [vmem:[%s413 + $0xf8] sm:$0xff]
      %v454 = vld [vmem:[%s1] sm:$0xff]
      %v455 = vld [vmem:[%s1 + $0x8] sm:$0xff]
      %v456 = vld [vmem:[%s1 + $0x10] sm:$0xff]
      %v457 = vld [vmem:[%s1 + $0x18] sm:$0xff]
      %v458 = vld [vmem:[%s1 + $0x20] sm:$0xff]
      %v459 = vld [vmem:[%s1 + $0x28] sm:$0xff]
      %v460 = vld [vmem:[%s1 + $0x30] sm:$0xff]
      %v461 = vld [vmem:[%s1 + $0x38] sm:$0xff]
      %v462 = vld [vmem:[%s1 + $0x40] sm:$0xff]
      %v463 = vld [vmem:[%s1 + $0x48] sm:$0xff]
      %v464 = vld [vmem:[%s1 + $0x50] sm:$0xff]
      %v465 = vld [vmem:[%s1 + $0x58] sm:$0xff]
      %v466 = vld [vmem:[%s1 + $0x60] sm:$0xff]
      %v467 = vld [vmem:[%s1 + $0x68] sm:$0xff]
      %v468 = vld [vmem:[%s1 + $0x70] sm:$0xff]
      %v469 = vld [vmem:[%s1 + $0x78] sm:$0xff]
      %v470 = vld [vmem:[%s1 + $0x80] sm:$0xff]
      %v471 = vld [vmem:[%s1 + $0x88] sm:$0xff]
      %v472 = vld [vmem:[%s1 + $0x90] sm:$0xff]
      %v473 = vld [vmem:[%s1 + $0x98] sm:$0xff]
      %v474 = vld [vmem:[%s1 + $0xa0] sm:$0xff]
      %v475 = vld [vmem:[%s1 + $0xa8] sm:$0xff]
      %v476 = vld [vmem:[%s1 + $0xb0] sm:$0xff]
      %v477 = vld [vmem:[%s1 + $0xb8] sm:$0xff]
      %v478 = vld [vmem:[%s1 + $0xc0] sm:$0xff]
      %v479 = vld [vmem:[%s1 + $0xc8] sm:$0xff]
      %v480 = vld [vmem:[%s1 + $0xd0] sm:$0xff]
      %v481 = vld [vmem:[%s1 + $0xd8] sm:$0xff]
      %v482 = vld [vmem:[%s1 + $0xe0] sm:$0xff]
      %v483 = vld [vmem:[%s1 + $0xe8] sm:$0xff]
      %v484 = vld [vmem:[%s1 + $0xf0] sm:$0xff]
      %v485 = vld [vmem:[%s1 + $0xf8] sm:$0xff]
      %486 = vmatprep.subr.mxu0 0.0
      %487 = vmatpush1.msra.mxu0 %v454
      %488 = vmatprep.subr.mxu0 0.0
      %489 = vmatpush1.msra.mxu0 %v455
      %490 = vmatprep.subr.mxu0 0.0
      %491 = vmatpush1.msra.mxu0 %v456
      %492 = vmatprep.subr.mxu0 0.0
      %493 = vmatpush1.msra.mxu0 %v457
      %494 = vmatprep.subr.mxu0 0.0
      %495 = vmatpush1.msra.mxu0 %v458
      %496 = vmatprep.subr.mxu0 0.0
      %497 = vmatpush1.msra.mxu0 %v459
      %498 = vmatprep.subr.mxu0 0.0
      %499 = vmatpush1.msra.mxu0 %v460
      %500 = vmatprep.subr.mxu0 0.0
      %501 = vmatpush1.msra.mxu0 %v461
      %502 = vmatprep.subr.mxu0 0.0
      %503 = vmatpush1.msra.mxu0 %v462
      %504 = vmatprep.subr.mxu0 0.0
      %505 = vmatpush1.msra.mxu0 %v463
      %506 = vmatprep.subr.mxu0 0.0
      %507 = vmatpush1.msra.mxu0 %v464
      %508 = vmatprep.subr.mxu0 0.0
      %509 = vmatpush1.msra.mxu0 %v465
      %510 = vmatprep.subr.mxu0 0.0
      %511 = vmatpush1.msra.mxu0 %v466
      %512 = vmatprep.subr.mxu0 0.0
      %513 = vmatpush1.msra.mxu0 %v467
      %514 = vmatprep.subr.mxu0 0.0
      %515 = vmatpush1.msra.mxu0 %v468
      %516 = vmatprep.subr.mxu0 0.0
      %517 = vmatpush1.msra.mxu0 %v469
      %518 = vmatprep.subr.mxu0 0.0
      %519 = vmatpush1.msra.mxu0 %v470
      %520 = vmatprep.subr.mxu0 0.0
      %521 = vmatpush1.msra.mxu0 %v471
      %522 = vmatprep.subr.mxu0 0.0
      %523 = vmatpush1.msra.mxu0 %v472
      %524 = vmatprep.subr.mxu0 0.0
      %525 = vmatpush1.msra.mxu0 %v473
      %526 = vmatprep.subr.mxu0 0.0
      %527 = vmatpush1.msra.mxu0 %v474
      %528 = vmatprep.subr.mxu0 0.0
      %529 = vmatpush1.msra.mxu0 %v475
      %530 = vmatprep.subr.mxu0 0.0
      %531 = vmatpush1.msra.mxu0 %v476
      %532 = vmatprep.subr.mxu0 0.0
      %533 = vmatpush1.msra.mxu0 %v477
      %534 = vmatprep.subr.mxu0 0.0
      %535 = vmatpush1.msra.mxu0 %v478
      %536 = vmatprep.subr.mxu0 0.0
      %537 = vmatpush1.msra.mxu0 %v479
      %538 = vmatprep.subr.mxu0 0.0
      %539 = vmatpush1.msra.mxu0 %v480
      %540 = vmatprep.subr.mxu0 0.0
      %541 = vmatpush1.msra.mxu0 %v481
      %542 = vmatprep.subr.mxu0 0.0
      %543 = vmatpush1.msra.mxu0 %v482
      %544 = vmatprep.subr.mxu0 0.0
      %545 = vmatpush1.msra.mxu0 %v483
      %546 = vmatprep.subr.mxu0 0.0
      %547 = vmatpush1.msra.mxu0 %v484
      %548 = vmatprep.subr.mxu0 0.0
      %549 = vmatpush1.msra.mxu0 %v485
      %550 = vmatprep.mubr.f32.mxu0 %v423
      %551 = vmatmul.mubr.f32.gmra.mrb[0].mxu0 %v422
      %v552 = vpop.f32.mrb[0].mxu0
      %v553 = vadd.f32 0.0, %v552
      %v554 = vpop.f32.mrb[0].mxu0
      %555 = vmatprep.mubr.f32.mxu0 %v425
      %556 = vmatmul.mubr.f32.gmra.mrb[0].mxu0 %v424
      %v557 = vpop.f32.mrb[0].mxu0
      %v558 = vadd.f32 0.0, %v557
      %v559 = vpop.f32.mrb[0].mxu0
      %560 = vmatprep.mubr.f32.mxu0 %v427
      %561 = vmatmul.mubr.f32.gmra.mrb[0].mxu0 %v426
      %v562 = vpop.f32.mrb[0].mxu0
      %v563 = vadd.f32 0.0, %v562
      %v564 = vpop.f32.mrb[0].mxu0
      %565 = vmatprep.mubr.f32.mxu0 %v429
      %566 = vmatmul.mubr.f32.gmra.mrb[0].mxu0 %v428
      %v567 = vpop.f32.mrb[0].mxu0
      %v568 = vadd.f32 0.0, %v567
      %v569 = vpop.f32.mrb[0].mxu0
      %570 = vmatprep.mubr.f32.mxu0 %v431
      %571 = vmatmul.mubr.f32.gmra.mrb[0].mxu0 %v430
      %v572 = vpop.f32.mrb[0].mxu0
      %v573 = vadd.f32 0.0, %v572
      %v574 = vpop.f32.mrb[0].mxu0
      %575 = vmatprep.mubr.f32.mxu0 %v433
      %576 = vmatmul.mubr.f32.gmra.mrb[0].mxu0 %v432
      %v577 = vpop.f32.mrb[0].mxu0
      %v578 = vadd.f32 0.0, %v577
      %v579 = vpop.f32.mrb[0].mxu0
      %580 = vmatprep.mubr.f32.mxu0 %v435
      %581 = vmatmul.mubr.f32.gmra.mrb[0].mxu0 %v434
      %v582 = vpop.f32.mrb[0].mxu0
      %v583 = vadd.f32 0.0, %v582
      %v584 = vpop.f32.mrb[0].mxu0
      %585 = vmatprep.mubr.f32.mxu0 %v437
      %586 = vmatmul.mubr.f32.gmra.mrb[0].mxu0 %v436
      %v587 = vpop.f32.mrb[0].mxu0
      %v588 = vadd.f32 0.0, %v587
      %v589 = vpop.f32.mrb[0].mxu0
      %590 = vmatprep.mubr.f32.mxu0 %v439
      %591 = vmatmul.mubr.f32.gmra.mrb[0].mxu0 %v438
      %v592 = vpop.f32.mrb[0].mxu0
      %v593 = vadd.f32 0.0, %v592
      %v594 = vpop.f32.mrb[0].mxu0
      %595 = vmatprep.mubr.f32.mxu0 %v441
      %596 = vmatmul.mubr.f32.gmra.mrb[0].mxu0 %v440
      %v597 = vpop.f32.mrb[0].mxu0
      %v598 = vadd.f32 0.0, %v597
      %v599 = vpop.f32.mrb[0].mxu0
      %600 = vmatprep.mubr.f32.mxu0 %v443
      %601 = vmatmul.mubr.f32.gmra.mrb[0].mxu0 %v442
      %v602 = vpop.f32.mrb[0].mxu0
      %v603 = vadd.f32 0.0, %v602
      %v604 = vpop.f32.mrb[0].mxu0
      %605 = vmatprep.mubr.f32.mxu0 %v445
      %606 = vmatmul.mubr.f32.gmra.mrb[0].mxu0 %v444
      %v607 = vpop.f32.mrb[0].mxu0
      %v608 = vadd.f32 0.0, %v607
      %v609 = vpop.f32.mrb[0].mxu0
      %610 = vmatprep.mubr.f32.mxu0 %v447
      %611 = vmatmul.mubr.f32.gmra.mrb[0].mxu0 %v446
      %v612 = vpop.f32.mrb[0].mxu0
      %v613 = vadd.f32 0.0, %v612
      %v614 = vpop.f32.mrb[0].mxu0
      %615 = vmatprep.mubr.f32.mxu0 %v449
      %616 = vmatmul.mubr.f32.gmra.mrb[0].mxu0 %v448
      %v617 = vpop.f32.mrb[0].mxu0
      %v618 = vadd.f32 0.0, %v617
      %v619 = vpop.f32.mrb[0].mxu0
      %620 = vmatprep.mubr.f32.mxu0 %v451
      %621 = vmatmul.mubr.f32.gmra.mrb[0].mxu0 %v450
      %v622 = vpop.f32.mrb[0].mxu0
      %v623 = vadd.f32 0.0, %v622
      %v624 = vpop.f32.mrb[0].mxu0
      %625 = vmatprep.mubr.f32.mxu0 %v453
      %626 = vmatmul.mubr.f32.gmra.mrb[0].mxu0 %v452
      %v627 = vpop.f32.mrb[0].mxu0
      %v628 = vadd.f32 0.0, %v627
      %v629 = vpop.f32.mrb[0].mxu0
      %630 = vdwg.mxu0
      %v631 = vld [vmem:[%s2] sm:$0xff]
      %v632 = vld [vmem:[%s2 + $0x8] sm:$0xff]
      %v633 = vld [vmem:[%s2 + $0x10] sm:$0xff]
      %v634 = vld [vmem:[%s2 + $0x18] sm:$0xff]
      %vm635 = vcmask 261120
      %v637 = vsel %vm635, %v553, 0
      %v640 = vsel %vm635, %v558, 0
      %v643 = vsel %vm635, %v563, 0
      %v646 = vsel %vm635, %v568, 0
      %v649 = vsel %vm635, %v573, 0
      %v652 = vsel %vm635, %v578, 0
      %v655 = vsel %vm635, %v583, 0
      %v658 = vsel %vm635, %v588, 0
      %v661 = vsel %vm635, %v593, 0
      %v664 = vsel %vm635, %v598, 0
      %v667 = vsel %vm635, %v603, 0
      %v670 = vsel %vm635, %v608, 0
      %v673 = vsel %vm635, %v613, 0
      %v676 = vsel %vm635, %v618, 0
      %v679 = vsel %vm635, %v623, 0
      %v682 = vsel %vm635, %v628, 0
      %684 = vmatprep.subr.mxu0 0.0
      %685 = vmatpush1.msra.mxu0 %v631
      %686 = vmatprep.subr.mxu0 0.0
      %687 = vmatpush1.msra.mxu0 %v632
      %688 = vmatprep.subr.mxu0 0.0
      %689 = vmatpush1.msra.mxu0 %v633
      %690 = vmatprep.subr.mxu0 0.0
      %691 = vmatpush1.msra.mxu0 %v634
      %692 = vmatprep.subr.mxu0 0.0
      %693 = vmatpush1.msra.mxu0 0.0
      %694 = vmatprep.subr.mxu0 0.0
      %695 = vmatpush1.msra.mxu0 0.0
      %696 = vmatprep.subr.mxu0 0.0
      %697 = vmatpush1.msra.mxu0 0.0
      %698 = vmatprep.subr.mxu0 0.0
      %699 = vmatpush1.msra.mxu0 0.0
      %700 = vmatprep.subr.mxu0 0.0
      %701 = vmatpush1.msra.mxu0 0.0
      %702 = vmatprep.subr.mxu0 0.0
      %703 = vmatpush1.msra.mxu0 0.0
      %704 = vmatprep.subr.mxu0 0.0
      %705 = vmatpush1.msra.mxu0 0.0
      %706 = vmatprep.subr.mxu0 0.0
      %707 = vmatpush1.msra.mxu0 0.0
      %708 = vmatprep.subr.mxu0 0.0
      %709 = vmatpush1.msra.mxu0 0.0
      %710 = vmatprep.subr.mxu0 0.0
      %711 = vmatpush1.msra.mxu0 0.0
      %712 = vmatprep.subr.mxu0 0.0
      %713 = vmatpush1.msra.mxu0 0.0
      %714 = vmatprep.subr.mxu0 0.0
      %715 = vmatpush1.msra.mxu0 0.0
      %716 = vmatprep.subr.mxu0 0.0
      %717 = vmatpush1.msra.mxu0 0.0
      %718 = vmatprep.subr.mxu0 0.0
      %719 = vmatpush1.msra.mxu0 0.0
      %720 = vmatprep.subr.mxu0 0.0
      %721 = vmatpush1.msra.mxu0 0.0
      %722 = vmatprep.subr.mxu0 0.0
      %723 = vmatpush1.msra.mxu0 0.0
      %724 = vmatprep.subr.mxu0 0.0
      %725 = vmatpush1.msra.mxu0 0.0
      %726 = vmatprep.subr.mxu0 0.0
      %727 = vmatpush1.msra.mxu0 0.0
      %728 = vmatprep.subr.mxu0 0.0
      %729 = vmatpush1.msra.mxu0 0.0
      %730 = vmatprep.subr.mxu0 0.0
      %731 = vmatpush1.msra.mxu0 0.0
      %732 = vmatprep.subr.mxu0 0.0
      %733 = vmatpush1.msra.mxu0 0.0
      %734 = vmatprep.subr.mxu0 0.0
      %735 = vmatpush1.msra.mxu0 0.0
      %736 = vmatprep.subr.mxu0 0.0
      %737 = vmatpush1.msra.mxu0 0.0
      %738 = vmatprep.subr.mxu0 0.0
      %739 = vmatpush1.msra.mxu0 0.0
      %740 = vmatprep.subr.mxu0 0.0
      %741 = vmatpush1.msra.mxu0 0.0
      %742 = vmatprep.subr.mxu0 0.0
      %743 = vmatpush1.msra.mxu0 0.0
      %744 = vmatprep.subr.mxu0 0.0
      %745 = vmatpush1.msra.mxu0 0.0
      %746 = vmatprep.subr.mxu0 0.0
      %747 = vmatpush1.msra.mxu0 0.0
      %748 = vmatprep.mubr.f32.mxu0 0.0
      %749 = vmatmul.mubr.f32.gmra.mrb[0].mxu0 %v637
      %v750 = vpop.f32.mrb[0].mxu0
      %v751 = vadd.f32 0.0, %v750
      %v752 = vpop.f32.mrb[0].mxu0
      %753 = vmatprep.mubr.f32.mxu0 0.0
      %754 = vmatmul.mubr.f32.gmra.mrb[0].mxu0 %v640
      %v755 = vpop.f32.mrb[0].mxu0
      %v756 = vadd.f32 0.0, %v755
      %v757 = vpop.f32.mrb[0].mxu0
      %758 = vmatprep.mubr.f32.mxu0 0.0
      %759 = vmatmul.mubr.f32.gmra.mrb[0].mxu0 %v643
      %v760 = vpop.f32.mrb[0].mxu0
      %v761 = vadd.f32 0.0, %v760
      %v762 = vpop.f32.mrb[0].mxu0
      %763 = vmatprep.mubr.f32.mxu0 0.0
      %764 = vmatmul.mubr.f32.gmra.mrb[0].mxu0 %v646
      %v765 = vpop.f32.mrb[0].mxu0
      %v766 = vadd.f32 0.0, %v765
      %v767 = vpop.f32.mrb[0].mxu0
      %768 = vmatprep.mubr.f32.mxu0 0.0
      %769 = vmatmul.mubr.f32.gmra.mrb[0].mxu0 %v649
      %v770 = vpop.f32.mrb[0].mxu0
      %v771 = vadd.f32 0.0, %v770
      %v772 = vpop.f32.mrb[0].mxu0
      %773 = vmatprep.mubr.f32.mxu0 0.0
      %774 = vmatmul.mubr.f32.gmra.mrb[0].mxu0 %v652
      %v775 = vpop.f32.mrb[0].mxu0
      %v776 = vadd.f32 0.0, %v775
      %v777 = vpop.f32.mrb[0].mxu0
      %778 = vmatprep.mubr.f32.mxu0 0.0
      %779 = vmatmul.mubr.f32.gmra.mrb[0].mxu0 %v655
      %v780 = vpop.f32.mrb[0].mxu0
      %v781 = vadd.f32 0.0, %v780
      %v782 = vpop.f32.mrb[0].mxu0
      %783 = vmatprep.mubr.f32.mxu0 0.0
      %784 = vmatmul.mubr.f32.gmra.mrb[0].mxu0 %v658
      %v785 = vpop.f32.mrb[0].mxu0
      %v786 = vadd.f32 0.0, %v785
      %v787 = vpop.f32.mrb[0].mxu0
      %788 = vmatprep.mubr.f32.mxu0 0.0
      %789 = vmatmul.mubr.f32.gmra.mrb[0].mxu0 %v661
      %v790 = vpop.f32.mrb[0].mxu0
      %v791 = vadd.f32 0.0, %v790
      %v792 = vpop.f32.mrb[0].mxu0
      %793 = vmatprep.mubr.f32.mxu0 0.0
      %794 = vmatmul.mubr.f32.gmra.mrb[0].mxu0 %v664
      %v795 = vpop.f32.mrb[0].mxu0
      %v796 = vadd.f32 0.0, %v795
      %v797 = vpop.f32.mrb[0].mxu0
      %798 = vmatprep.mubr.f32.mxu0 0.0
      %799 = vmatmul.mubr.f32.gmra.mrb[0].mxu0 %v667
      %v800 = vpop.f32.mrb[0].mxu0
      %v801 = vadd.f32 0.0, %v800
      %v802 = vpop.f32.mrb[0].mxu0
      %803 = vmatprep.mubr.f32.mxu0 0.0
      %804 = vmatmul.mubr.f32.gmra.mrb[0].mxu0 %v670
      %v805 = vpop.f32.mrb[0].mxu0
      %v806 = vadd.f32 0.0, %v805
      %v807 = vpop.f32.mrb[0].mxu0
      %808 = vmatprep.mubr.f32.mxu0 0.0
      %809 = vmatmul.mubr.f32.gmra.mrb[0].mxu0 %v673
      %v810 = vpop.f32.mrb[0].mxu0
      %v811 = vadd.f32 0.0, %v810
      %v812 = vpop.f32.mrb[0].mxu0
      %813 = vmatprep.mubr.f32.mxu0 0.0
      %814 = vmatmul.mubr.f32.gmra.mrb[0].mxu0 %v676
      %v815 = vpop.f32.mrb[0].mxu0
      %v816 = vadd.f32 0.0, %v815
      %v817 = vpop.f32.mrb[0].mxu0
      %818 = vmatprep.mubr.f32.mxu0 0.0
      %819 = vmatmul.mubr.f32.gmra.mrb[0].mxu0 %v679
      %v820 = vpop.f32.mrb[0].mxu0
      %v821 = vadd.f32 0.0, %v820
      %v822 = vpop.f32.mrb[0].mxu0
      %823 = vmatprep.mubr.f32.mxu0 0.0
      %824 = vmatmul.mubr.f32.gmra.mrb[0].mxu0 %v682
      %v825 = vpop.f32.mrb[0].mxu0
      %v826 = vadd.f32 0.0, %v825
      %v827 = vpop.f32.mrb[0].mxu0
      %828 = vdwg.mxu0
      %v829 = vld [vmem:[%s3] sm:$0xff]
      %v830 = vld [vmem:[%s3 + $0x8] sm:$0xff]
      %v831 = vld [vmem:[%s3 + $0x10] sm:$0xff]
      %v832 = vld [vmem:[%s3 + $0x18] sm:$0xff]
      %833 = vmatprep.subr.mxu0 0.0
      %834 = vmatpush1.msra.mxu0 %v829
      %835 = vmatprep.subr.mxu0 0.0
      %836 = vmatpush1.msra.mxu0 %v830
      %837 = vmatprep.subr.mxu0 0.0
      %838 = vmatpush1.msra.mxu0 %v831
      %839 = vmatprep.subr.mxu0 0.0
      %840 = vmatpush1.msra.mxu0 %v832
      %841 = vmatprep.subr.mxu0 0.0
      %842 = vmatpush1.msra.mxu0 0.0
      %843 = vmatprep.subr.mxu0 0.0
      %844 = vmatpush1.msra.mxu0 0.0
      %845 = vmatprep.subr.mxu0 0.0
      %846 = vmatpush1.msra.mxu0 0.0
      %847 = vmatprep.subr.mxu0 0.0
      %848 = vmatpush1.msra.mxu0 0.0
      %849 = vmatprep.subr.mxu0 0.0
      %850 = vmatpush1.msra.mxu0 0.0
      %851 = vmatprep.subr.mxu0 0.0
      %852 = vmatpush1.msra.mxu0 0.0
      %853 = vmatprep.subr.mxu0 0.0
      %854 = vmatpush1.msra.mxu0 0.0
      %855 = vmatprep.subr.mxu0 0.0
      %856 = vmatpush1.msra.mxu0 0.0
      %857 = vmatprep.subr.mxu0 0.0
      %858 = vmatpush1.msra.mxu0 0.0
      %859 = vmatprep.subr.mxu0 0.0
      %860 = vmatpush1.msra.mxu0 0.0
      %861 = vmatprep.subr.mxu0 0.0
      %862 = vmatpush1.msra.mxu0 0.0
      %863 = vmatprep.subr.mxu0 0.0
      %864 = vmatpush1.msra.mxu0 0.0
      %865 = vmatprep.subr.mxu0 0.0
      %866 = vmatpush1.msra.mxu0 0.0
      %867 = vmatprep.subr.mxu0 0.0
      %868 = vmatpush1.msra.mxu0 0.0
      %869 = vmatprep.subr.mxu0 0.0
      %870 = vmatpush1.msra.mxu0 0.0
      %871 = vmatprep.subr.mxu0 0.0
      %872 = vmatpush1.msra.mxu0 0.0
      %873 = vmatprep.subr.mxu0 0.0
      %874 = vmatpush1.msra.mxu0 0.0
      %875 = vmatprep.subr.mxu0 0.0
      %876 = vmatpush1.msra.mxu0 0.0
      %877 = vmatprep.subr.mxu0 0.0
      %878 = vmatpush1.msra.mxu0 0.0
      %879 = vmatprep.subr.mxu0 0.0
      %880 = vmatpush1.msra.mxu0 0.0
      %881 = vmatprep.subr.mxu0 0.0
      %882 = vmatpush1.msra.mxu0 0.0
      %883 = vmatprep.subr.mxu0 0.0
      %884 = vmatpush1.msra.mxu0 0.0
      %885 = vmatprep.subr.mxu0 0.0
      %886 = vmatpush1.msra.mxu0 0.0
      %887 = vmatprep.subr.mxu0 0.0
      %888 = vmatpush1.msra.mxu0 0.0
      %889 = vmatprep.subr.mxu0 0.0
      %890 = vmatpush1.msra.mxu0 0.0
      %891 = vmatprep.subr.mxu0 0.0
      %892 = vmatpush1.msra.mxu0 0.0
      %893 = vmatprep.subr.mxu0 0.0
      %894 = vmatpush1.msra.mxu0 0.0
      %895 = vmatprep.subr.mxu0 0.0
      %896 = vmatpush1.msra.mxu0 0.0
      %897 = vmatprep.mubr.f32.mxu0 0.0
      %898 = vmatmul.mubr.f32.gmra.mrb[0].mxu0 %v637
      %v899 = vpop.f32.mrb[0].mxu0
      %v900 = vadd.f32 0.0, %v899
      %v901 = vpop.f32.mrb[0].mxu0
      %902 = vmatprep.mubr.f32.mxu0 0.0
      %903 = vmatmul.mubr.f32.gmra.mrb[0].mxu0 %v640
      %v904 = vpop.f32.mrb[0].mxu0
      %v905 = vadd.f32 0.0, %v904
      %v906 = vpop.f32.mrb[0].mxu0
      %907 = vmatprep.mubr.f32.mxu0 0.0
      %908 = vmatmul.mubr.f32.gmra.mrb[0].mxu0 %v643
      %v909 = vpop.f32.mrb[0].mxu0
      %v910 = vadd.f32 0.0, %v909
      %v911 = vpop.f32.mrb[0].mxu0
      %912 = vmatprep.mubr.f32.mxu0 0.0
      %913 = vmatmul.mubr.f32.gmra.mrb[0].mxu0 %v646
      %v914 = vpop.f32.mrb[0].mxu0
      %v915 = vadd.f32 0.0, %v914
      %v916 = vpop.f32.mrb[0].mxu0
      %917 = vmatprep.mubr.f32.mxu0 0.0
      %918 = vmatmul.mubr.f32.gmra.mrb[0].mxu0 %v649
      %v919 = vpop.f32.mrb[0].mxu0
      %v920 = vadd.f32 0.0, %v919
      %v921 = vpop.f32.mrb[0].mxu0
      %922 = vmatprep.mubr.f32.mxu0 0.0
      %923 = vmatmul.mubr.f32.gmra.mrb[0].mxu0 %v652
      %v924 = vpop.f32.mrb[0].mxu0
      %v925 = vadd.f32 0.0, %v924
      %v926 = vpop.f32.mrb[0].mxu0
      %927 = vmatprep.mubr.f32.mxu0 0.0
      %928 = vmatmul.mubr.f32.gmra.mrb[0].mxu0 %v655
      %v929 = vpop.f32.mrb[0].mxu0
      %v930 = vadd.f32 0.0, %v929
      %v931 = vpop.f32.mrb[0].mxu0
      %932 = vmatprep.mubr.f32.mxu0 0.0
      %933 = vmatmul.mubr.f32.gmra.mrb[0].mxu0 %v658
      %v934 = vpop.f32.mrb[0].mxu0
      %v935 = vadd.f32 0.0, %v934
      %v936 = vpop.f32.mrb[0].mxu0
      %937 = vmatprep.mubr.f32.mxu0 0.0
      %938 = vmatmul.mubr.f32.gmra.mrb[0].mxu0 %v661
      %v939 = vpop.f32.mrb[0].mxu0
      %v940 = vadd.f32 0.0, %v939
      %v941 = vpop.f32.mrb[0].mxu0
      %942 = vmatprep.mubr.f32.mxu0 0.0
      %943 = vmatmul.mubr.f32.gmra.mrb[0].mxu0 %v664
      %v944 = vpop.f32.mrb[0].mxu0
      %v945 = vadd.f32 0.0, %v944
      %v946 = vpop.f32.mrb[0].mxu0
      %947 = vmatprep.mubr.f32.mxu0 0.0
      %948 = vmatmul.mubr.f32.gmra.mrb[0].mxu0 %v667
      %v949 = vpop.f32.mrb[0].mxu0
      %v950 = vadd.f32 0.0, %v949
      %v951 = vpop.f32.mrb[0].mxu0
      %952 = vmatprep.mubr.f32.mxu0 0.0
      %953 = vmatmul.mubr.f32.gmra.mrb[0].mxu0 %v670
      %v954 = vpop.f32.mrb[0].mxu0
      %v955 = vadd.f32 0.0, %v954
      %v956 = vpop.f32.mrb[0].mxu0
      %957 = vmatprep.mubr.f32.mxu0 0.0
      %958 = vmatmul.mubr.f32.gmra.mrb[0].mxu0 %v673
      %v959 = vpop.f32.mrb[0].mxu0
      %v960 = vadd.f32 0.0, %v959
      %v961 = vpop.f32.mrb[0].mxu0
      %962 = vmatprep.mubr.f32.mxu0 0.0
      %963 = vmatmul.mubr.f32.gmra.mrb[0].mxu0 %v676
      %v964 = vpop.f32.mrb[0].mxu0
      %v965 = vadd.f32 0.0, %v964
      %v966 = vpop.f32.mrb[0].mxu0
      %967 = vmatprep.mubr.f32.mxu0 0.0
      %968 = vmatmul.mubr.f32.gmra.mrb[0].mxu0 %v679
      %v969 = vpop.f32.mrb[0].mxu0
      %v970 = vadd.f32 0.0, %v969
      %v971 = vpop.f32.mrb[0].mxu0
      %972 = vmatprep.mubr.f32.mxu0 0.0
      %973 = vmatmul.mubr.f32.gmra.mrb[0].mxu0 %v682
      %v974 = vpop.f32.mrb[0].mxu0
      %v975 = vadd.f32 0.0, %v974
      %v976 = vpop.f32.mrb[0].mxu0
      %977 = vdwg.mxu0
      %v978 = vld [vmem:[%s4] sm:$0xff]
      %v979 = vld [vmem:[%s4 + $0x8] sm:$0xff]
      %v980 = vld [vmem:[%s4 + $0x10] sm:$0xff]
      %v981 = vld [vmem:[%s4 + $0x18] sm:$0xff]
      %v982 = vld [vmem:[%s4 + $0x20] sm:$0xff]
      %v983 = vld [vmem:[%s4 + $0x28] sm:$0xff]
      %v984 = vld [vmem:[%s4 + $0x30] sm:$0xff]
      %v985 = vld [vmem:[%s4 + $0x38] sm:$0xff]
      %v986 = vld [vmem:[%s4 + $0x40] sm:$0xff]
      %v987 = vld [vmem:[%s4 + $0x48] sm:$0xff]
      %v988 = vld [vmem:[%s4 + $0x50] sm:$0xff]
      %v989 = vld [vmem:[%s4 + $0x58] sm:$0xff]
      %v990 = vld [vmem:[%s4 + $0x60] sm:$0xff]
      %v991 = vld [vmem:[%s4 + $0x68] sm:$0xff]
      %v992 = vld [vmem:[%s4 + $0x70] sm:$0xff]
      %v993 = vld [vmem:[%s4 + $0x78] sm:$0xff]
      %v994 = vld [vmem:[%s4 + $0x80] sm:$0xff]
      %v995 = vld [vmem:[%s4 + $0x88] sm:$0xff]
      %v996 = vld [vmem:[%s4 + $0x90] sm:$0xff]
      %v997 = vld [vmem:[%s4 + $0x98] sm:$0xff]
      %v998 = vld [vmem:[%s4 + $0xa0] sm:$0xff]
      %v999 = vld [vmem:[%s4 + $0xa8] sm:$0xff]
      %v1000 = vld [vmem:[%s4 + $0xb0] sm:$0xff]
      %v1001 = vld [vmem:[%s4 + $0xb8] sm:$0xff]
      %v1002 = vld [vmem:[%s4 + $0xc0] sm:$0xff]
      %v1003 = vld [vmem:[%s4 + $0xc8] sm:$0xff]
      %v1004 = vld [vmem:[%s4 + $0xd0] sm:$0xff]
      %v1005 = vld [vmem:[%s4 + $0xd8] sm:$0xff]
      %v1006 = vld [vmem:[%s4 + $0xe0] sm:$0xff]
      %v1007 = vld [vmem:[%s4 + $0xe8] sm:$0xff]
      %v1008 = vld [vmem:[%s4 + $0xf0] sm:$0xff]
      %v1009 = vld [vmem:[%s4 + $0xf8] sm:$0xff]
      %v1010 = vld [vmem:[%s4 + $0x100] sm:$0xff]
      %v1011 = vld [vmem:[%s4 + $0x108] sm:$0xff]
      %v1012 = vld [vmem:[%s4 + $0x110] sm:$0xff]
      %v1013 = vld [vmem:[%s4 + $0x118] sm:$0xff]
      %v1014 = vld [vmem:[%s4 + $0x120] sm:$0xff]
      %v1015 = vld [vmem:[%s4 + $0x128] sm:$0xff]
      %v1016 = vld [vmem:[%s4 + $0x130] sm:$0xff]
      %v1017 = vld [vmem:[%s4 + $0x138] sm:$0xff]
      %v1018 = vld [vmem:[%s4 + $0x140] sm:$0xff]
      %v1019 = vld [vmem:[%s4 + $0x148] sm:$0xff]
      %v1020 = vld [vmem:[%s4 + $0x150] sm:$0xff]
      %v1021 = vld [vmem:[%s4 + $0x158] sm:$0xff]
      %v1022 = vld [vmem:[%s4 + $0x160] sm:$0xff]
      %v1023 = vld [vmem:[%s4 + $0x168] sm:$0xff]
      %v1024 = vld [vmem:[%s4 + $0x170] sm:$0xff]
      %v1025 = vld [vmem:[%s4 + $0x178] sm:$0xff]
      %v1026 = vld [vmem:[%s4 + $0x180] sm:$0xff]
      %v1027 = vld [vmem:[%s4 + $0x188] sm:$0xff]
      %v1028 = vld [vmem:[%s4 + $0x190] sm:$0xff]
      %v1029 = vld [vmem:[%s4 + $0x198] sm:$0xff]
      %v1030 = vld [vmem:[%s4 + $0x1a0] sm:$0xff]
      %v1031 = vld [vmem:[%s4 + $0x1a8] sm:$0xff]
      %v1032 = vld [vmem:[%s4 + $0x1b0] sm:$0xff]
      %v1033 = vld [vmem:[%s4 + $0x1b8] sm:$0xff]
      %v1034 = vld [vmem:[%s4 + $0x1c0] sm:$0xff]
      %v1035 = vld [vmem:[%s4 + $0x1c8] sm:$0xff]
      %v1036 = vld [vmem:[%s4 + $0x1d0] sm:$0xff]
      %v1037 = vld [vmem:[%s4 + $0x1d8] sm:$0xff]
      %v1038 = vld [vmem:[%s4 + $0x1e0] sm:$0xff]
      %v1039 = vld [vmem:[%s4 + $0x1e8] sm:$0xff]
      %v1040 = vld [vmem:[%s4 + $0x1f0] sm:$0xff]
      %v1041 = vld [vmem:[%s4 + $0x1f8] sm:$0xff]
      %v1042 = vld [vmem:[%s4 + $0x200] sm:$0xff]
      %v1043 = vld [vmem:[%s4 + $0x208] sm:$0xff]
      %v1044 = vld [vmem:[%s4 + $0x210] sm:$0xff]
      %v1045 = vld [vmem:[%s4 + $0x218] sm:$0xff]
      %v1046 = vld [vmem:[%s4 + $0x220] sm:$0xff]
      %v1047 = vld [vmem:[%s4 + $0x228] sm:$0xff]
      %v1048 = vld [vmem:[%s4 + $0x230] sm:$0xff]
      %v1049 = vld [vmem:[%s4 + $0x238] sm:$0xff]
      %v1050 = vld [vmem:[%s4 + $0x240] sm:$0xff]
      %v1051 = vld [vmem:[%s4 + $0x248] sm:$0xff]
      %v1052 = vld [vmem:[%s4 + $0x250] sm:$0xff]
      %v1053 = vld [vmem:[%s4 + $0x258] sm:$0xff]
      %v1054 = vld [vmem:[%s4 + $0x260] sm:$0xff]
      %v1055 = vld [vmem:[%s4 + $0x268] sm:$0xff]
      %v1056 = vld [vmem:[%s4 + $0x270] sm:$0xff]
      %v1057 = vld [vmem:[%s4 + $0x278] sm:$0xff]
      %v1058 = vld [vmem:[%s4 + $0x280] sm:$0xff]
      %v1059 = vld [vmem:[%s4 + $0x288] sm:$0xff]
      %v1060 = vld [vmem:[%s4 + $0x290] sm:$0xff]
      %v1061 = vld [vmem:[%s4 + $0x298] sm:$0xff]
      %v1062 = vld [vmem:[%s4 + $0x2a0] sm:$0xff]
      %v1063 = vld [vmem:[%s4 + $0x2a8] sm:$0xff]
      %v1064 = vld [vmem:[%s4 + $0x2b0] sm:$0xff]
      %v1065 = vld [vmem:[%s4 + $0x2b8] sm:$0xff]
      %v1066 = vld [vmem:[%s4 + $0x2c0] sm:$0xff]
      %v1067 = vld [vmem:[%s4 + $0x2c8] sm:$0xff]
      %v1068 = vld [vmem:[%s4 + $0x2d0] sm:$0xff]
      %v1069 = vld [vmem:[%s4 + $0x2d8] sm:$0xff]
      %v1070 = vld [vmem:[%s4 + $0x2e0] sm:$0xff]
      %v1071 = vld [vmem:[%s4 + $0x2e8] sm:$0xff]
      %v1072 = vld [vmem:[%s4 + $0x2f0] sm:$0xff]
      %v1073 = vld [vmem:[%s4 + $0x2f8] sm:$0xff]
      %v1074 = vld [vmem:[%s5] sm:$0xff]
      %v1075 = vld [vmem:[%s5 + $0x8] sm:$0xff]
      %v1076 = vld [vmem:[%s5 + $0x10] sm:$0xff]
      %v1077 = vld [vmem:[%s5 + $0x18] sm:$0xff]
      %v1078 = vld [vmem:[%s5 + $0x20] sm:$0xff]
      %v1079 = vld [vmem:[%s5 + $0x28] sm:$0xff]
      %v1080 = vld [vmem:[%s5 + $0x30] sm:$0xff]
      %v1081 = vld [vmem:[%s5 + $0x38] sm:$0xff]
      %v1082 = vld [vmem:[%s5 + $0x40] sm:$0xff]
      %v1083 = vld [vmem:[%s5 + $0x48] sm:$0xff]
      %v1084 = vld [vmem:[%s5 + $0x50] sm:$0xff]
      %v1085 = vld [vmem:[%s5 + $0x58] sm:$0xff]
      %v1086 = vld [vmem:[%s5 + $0x60] sm:$0xff]
      %v1087 = vld [vmem:[%s5 + $0x68] sm:$0xff]
      %v1088 = vld [vmem:[%s5 + $0x70] sm:$0xff]
      %v1089 = vld [vmem:[%s5 + $0x78] sm:$0xff]
      %v1090 = vld [vmem:[%s5 + $0x80] sm:$0xff]
      %v1091 = vld [vmem:[%s5 + $0x88] sm:$0xff]
      %v1092 = vld [vmem:[%s5 + $0x90] sm:$0xff]
      %v1093 = vld [vmem:[%s5 + $0x98] sm:$0xff]
      %v1094 = vld [vmem:[%s5 + $0xa0] sm:$0xff]
      %v1095 = vld [vmem:[%s5 + $0xa8] sm:$0xff]
      %v1096 = vld [vmem:[%s5 + $0xb0] sm:$0xff]
      %v1097 = vld [vmem:[%s5 + $0xb8] sm:$0xff]
      %v1098 = vld [vmem:[%s5 + $0xc0] sm:$0xff]
      %v1099 = vld [vmem:[%s5 + $0xc8] sm:$0xff]
      %v1100 = vld [vmem:[%s5 + $0xd0] sm:$0xff]
      %v1101 = vld [vmem:[%s5 + $0xd8] sm:$0xff]
      %v1102 = vld [vmem:[%s5 + $0xe0] sm:$0xff]
      %v1103 = vld [vmem:[%s5 + $0xe8] sm:$0xff]
      %v1104 = vld [vmem:[%s5 + $0xf0] sm:$0xff]
      %v1105 = vld [vmem:[%s5 + $0xf8] sm:$0xff]
      %1107 = vset.pattern.permute.xlu0 0
      %1108 = vperm.xlu0 %1107, %v1074
      %v1109 = vpop.permute.xlu0 %1108
      %1112 = vset.pattern.permute.xlu0 0
      %1113 = vperm.xlu0 %1112, %v1075
      %v1114 = vpop.permute.xlu0 %1113
      %1117 = vset.pattern.permute.xlu0 0
      %1118 = vperm.xlu0 %1117, %v1076
      %v1119 = vpop.permute.xlu0 %1118
      %1122 = vset.pattern.permute.xlu0 0
      %1123 = vperm.xlu0 %1122, %v1077
      %v1124 = vpop.permute.xlu0 %1123
      %1127 = vset.pattern.permute.xlu0 0
      %1128 = vperm.xlu0 %1127, %v1078
      %v1129 = vpop.permute.xlu0 %1128
      %1132 = vset.pattern.permute.xlu0 0
      %1133 = vperm.xlu0 %1132, %v1079
      %v1134 = vpop.permute.xlu0 %1133
      %1137 = vset.pattern.permute.xlu0 0
      %1138 = vperm.xlu0 %1137, %v1080
      %v1139 = vpop.permute.xlu0 %1138
      %1142 = vset.pattern.permute.xlu0 0
      %1143 = vperm.xlu0 %1142, %v1081
      %v1144 = vpop.permute.xlu0 %1143
      %1147 = vset.pattern.permute.xlu0 0
      %1148 = vperm.xlu0 %1147, %v1082
      %v1149 = vpop.permute.xlu0 %1148
      %1152 = vset.pattern.permute.xlu0 0
      %1153 = vperm.xlu0 %1152, %v1083
      %v1154 = vpop.permute.xlu0 %1153
      %1157 = vset.pattern.permute.xlu0 0
      %1158 = vperm.xlu0 %1157, %v1084
      %v1159 = vpop.permute.xlu0 %1158
      %1162 = vset.pattern.permute.xlu0 0
      %1163 = vperm.xlu0 %1162, %v1085
      %v1164 = vpop.permute.xlu0 %1163
      %1167 = vset.pattern.permute.xlu0 0
      %1168 = vperm.xlu0 %1167, %v1086
      %v1169 = vpop.permute.xlu0 %1168
      %1172 = vset.pattern.permute.xlu0 0
      %1173 = vperm.xlu0 %1172, %v1087
      %v1174 = vpop.permute.xlu0 %1173
      %1177 = vset.pattern.permute.xlu0 0
      %1178 = vperm.xlu0 %1177, %v1088
      %v1179 = vpop.permute.xlu0 %1178
      %1182 = vset.pattern.permute.xlu0 0
      %1183 = vperm.xlu0 %1182, %v1089
      %v1184 = vpop.permute.xlu0 %1183
      %1187 = vset.pattern.permute.xlu0 0
      %1188 = vperm.xlu0 %1187, %v1090
      %v1189 = vpop.permute.xlu0 %1188
      %1192 = vset.pattern.permute.xlu0 0
      %1193 = vperm.xlu0 %1192, %v1091
      %v1194 = vpop.permute.xlu0 %1193
      %1197 = vset.pattern.permute.xlu0 0
      %1198 = vperm.xlu0 %1197, %v1092
      %v1199 = vpop.permute.xlu0 %1198
      %1202 = vset.pattern.permute.xlu0 0
      %1203 = vperm.xlu0 %1202, %v1093
      %v1204 = vpop.permute.xlu0 %1203
      %1207 = vset.pattern.permute.xlu0 0
      %1208 = vperm.xlu0 %1207, %v1094
      %v1209 = vpop.permute.xlu0 %1208
      %1212 = vset.pattern.permute.xlu0 0
      %1213 = vperm.xlu0 %1212, %v1095
      %v1214 = vpop.permute.xlu0 %1213
      %1217 = vset.pattern.permute.xlu0 0
      %1218 = vperm.xlu0 %1217, %v1096
      %v1219 = vpop.permute.xlu0 %1218
      %1222 = vset.pattern.permute.xlu0 0
      %1223 = vperm.xlu0 %1222, %v1097
      %v1224 = vpop.permute.xlu0 %1223
      %1227 = vset.pattern.permute.xlu0 0
      %1228 = vperm.xlu0 %1227, %v1098
      %v1229 = vpop.permute.xlu0 %1228
      %1232 = vset.pattern.permute.xlu0 0
      %1233 = vperm.xlu0 %1232, %v1099
      %v1234 = vpop.permute.xlu0 %1233
      %1237 = vset.pattern.permute.xlu0 0
      %1238 = vperm.xlu0 %1237, %v1100
      %v1239 = vpop.permute.xlu0 %1238
      %1242 = vset.pattern.permute.xlu0 0
      %1243 = vperm.xlu0 %1242, %v1101
      %v1244 = vpop.permute.xlu0 %1243
      %1247 = vset.pattern.permute.xlu0 0
      %1248 = vperm.xlu0 %1247, %v1102
      %v1249 = vpop.permute.xlu0 %1248
      %1252 = vset.pattern.permute.xlu0 0
      %1253 = vperm.xlu0 %1252, %v1103
      %v1254 = vpop.permute.xlu0 %1253
      %1257 = vset.pattern.permute.xlu0 0
      %1258 = vperm.xlu0 %1257, %v1104
      %v1259 = vpop.permute.xlu0 %1258
      %1262 = vset.pattern.permute.xlu0 0
      %1263 = vperm.xlu0 %1262, %v1105
      %v1264 = vpop.permute.xlu0 %1263
      %1266 = vmatprep.subr.mxu0 0.0
      %1267 = vmatpush1.msra.mxu0 %v751
      %1268 = vmatprep.subr.mxu0 0.0
      %1269 = vmatpush1.msra.mxu0 %v756
      %1270 = vmatprep.subr.mxu0 0.0
      %1271 = vmatpush1.msra.mxu0 %v761
      %1272 = vmatprep.subr.mxu0 0.0
      %1273 = vmatpush1.msra.mxu0 %v766
      %1274 = vmatprep.subr.mxu0 0.0
      %1275 = vmatpush1.msra.mxu0 %v771
      %1276 = vmatprep.subr.mxu0 0.0
      %1277 = vmatpush1.msra.mxu0 %v776
      %1278 = vmatprep.subr.mxu0 0.0
      %1279 = vmatpush1.msra.mxu0 %v781
      %1280 = vmatprep.subr.mxu0 0.0
      %1281 = vmatpush1.msra.mxu0 %v786
      %1282 = vmatprep.subr.mxu0 0.0
      %1283 = vmatpush1.msra.mxu0 %v791
      %1284 = vmatprep.subr.mxu0 0.0
      %1285 = vmatpush1.msra.mxu0 %v796
      %1286 = vmatprep.subr.mxu0 0.0
      %1287 = vmatpush1.msra.mxu0 %v801
      %1288 = vmatprep.subr.mxu0 0.0
      %1289 = vmatpush1.msra.mxu0 %v806
      %1290 = vmatprep.subr.mxu0 0.0
      %1291 = vmatpush1.msra.mxu0 %v811
      %1292 = vmatprep.subr.mxu0 0.0
      %1293 = vmatpush1.msra.mxu0 %v816
      %1294 = vmatprep.subr.mxu0 0.0
      %1295 = vmatpush1.msra.mxu0 %v821
      %1296 = vmatprep.subr.mxu0 0.0
      %1297 = vmatpush1.msra.mxu0 %v826
      %1298 = vmatprep.subr.mxu0 0.0
      %1299 = vmatpush1.msra.mxu0 %v553
      %1300 = vmatprep.subr.mxu0 0.0
      %1301 = vmatpush1.msra.mxu0 %v558
      %1302 = vmatprep.subr.mxu0 0.0
      %1303 = vmatpush1.msra.mxu0 %v563
      %1304 = vmatprep.subr.mxu0 0.0
      %1305 = vmatpush1.msra.mxu0 %v568
      %1306 = vmatprep.subr.mxu0 0.0
      %1307 = vmatpush1.msra.mxu0 %v573
      %1308 = vmatprep.subr.mxu0 0.0
      %1309 = vmatpush1.msra.mxu0 %v578
      %1310 = vmatprep.subr.mxu0 0.0
      %1311 = vmatpush1.msra.mxu0 %v583
      %1312 = vmatprep.subr.mxu0 0.0
      %1313 = vmatpush1.msra.mxu0 %v588
      %1314 = vmatprep.subr.mxu0 0.0
      %1315 = vmatpush1.msra.mxu0 %v593
      %1316 = vmatprep.subr.mxu0 0.0
      %1317 = vmatpush1.msra.mxu0 %v598
      %1318 = vmatprep.subr.mxu0 0.0
      %1319 = vmatpush1.msra.mxu0 %v603
      %1320 = vmatprep.subr.mxu0 0.0
      %1321 = vmatpush1.msra.mxu0 %v608
      %1322 = vmatprep.subr.mxu0 0.0
      %1323 = vmatpush1.msra.mxu0 %v613
      %1324 = vmatprep.subr.mxu0 0.0
      %1325 = vmatpush1.msra.mxu0 %v618
      %1326 = vmatprep.subr.mxu0 0.0
      %1327 = vmatpush1.msra.mxu0 %v623
      %1328 = vmatprep.subr.mxu0 0.0
      %1329 = vmatpush1.msra.mxu0 %v628
      %1330 = vmatprep.mubr.f32.mxu0 %v979
      %1331 = vmatmul.mubr.f32.gmra.mrb[0].mxu0 %v978
      %v1332 = vpop.f32.mrb[0].mxu0
      %v1333 = vadd.f32 %v1109, %v1332
      %v1334 = vpop.f32.mrb[0].mxu0
      %1335 = vmatprep.mubr.f32.mxu0 %v982
      %1336 = vmatmul.mubr.f32.gmra.mrb[0].mxu0 %v981
      %v1337 = vpop.f32.mrb[0].mxu0
      %v1338 = vadd.f32 %v1114, %v1337
      %v1339 = vpop.f32.mrb[0].mxu0
      %1340 = vmatprep.mubr.f32.mxu0 %v985
      %1341 = vmatmul.mubr.f32.gmra.mrb[0].mxu0 %v984
      %v1342 = vpop.f32.mrb[0].mxu0
      %v1343 = vadd.f32 %v1119, %v1342
      %v1344 = vpop.f32.mrb[0].mxu0
      %1345 = vmatprep.mubr.f32.mxu0 %v988
      %1346 = vmatmul.mubr.f32.gmra.mrb[0].mxu0 %v987
      %v1347 = vpop.f32.mrb[0].mxu0
      %v1348 = vadd.f32 %v1124, %v1347
      %v1349 = vpop.f32.mrb[0].mxu0
      %1350 = vmatprep.mubr.f32.mxu0 %v991
      %1351 = vmatmul.mubr.f32.gmra.mrb[0].mxu0 %v990
      %v1352 = vpop.f32.mrb[0].mxu0
      %v1353 = vadd.f32 %v1129, %v1352
      %v1354 = vpop.f32.mrb[0].mxu0
      %1355 = vmatprep.mubr.f32.mxu0 %v994
      %1356 = vmatmul.mubr.f32.gmra.mrb[0].mxu0 %v993
      %v1357 = vpop.f32.mrb[0].mxu0
      %v1358 = vadd.f32 %v1134, %v1357
      %v1359 = vpop.f32.mrb[0].mxu0
      %1360 = vmatprep.mubr.f32.mxu0 %v997
      %1361 = vmatmul.mubr.f32.gmra.mrb[0].mxu0 %v996
      %v1362 = vpop.f32.mrb[0].mxu0
      %v1363 = vadd.f32 %v1139, %v1362
      %v1364 = vpop.f32.mrb[0].mxu0
      %1365 = vmatprep.mubr.f32.mxu0 %v1000
      %1366 = vmatmul.mubr.f32.gmra.mrb[0].mxu0 %v999
      %v1367 = vpop.f32.mrb[0].mxu0
      %v1368 = vadd.f32 %v1144, %v1367
      %v1369 = vpop.f32.mrb[0].mxu0
      %1370 = vmatprep.mubr.f32.mxu0 %v1003
      %1371 = vmatmul.mubr.f32.gmra.mrb[0].mxu0 %v1002
      %v1372 = vpop.f32.mrb[0].mxu0
      %v1373 = vadd.f32 %v1149, %v1372
      %v1374 = vpop.f32.mrb[0].mxu0
      %1375 = vmatprep.mubr.f32.mxu0 %v1006
      %1376 = vmatmul.mubr.f32.gmra.mrb[0].mxu0 %v1005
      %v1377 = vpop.f32.mrb[0].mxu0
      %v1378 = vadd.f32 %v1154, %v1377
      %v1379 = vpop.f32.mrb[0].mxu0
      %1380 = vmatprep.mubr.f32.mxu0 %v1009
      %1381 = vmatmul.mubr.f32.gmra.mrb[0].mxu0 %v1008
      %v1382 = vpop.f32.mrb[0].mxu0
      %v1383 = vadd.f32 %v1159, %v1382
      %v1384 = vpop.f32.mrb[0].mxu0
      %1385 = vmatprep.mubr.f32.mxu0 %v1012
      %1386 = vmatmul.mubr.f32.gmra.mrb[0].mxu0 %v1011
      %v1387 = vpop.f32.mrb[0].mxu0
      %v1388 = vadd.f32 %v1164, %v1387
      %v1389 = vpop.f32.mrb[0].mxu0
      %1390 = vmatprep.mubr.f32.mxu0 %v1015
      %1391 = vmatmul.mubr.f32.gmra.mrb[0].mxu0 %v1014
      %v1392 = vpop.f32.mrb[0].mxu0
      %v1393 = vadd.f32 %v1169, %v1392
      %v1394 = vpop.f32.mrb[0].mxu0
      %1395 = vmatprep.mubr.f32.mxu0 %v1018
      %1396 = vmatmul.mubr.f32.gmra.mrb[0].mxu0 %v1017
      %v1397 = vpop.f32.mrb[0].mxu0
      %v1398 = vadd.f32 %v1174, %v1397
      %v1399 = vpop.f32.mrb[0].mxu0
      %1400 = vmatprep.mubr.f32.mxu0 %v1021
      %1401 = vmatmul.mubr.f32.gmra.mrb[0].mxu0 %v1020
      %v1402 = vpop.f32.mrb[0].mxu0
      %v1403 = vadd.f32 %v1179, %v1402
      %v1404 = vpop.f32.mrb[0].mxu0
      %1405 = vmatprep.mubr.f32.mxu0 %v1024
      %1406 = vmatmul.mubr.f32.gmra.mrb[0].mxu0 %v1023
      %v1407 = vpop.f32.mrb[0].mxu0
      %v1408 = vadd.f32 %v1184, %v1407
      %v1409 = vpop.f32.mrb[0].mxu0
      %1410 = vmatprep.mubr.f32.mxu0 %v1027
      %1411 = vmatmul.mubr.f32.gmra.mrb[0].mxu0 %v1026
      %v1412 = vpop.f32.mrb[0].mxu0
      %v1413 = vadd.f32 %v1189, %v1412
      %v1414 = vpop.f32.mrb[0].mxu0
      %1415 = vmatprep.mubr.f32.mxu0 %v1030
      %1416 = vmatmul.mubr.f32.gmra.mrb[0].mxu0 %v1029
      %v1417 = vpop.f32.mrb[0].mxu0
      %v1418 = vadd.f32 %v1194, %v1417
      %v1419 = vpop.f32.mrb[0].mxu0
      %1420 = vmatprep.mubr.f32.mxu0 %v1033
      %1421 = vmatmul.mubr.f32.gmra.mrb[0].mxu0 %v1032
      %v1422 = vpop.f32.mrb[0].mxu0
      %v1423 = vadd.f32 %v1199, %v1422
      %v1424 = vpop.f32.mrb[0].mxu0
      %1425 = vmatprep.mubr.f32.mxu0 %v1036
      %1426 = vmatmul.mubr.f32.gmra.mrb[0].mxu0 %v1035
      %v1427 = vpop.f32.mrb[0].mxu0
      %v1428 = vadd.f32 %v1204, %v1427
      %v1429 = vpop.f32.mrb[0].mxu0
      %1430 = vmatprep.mubr.f32.mxu0 %v1039
      %1431 = vmatmul.mubr.f32.gmra.mrb[0].mxu0 %v1038
      %v1432 = vpop.f32.mrb[0].mxu0
      %v1433 = vadd.f32 %v1209, %v1432
      %v1434 = vpop.f32.mrb[0].mxu0
      %1435 = vmatprep.mubr.f32.mxu0 %v1042
      %1436 = vmatmul.mubr.f32.gmra.mrb[0].mxu0 %v1041
      %v1437 = vpop.f32.mrb[0].mxu0
      %v1438 = vadd.f32 %v1214, %v1437
      %v1439 = vpop.f32.mrb[0].mxu0
      %1440 = vmatprep.mubr.f32.mxu0 %v1045
      %1441 = vmatmul.mubr.f32.gmra.mrb[0].mxu0 %v1044
      %v1442 = vpop.f32.mrb[0].mxu0
      %v1443 = vadd.f32 %v1219, %v1442
      %v1444 = vpop.f32.mrb[0].mxu0
      %1445 = vmatprep.mubr.f32.mxu0 %v1048
      %1446 = vmatmul.mubr.f32.gmra.mrb[0].mxu0 %v1047
      %v1447 = vpop.f32.mrb[0].mxu0
      %v1448 = vadd.f32 %v1224, %v1447
      %v1449 = vpop.f32.mrb[0].mxu0
      %1450 = vmatprep.mubr.f32.mxu0 %v1051
      %1451 = vmatmul.mubr.f32.gmra.mrb[0].mxu0 %v1050
      %v1452 = vpop.f32.mrb[0].mxu0
      %v1453 = vadd.f32 %v1229, %v1452
      %v1454 = vpop.f32.mrb[0].mxu0
      %1455 = vmatprep.mubr.f32.mxu0 %v1054
      %1456 = vmatmul.mubr.f32.gmra.mrb[0].mxu0 %v1053
      %v1457 = vpop.f32.mrb[0].mxu0
      %v1458 = vadd.f32 %v1234, %v1457
      %v1459 = vpop.f32.mrb[0].mxu0
      %1460 = vmatprep.mubr.f32.mxu0 %v1057
      %1461 = vmatmul.mubr.f32.gmra.mrb[0].mxu0 %v1056
      %v1462 = vpop.f32.mrb[0].mxu0
      %v1463 = vadd.f32 %v1239, %v1462
      %v1464 = vpop.f32.mrb[0].mxu0
      %1465 = vmatprep.mubr.f32.mxu0 %v1060
      %1466 = vmatmul.mubr.f32.gmra.mrb[0].mxu0 %v1059
      %v1467 = vpop.f32.mrb[0].mxu0
      %v1468 = vadd.f32 %v1244, %v1467
      %v1469 = vpop.f32.mrb[0].mxu0
      %1470 = vmatprep.mubr.f32.mxu0 %v1063
      %1471 = vmatmul.mubr.f32.gmra.mrb[0].mxu0 %v1062
      %v1472 = vpop.f32.mrb[0].mxu0
      %v1473 = vadd.f32 %v1249, %v1472
      %v1474 = vpop.f32.mrb[0].mxu0
      %1475 = vmatprep.mubr.f32.mxu0 %v1066
      %1476 = vmatmul.mubr.f32.gmra.mrb[0].mxu0 %v1065
      %v1477 = vpop.f32.mrb[0].mxu0
      %v1478 = vadd.f32 %v1254, %v1477
      %v1479 = vpop.f32.mrb[0].mxu0
      %1480 = vmatprep.mubr.f32.mxu0 %v1069
      %1481 = vmatmul.mubr.f32.gmra.mrb[0].mxu0 %v1068
      %v1482 = vpop.f32.mrb[0].mxu0
      %v1483 = vadd.f32 %v1259, %v1482
      %v1484 = vpop.f32.mrb[0].mxu0
      %1485 = vmatprep.mubr.f32.mxu0 %v1072
      %1486 = vmatmul.mubr.f32.gmra.mrb[0].mxu0 %v1071
      %v1487 = vpop.f32.mrb[0].mxu0
      %v1488 = vadd.f32 %v1264, %v1487
      %v1489 = vpop.f32.mrb[0].mxu0
      %1490 = vdwg.mxu0
      %1491 = vmatprep.subr.mxu0 0.0
      %1492 = vmatpush1.msra.mxu0 %v900
      %1493 = vmatprep.subr.mxu0 0.0
      %1494 = vmatpush1.msra.mxu0 %v905
      %1495 = vmatprep.subr.mxu0 0.0
      %1496 = vmatpush1.msra.mxu0 %v910
      %1497 = vmatprep.subr.mxu0 0.0
      %1498 = vmatpush1.msra.mxu0 %v915
      %1499 = vmatprep.subr.mxu0 0.0
      %1500 = vmatpush1.msra.mxu0 %v920
      %1501 = vmatprep.subr.mxu0 0.0
      %1502 = vmatpush1.msra.mxu0 %v925
      %1503 = vmatprep.subr.mxu0 0.0
      %1504 = vmatpush1.msra.mxu0 %v930
      %1505 = vmatprep.subr.mxu0 0.0
      %1506 = vmatpush1.msra.mxu0 %v935
      %1507 = vmatprep.subr.mxu0 0.0
      %1508 = vmatpush1.msra.mxu0 %v940
      %1509 = vmatprep.subr.mxu0 0.0
      %1510 = vmatpush1.msra.mxu0 %v945
      %1511 = vmatprep.subr.mxu0 0.0
      %1512 = vmatpush1.msra.mxu0 %v950
      %1513 = vmatprep.subr.mxu0 0.0
      %1514 = vmatpush1.msra.mxu0 %v955
      %1515 = vmatprep.subr.mxu0 0.0
      %1516 = vmatpush1.msra.mxu0 %v960
      %1517 = vmatprep.subr.mxu0 0.0
      %1518 = vmatpush1.msra.mxu0 %v965
      %1519 = vmatprep.subr.mxu0 0.0
      %1520 = vmatpush1.msra.mxu0 %v970
      %1521 = vmatprep.subr.mxu0 0.0
      %1522 = vmatpush1.msra.mxu0 %v975
      %1523 = vmatprep.subr.mxu0 0.0
      %1524 = vmatpush1.msra.mxu0 0.0
      %1525 = vmatprep.subr.mxu0 0.0
      %1526 = vmatpush1.msra.mxu0 0.0
      %1527 = vmatprep.subr.mxu0 0.0
      %1528 = vmatpush1.msra.mxu0 0.0
      %1529 = vmatprep.subr.mxu0 0.0
      %1530 = vmatpush1.msra.mxu0 0.0
      %1531 = vmatprep.subr.mxu0 0.0
      %1532 = vmatpush1.msra.mxu0 0.0
      %1533 = vmatprep.subr.mxu0 0.0
      %1534 = vmatpush1.msra.mxu0 0.0
      %1535 = vmatprep.subr.mxu0 0.0
      %1536 = vmatpush1.msra.mxu0 0.0
      %1537 = vmatprep.subr.mxu0 0.0
      %1538 = vmatpush1.msra.mxu0 0.0
      %1539 = vmatprep.subr.mxu0 0.0
      %1540 = vmatpush1.msra.mxu0 0.0
      %1541 = vmatprep.subr.mxu0 0.0
      %1542 = vmatpush1.msra.mxu0 0.0
      %1543 = vmatprep.subr.mxu0 0.0
      %1544 = vmatpush1.msra.mxu0 0.0
      %1545 = vmatprep.subr.mxu0 0.0
      %1546 = vmatpush1.msra.mxu0 0.0
      %1547 = vmatprep.subr.mxu0 0.0
      %1548 = vmatpush1.msra.mxu0 0.0
      %1549 = vmatprep.subr.mxu0 0.0
      %1550 = vmatpush1.msra.mxu0 0.0
      %1551 = vmatprep.subr.mxu0 0.0
      %1552 = vmatpush1.msra.mxu0 0.0
      %1553 = vmatprep.subr.mxu0 0.0
      %1554 = vmatpush1.msra.mxu0 0.0
      %1555 = vmatprep.mubr.f32.mxu0 0.0
      %1556 = vmatmul.mubr.f32.gmra.mrb[0].mxu0 %v980
      %v1557 = vpop.f32.mrb[0].mxu0
      %v1558 = vadd.f32 %v1333, %v1557
      %v1559 = vpop.f32.mrb[0].mxu0
      %1560 = vmatprep.mubr.f32.mxu0 0.0
      %1561 = vmatmul.mubr.f32.gmra.mrb[0].mxu0 %v983
      %v1562 = vpop.f32.mrb[0].mxu0
      %v1563 = vadd.f32 %v1338, %v1562
      %v1564 = vpop.f32.mrb[0].mxu0
      %1565 = vmatprep.mubr.f32.mxu0 0.0
      %1566 = vmatmul.mubr.f32.gmra.mrb[0].mxu0 %v986
      %v1567 = vpop.f32.mrb[0].mxu0
      %v1568 = vadd.f32 %v1343, %v1567
      %v1569 = vpop.f32.mrb[0].mxu0
      %1570 = vmatprep.mubr.f32.mxu0 0.0
      %1571 = vmatmul.mubr.f32.gmra.mrb[0].mxu0 %v989
      %v1572 = vpop.f32.mrb[0].mxu0
      %v1573 = vadd.f32 %v1348, %v1572
      %v1574 = vpop.f32.mrb[0].mxu0
      %1575 = vmatprep.mubr.f32.mxu0 0.0
      %1576 = vmatmul.mubr.f32.gmra.mrb[0].mxu0 %v992
      %v1577 = vpop.f32.mrb[0].mxu0
      %v1578 = vadd.f32 %v1353, %v1577
      %v1579 = vpop.f32.mrb[0].mxu0
      %1580 = vmatprep.mubr.f32.mxu0 0.0
      %1581 = vmatmul.mubr.f32.gmra.mrb[0].mxu0 %v995
      %v1582 = vpop.f32.mrb[0].mxu0
      %v1583 = vadd.f32 %v1358, %v1582
      %v1584 = vpop.f32.mrb[0].mxu0
      %1585 = vmatprep.mubr.f32.mxu0 0.0
      %1586 = vmatmul.mubr.f32.gmra.mrb[0].mxu0 %v998
      %v1587 = vpop.f32.mrb[0].mxu0
      %v1588 = vadd.f32 %v1363, %v1587
      %v1589 = vpop.f32.mrb[0].mxu0
      %1590 = vmatprep.mubr.f32.mxu0 0.0
      %1591 = vmatmul.mubr.f32.gmra.mrb[0].mxu0 %v1001
      %v1592 = vpop.f32.mrb[0].mxu0
      %v1593 = vadd.f32 %v1368, %v1592
      %v1594 = vpop.f32.mrb[0].mxu0
      %1595 = vmatprep.mubr.f32.mxu0 0.0
      %1596 = vmatmul.mubr.f32.gmra.mrb[0].mxu0 %v1004
      %v1597 = vpop.f32.mrb[0].mxu0
      %v1598 = vadd.f32 %v1373, %v1597
      %v1599 = vpop.f32.mrb[0].mxu0
      %1600 = vmatprep.mubr.f32.mxu0 0.0
      %1601 = vmatmul.mubr.f32.gmra.mrb[0].mxu0 %v1007
      %v1602 = vpop.f32.mrb[0].mxu0
      %v1603 = vadd.f32 %v1378, %v1602
      %v1604 = vpop.f32.mrb[0].mxu0
      %1605 = vmatprep.mubr.f32.mxu0 0.0
      %1606 = vmatmul.mubr.f32.gmra.mrb[0].mxu0 %v1010
      %v1607 = vpop.f32.mrb[0].mxu0
      %v1608 = vadd.f32 %v1383, %v1607
      %v1609 = vpop.f32.mrb[0].mxu0
      %1610 = vmatprep.mubr.f32.mxu0 0.0
      %1611 = vmatmul.mubr.f32.gmra.mrb[0].mxu0 %v1013
      %v1612 = vpop.f32.mrb[0].mxu0
      %v1613 = vadd.f32 %v1388, %v1612
      %v1614 = vpop.f32.mrb[0].mxu0
      %1615 = vmatprep.mubr.f32.mxu0 0.0
      %1616 = vmatmul.mubr.f32.gmra.mrb[0].mxu0 %v1016
      %v1617 = vpop.f32.mrb[0].mxu0
      %v1618 = vadd.f32 %v1393, %v1617
      %v1619 = vpop.f32.mrb[0].mxu0
      %1620 = vmatprep.mubr.f32.mxu0 0.0
      %1621 = vmatmul.mubr.f32.gmra.mrb[0].mxu0 %v1019
      %v1622 = vpop.f32.mrb[0].mxu0
      %v1623 = vadd.f32 %v1398, %v1622
      %v1624 = vpop.f32.mrb[0].mxu0
      %1625 = vmatprep.mubr.f32.mxu0 0.0
      %1626 = vmatmul.mubr.f32.gmra.mrb[0].mxu0 %v1022
      %v1627 = vpop.f32.mrb[0].mxu0
      %v1628 = vadd.f32 %v1403, %v1627
      %v1629 = vpop.f32.mrb[0].mxu0
      %1630 = vmatprep.mubr.f32.mxu0 0.0
      %1631 = vmatmul.mubr.f32.gmra.mrb[0].mxu0 %v1025
      %v1632 = vpop.f32.mrb[0].mxu0
      %v1633 = vadd.f32 %v1408, %v1632
      %v1634 = vpop.f32.mrb[0].mxu0
      %1635 = vmatprep.mubr.f32.mxu0 0.0
      %1636 = vmatmul.mubr.f32.gmra.mrb[0].mxu0 %v1028
      %v1637 = vpop.f32.mrb[0].mxu0
      %v1638 = vadd.f32 %v1413, %v1637
      %v1639 = vpop.f32.mrb[0].mxu0
      %1640 = vmatprep.mubr.f32.mxu0 0.0
      %1641 = vmatmul.mubr.f32.gmra.mrb[0].mxu0 %v1031
      %v1642 = vpop.f32.mrb[0].mxu0
      %v1643 = vadd.f32 %v1418, %v1642
      %v1644 = vpop.f32.mrb[0].mxu0
      %1645 = vmatprep.mubr.f32.mxu0 0.0
      %1646 = vmatmul.mubr.f32.gmra.mrb[0].mxu0 %v1034
      %v1647 = vpop.f32.mrb[0].mxu0
      %v1648 = vadd.f32 %v1423, %v1647
      %v1649 = vpop.f32.mrb[0].mxu0
      %1650 = vmatprep.mubr.f32.mxu0 0.0
      %1651 = vmatmul.mubr.f32.gmra.mrb[0].mxu0 %v1037
      %v1652 = vpop.f32.mrb[0].mxu0
      %v1653 = vadd.f32 %v1428, %v1652
      %v1654 = vpop.f32.mrb[0].mxu0
      %1655 = vmatprep.mubr.f32.mxu0 0.0
      %1656 = vmatmul.mubr.f32.gmra.mrb[0].mxu0 %v1040
      %v1657 = vpop.f32.mrb[0].mxu0
      %v1658 = vadd.f32 %v1433, %v1657
      %v1659 = vpop.f32.mrb[0].mxu0
      %1660 = vmatprep.mubr.f32.mxu0 0.0
      %1661 = vmatmul.mubr.f32.gmra.mrb[0].mxu0 %v1043
      %v1662 = vpop.f32.mrb[0].mxu0
      %v1663 = vadd.f32 %v1438, %v1662
      %v1664 = vpop.f32.mrb[0].mxu0
      %1665 = vmatprep.mubr.f32.mxu0 0.0
      %1666 = vmatmul.mubr.f32.gmra.mrb[0].mxu0 %v1046
      %v1667 = vpop.f32.mrb[0].mxu0
      %v1668 = vadd.f32 %v1443, %v1667
      %v1669 = vpop.f32.mrb[0].mxu0
      %1670 = vmatprep.mubr.f32.mxu0 0.0
      %1671 = vmatmul.mubr.f32.gmra.mrb[0].mxu0 %v1049
      %v1672 = vpop.f32.mrb[0].mxu0
      %v1673 = vadd.f32 %v1448, %v1672
      %v1674 = vpop.f32.mrb[0].mxu0
      %1675 = vmatprep.mubr.f32.mxu0 0.0
      %1676 = vmatmul.mubr.f32.gmra.mrb[0].mxu0 %v1052
      %v1677 = vpop.f32.mrb[0].mxu0
      %v1678 = vadd.f32 %v1453, %v1677
      %v1679 = vpop.f32.mrb[0].mxu0
      %1680 = vmatprep.mubr.f32.mxu0 0.0
      %1681 = vmatmul.mubr.f32.gmra.mrb[0].mxu0 %v1055
      %v1682 = vpop.f32.mrb[0].mxu0
      %v1683 = vadd.f32 %v1458, %v1682
      %v1684 = vpop.f32.mrb[0].mxu0
      %1685 = vmatprep.mubr.f32.mxu0 0.0
      %1686 = vmatmul.mubr.f32.gmra.mrb[0].mxu0 %v1058
      %v1687 = vpop.f32.mrb[0].mxu0
      %v1688 = vadd.f32 %v1463, %v1687
      %v1689 = vpop.f32.mrb[0].mxu0
      %1690 = vmatprep.mubr.f32.mxu0 0.0
      %1691 = vmatmul.mubr.f32.gmra.mrb[0].mxu0 %v1061
      %v1692 = vpop.f32.mrb[0].mxu0
      %v1693 = vadd.f32 %v1468, %v1692
      %v1694 = vpop.f32.mrb[0].mxu0
      %1695 = vmatprep.mubr.f32.mxu0 0.0
      %1696 = vmatmul.mubr.f32.gmra.mrb[0].mxu0 %v1064
      %v1697 = vpop.f32.mrb[0].mxu0
      %v1698 = vadd.f32 %v1473, %v1697
      %v1699 = vpop.f32.mrb[0].mxu0
      %1700 = vmatprep.mubr.f32.mxu0 0.0
      %1701 = vmatmul.mubr.f32.gmra.mrb[0].mxu0 %v1067
      %v1702 = vpop.f32.mrb[0].mxu0
      %v1703 = vadd.f32 %v1478, %v1702
      %v1704 = vpop.f32.mrb[0].mxu0
      %1705 = vmatprep.mubr.f32.mxu0 0.0
      %1706 = vmatmul.mubr.f32.gmra.mrb[0].mxu0 %v1070
      %v1707 = vpop.f32.mrb[0].mxu0
      %v1708 = vadd.f32 %v1483, %v1707
      %v1709 = vpop.f32.mrb[0].mxu0
      %1710 = vmatprep.mubr.f32.mxu0 0.0
      %1711 = vmatmul.mubr.f32.gmra.mrb[0].mxu0 %v1073
      %v1712 = vpop.f32.mrb[0].mxu0
      %v1713 = vadd.f32 %v1488, %v1712
      %v1714 = vpop.f32.mrb[0].mxu0
      %1715 = vdwg.mxu0
      %v1716 = vld [vmem:[%s6] sm:$0xff]
      %v1717 = vld [vmem:[%s6 + $0x8] sm:$0xff]
      %v1718 = vld [vmem:[%s6 + $0x10] sm:$0xff]
      %v1719 = vld [vmem:[%s6 + $0x18] sm:$0xff]
      %v1720 = vld [vmem:[%s6 + $0x20] sm:$0xff]
      %v1721 = vld [vmem:[%s6 + $0x28] sm:$0xff]
      %v1722 = vld [vmem:[%s6 + $0x30] sm:$0xff]
      %v1723 = vld [vmem:[%s6 + $0x38] sm:$0xff]
      %v1724 = vld [vmem:[%s7] sm:$0xff]
      %v1725 = vld [vmem:[%s7 + $0x8] sm:$0xff]
      %v1726 = vld [vmem:[%s7 + $0x10] sm:$0xff]
      %v1727 = vld [vmem:[%s7 + $0x18] sm:$0xff]
      %v1728 = vld [vmem:[%s7 + $0x20] sm:$0xff]
      %v1729 = vld [vmem:[%s7 + $0x28] sm:$0xff]
      %v1730 = vld [vmem:[%s7 + $0x30] sm:$0xff]
      %v1731 = vld [vmem:[%s7 + $0x38] sm:$0xff]
      %v1733 = vsel %vm635, %v1638, 0
      %v1736 = vsel %vm635, %v1643, 0
      %v1739 = vsel %vm635, %v1648, 0
      %v1742 = vsel %vm635, %v1653, 0
      %v1745 = vsel %vm635, %v1658, 0
      %v1748 = vsel %vm635, %v1663, 0
      %v1751 = vsel %vm635, %v1668, 0
      %v1754 = vsel %vm635, %v1673, 0
      %v1757 = vsel %vm635, %v1678, 0
      %v1760 = vsel %vm635, %v1683, 0
      %v1763 = vsel %vm635, %v1688, 0
      %v1766 = vsel %vm635, %v1693, 0
      %v1769 = vsel %vm635, %v1698, 0
      %v1772 = vsel %vm635, %v1703, 0
      %v1775 = vsel %vm635, %v1708, 0
      %v1778 = vsel %vm635, %v1713, 0
      %1780 = vmatprep.subr.mxu0 %v1725
      %1781 = vmatpush1.msra.mxu0 %v1724
      %1782 = vmatprep.subr.mxu0 %v1727
      %1783 = vmatpush1.msra.mxu0 %v1726
      %1784 = vmatprep.subr.mxu0 %v1729
      %1785 = vmatpush1.msra.mxu0 %v1728
      %1786 = vmatprep.subr.mxu0 %v1731
      %1787 = vmatpush1.msra.mxu0 %v1730
      %1788 = vmatprep.subr.mxu0 0.0
      %1789 = vmatpush1.msra.mxu0 0.0
      %1790 = vmatprep.subr.mxu0 0.0
      %1791 = vmatpush1.msra.mxu0 0.0
      %1792 = vmatprep.subr.mxu0 0.0
      %1793 = vmatpush1.msra.mxu0 0.0
      %1794 = vmatprep.subr.mxu0 0.0
      %1795 = vmatpush1.msra.mxu0 0.0
      %1796 = vmatprep.subr.mxu0 0.0
      %1797 = vmatpush1.msra.mxu0 0.0
      %1798 = vmatprep.subr.mxu0 0.0
      %1799 = vmatpush1.msra.mxu0 0.0
      %1800 = vmatprep.subr.mxu0 0.0
      %1801 = vmatpush1.msra.mxu0 0.0
      %1802 = vmatprep.subr.mxu0 0.0
      %1803 = vmatpush1.msra.mxu0 0.0
      %1804 = vmatprep.subr.mxu0 0.0
      %1805 = vmatpush1.msra.mxu0 0.0
      %1806 = vmatprep.subr.mxu0 0.0
      %1807 = vmatpush1.msra.mxu0 0.0
      %1808 = vmatprep.subr.mxu0 0.0
      %1809 = vmatpush1.msra.mxu0 0.0
      %1810 = vmatprep.subr.mxu0 0.0
      %1811 = vmatpush1.msra.mxu0 0.0
      %1812 = vmatprep.subr.mxu0 0.0
      %1813 = vmatpush1.msra.mxu0 0.0
      %1814 = vmatprep.subr.mxu0 0.0
      %1815 = vmatpush1.msra.mxu0 0.0
      %1816 = vmatprep.subr.mxu0 0.0
      %1817 = vmatpush1.msra.mxu0 0.0
      %1818 = vmatprep.subr.mxu0 0.0
      %1819 = vmatpush1.msra.mxu0 0.0
      %1820 = vmatprep.subr.mxu0 0.0
      %1821 = vmatpush1.msra.mxu0 0.0
      %1822 = vmatprep.subr.mxu0 0.0
      %1823 = vmatpush1.msra.mxu0 0.0
      %1824 = vmatprep.subr.mxu0 0.0
      %1825 = vmatpush1.msra.mxu0 0.0
      %1826 = vmatprep.subr.mxu0 0.0
      %1827 = vmatpush1.msra.mxu0 0.0
      %1828 = vmatprep.subr.mxu0 0.0
      %1829 = vmatpush1.msra.mxu0 0.0
      %1830 = vmatprep.subr.mxu0 0.0
      %1831 = vmatpush1.msra.mxu0 0.0
      %1832 = vmatprep.subr.mxu0 0.0
      %1833 = vmatpush1.msra.mxu0 0.0
      %1834 = vmatprep.subr.mxu0 0.0
      %1835 = vmatpush1.msra.mxu0 0.0
      %1836 = vmatprep.subr.mxu0 0.0
      %1837 = vmatpush1.msra.mxu0 0.0
      %1838 = vmatprep.subr.mxu0 0.0
      %1839 = vmatpush1.msra.mxu0 0.0
      %1840 = vmatprep.subr.mxu0 0.0
      %1841 = vmatpush1.msra.mxu0 0.0
      %1842 = vmatprep.subr.mxu0 0.0
      %1843 = vmatpush1.msra.mxu0 0.0
      %1844 = vmatprep.mubr.f32.mxu0 0.0
      %1845 = vmatmul.mubr.f32.gmra.mrb[0].mxu0 %v1733
      %v1846 = vpop.f32.mrb[0].mxu0
      %v1847 = vadd.f32 0.0, %v1846
      %v1848 = vpop.f32.mrb[0].mxu0
      %v1849 = vadd.f32 0.0, %v1848
      %1850 = vmatprep.mubr.f32.mxu0 0.0
      %1851 = vmatmul.mubr.f32.gmra.mrb[0].mxu0 %v1736
      %v1852 = vpop.f32.mrb[0].mxu0
      %v1853 = vadd.f32 0.0, %v1852
      %v1854 = vpop.f32.mrb[0].mxu0
      %v1855 = vadd.f32 0.0, %v1854
      %1856 = vmatprep.mubr.f32.mxu0 0.0
      %1857 = vmatmul.mubr.f32.gmra.mrb[0].mxu0 %v1739
      %v1858 = vpop.f32.mrb[0].mxu0
      %v1859 = vadd.f32 0.0, %v1858
      %v1860 = vpop.f32.mrb[0].mxu0
      %v1861 = vadd.f32 0.0, %v1860
      %1862 = vmatprep.mubr.f32.mxu0 0.0
      %1863 = vmatmul.mubr.f32.gmra.mrb[0].mxu0 %v1742
      %v1864 = vpop.f32.mrb[0].mxu0
      %v1865 = vadd.f32 0.0, %v1864
      %v1866 = vpop.f32.mrb[0].mxu0
      %v1867 = vadd.f32 0.0, %v1866
      %1868 = vmatprep.mubr.f32.mxu0 0.0
      %1869 = vmatmul.mubr.f32.gmra.mrb[0].mxu0 %v1745
      %v1870 = vpop.f32.mrb[0].mxu0
      %v1871 = vadd.f32 0.0, %v1870
      %v1872 = vpop.f32.mrb[0].mxu0
      %v1873 = vadd.f32 0.0, %v1872
      %1874 = vmatprep.mubr.f32.mxu0 0.0
      %1875 = vmatmul.mubr.f32.gmra.mrb[0].mxu0 %v1748
      %v1876 = vpop.f32.mrb[0].mxu0
      %v1877 = vadd.f32 0.0, %v1876
      %v1878 = vpop.f32.mrb[0].mxu0
      %v1879 = vadd.f32 0.0, %v1878
      %1880 = vmatprep.mubr.f32.mxu0 0.0
      %1881 = vmatmul.mubr.f32.gmra.mrb[0].mxu0 %v1751
      %v1882 = vpop.f32.mrb[0].mxu0
      %v1883 = vadd.f32 0.0, %v1882
      %v1884 = vpop.f32.mrb[0].mxu0
      %v1885 = vadd.f32 0.0, %v1884
      %1886 = vmatprep.mubr.f32.mxu0 0.0
      %1887 = vmatmul.mubr.f32.gmra.mrb[0].mxu0 %v1754
      %v1888 = vpop.f32.mrb[0].mxu0
      %v1889 = vadd.f32 0.0, %v1888
      %v1890 = vpop.f32.mrb[0].mxu0
      %v1891 = vadd.f32 0.0, %v1890
      %1892 = vmatprep.mubr.f32.mxu0 0.0
      %1893 = vmatmul.mubr.f32.gmra.mrb[0].mxu0 %v1757
      %v1894 = vpop.f32.mrb[0].mxu0
      %v1895 = vadd.f32 0.0, %v1894
      %v1896 = vpop.f32.mrb[0].mxu0
      %v1897 = vadd.f32 0.0, %v1896
      %1898 = vmatprep.mubr.f32.mxu0 0.0
      %1899 = vmatmul.mubr.f32.gmra.mrb[0].mxu0 %v1760
      %v1900 = vpop.f32.mrb[0].mxu0
      %v1901 = vadd.f32 0.0, %v1900
      %v1902 = vpop.f32.mrb[0].mxu0
      %v1903 = vadd.f32 0.0, %v1902
      %1904 = vmatprep.mubr.f32.mxu0 0.0
      %1905 = vmatmul.mubr.f32.gmra.mrb[0].mxu0 %v1763
      %v1906 = vpop.f32.mrb[0].mxu0
      %v1907 = vadd.f32 0.0, %v1906
      %v1908 = vpop.f32.mrb[0].mxu0
      %v1909 = vadd.f32 0.0, %v1908
      %1910 = vmatprep.mubr.f32.mxu0 0.0
      %1911 = vmatmul.mubr.f32.gmra.mrb[0].mxu0 %v1766
      %v1912 = vpop.f32.mrb[0].mxu0
      %v1913 = vadd.f32 0.0, %v1912
      %v1914 = vpop.f32.mrb[0].mxu0
      %v1915 = vadd.f32 0.0, %v1914
      %1916 = vmatprep.mubr.f32.mxu0 0.0
      %1917 = vmatmul.mubr.f32.gmra.mrb[0].mxu0 %v1769
      %v1918 = vpop.f32.mrb[0].mxu0
      %v1919 = vadd.f32 0.0, %v1918
      %v1920 = vpop.f32.mrb[0].mxu0
      %v1921 = vadd.f32 0.0, %v1920
      %1922 = vmatprep.mubr.f32.mxu0 0.0
      %1923 = vmatmul.mubr.f32.gmra.mrb[0].mxu0 %v1772
      %v1924 = vpop.f32.mrb[0].mxu0
      %v1925 = vadd.f32 0.0, %v1924
      %v1926 = vpop.f32.mrb[0].mxu0
      %v1927 = vadd.f32 0.0, %v1926
      %1928 = vmatprep.mubr.f32.mxu0 0.0
      %1929 = vmatmul.mubr.f32.gmra.mrb[0].mxu0 %v1775
      %v1930 = vpop.f32.mrb[0].mxu0
      %v1931 = vadd.f32 0.0, %v1930
      %v1932 = vpop.f32.mrb[0].mxu0
      %v1933 = vadd.f32 0.0, %v1932
      %1934 = vmatprep.mubr.f32.mxu0 0.0
      %1935 = vmatmul.mubr.f32.gmra.mrb[0].mxu0 %v1778
      %v1936 = vpop.f32.mrb[0].mxu0
      %v1937 = vadd.f32 0.0, %v1936
      %v1938 = vpop.f32.mrb[0].mxu0
      %v1939 = vadd.f32 0.0, %v1938
      %1940 = vdwg.mxu0
      %v1942 = vsel %vm635, %v1558, 0
      %v1945 = vsel %vm635, %v1563, 0
      %v1948 = vsel %vm635, %v1568, 0
      %v1951 = vsel %vm635, %v1573, 0
      %v1954 = vsel %vm635, %v1578, 0
      %v1957 = vsel %vm635, %v1583, 0
      %v1960 = vsel %vm635, %v1588, 0
      %v1963 = vsel %vm635, %v1593, 0
      %v1966 = vsel %vm635, %v1598, 0
      %v1969 = vsel %vm635, %v1603, 0
      %v1972 = vsel %vm635, %v1608, 0
      %v1975 = vsel %vm635, %v1613, 0
      %v1978 = vsel %vm635, %v1618, 0
      %v1981 = vsel %vm635, %v1623, 0
      %v1984 = vsel %vm635, %v1628, 0
      %v1987 = vsel %vm635, %v1633, 0
      %1989 = vmatprep.subr.mxu0 %v1717
      %1990 = vmatpush1.msra.mxu0 %v1716
      %1991 = vmatprep.subr.mxu0 %v1719
      %1992 = vmatpush1.msra.mxu0 %v1718
      %1993 = vmatprep.subr.mxu0 %v1721
      %1994 = vmatpush1.msra.mxu0 %v1720
      %1995 = vmatprep.subr.mxu0 %v1723
      %1996 = vmatpush1.msra.mxu0 %v1722
      %1997 = vmatprep.subr.mxu0 0.0
      %1998 = vmatpush1.msra.mxu0 0.0
      %1999 = vmatprep.subr.mxu0 0.0
      %2000 = vmatpush1.msra.mxu0 0.0
      %2001 = vmatprep.subr.mxu0 0.0
      %2002 = vmatpush1.msra.mxu0 0.0
      %2003 = vmatprep.subr.mxu0 0.0
      %2004 = vmatpush1.msra.mxu0 0.0
      %2005 = vmatprep.subr.mxu0 0.0
      %2006 = vmatpush1.msra.mxu0 0.0
      %2007 = vmatprep.subr.mxu0 0.0
      %2008 = vmatpush1.msra.mxu0 0.0
      %2009 = vmatprep.subr.mxu0 0.0
      %2010 = vmatpush1.msra.mxu0 0.0
      %2011 = vmatprep.subr.mxu0 0.0
      %2012 = vmatpush1.msra.mxu0 0.0
      %2013 = vmatprep.subr.mxu0 0.0
      %2014 = vmatpush1.msra.mxu0 0.0
      %2015 = vmatprep.subr.mxu0 0.0
      %2016 = vmatpush1.msra.mxu0 0.0
      %2017 = vmatprep.subr.mxu0 0.0
      %2018 = vmatpush1.msra.mxu0 0.0
      %2019 = vmatprep.subr.mxu0 0.0
      %2020 = vmatpush1.msra.mxu0 0.0
      %2021 = vmatprep.subr.mxu0 0.0
      %2022 = vmatpush1.msra.mxu0 0.0
      %2023 = vmatprep.subr.mxu0 0.0
      %2024 = vmatpush1.msra.mxu0 0.0
      %2025 = vmatprep.subr.mxu0 0.0
      %2026 = vmatpush1.msra.mxu0 0.0
      %2027 = vmatprep.subr.mxu0 0.0
      %2028 = vmatpush1.msra.mxu0 0.0
      %2029 = vmatprep.subr.mxu0 0.0
      %2030 = vmatpush1.msra.mxu0 0.0
      %2031 = vmatprep.subr.mxu0 0.0
      %2032 = vmatpush1.msra.mxu0 0.0
      %2033 = vmatprep.subr.mxu0 0.0
      %2034 = vmatpush1.msra.mxu0 0.0
      %2035 = vmatprep.subr.mxu0 0.0
      %2036 = vmatpush1.msra.mxu0 0.0
      %2037 = vmatprep.subr.mxu0 0.0
      %2038 = vmatpush1.msra.mxu0 0.0
      %2039 = vmatprep.subr.mxu0 0.0
      %2040 = vmatpush1.msra.mxu0 0.0
      %2041 = vmatprep.subr.mxu0 0.0
      %2042 = vmatpush1.msra.mxu0 0.0
      %2043 = vmatprep.subr.mxu0 0.0
      %2044 = vmatpush1.msra.mxu0 0.0
      %2045 = vmatprep.subr.mxu0 0.0
      %2046 = vmatpush1.msra.mxu0 0.0
      %2047 = vmatprep.subr.mxu0 0.0
      %2048 = vmatpush1.msra.mxu0 0.0
      %2049 = vmatprep.subr.mxu0 0.0
      %2050 = vmatpush1.msra.mxu0 0.0
      %2051 = vmatprep.subr.mxu0 0.0
      %2052 = vmatpush1.msra.mxu0 0.0
      %2053 = vmatprep.mubr.f32.mxu0 0.0
      %2054 = vmatmul.mubr.f32.gmra.mrb[0].mxu0 %v1942
      %v2055 = vpop.f32.mrb[0].mxu0
      %v2056 = vadd.f32 %v1847, %v2055
      %v2057 = vpop.f32.mrb[0].mxu0
      %v2058 = vadd.f32 %v1849, %v2057
      %2059 = vmatprep.mubr.f32.mxu0 0.0
      %2060 = vmatmul.mubr.f32.gmra.mrb[0].mxu0 %v1945
      %v2061 = vpop.f32.mrb[0].mxu0
      %v2062 = vadd.f32 %v1853, %v2061
      %v2063 = vpop.f32.mrb[0].mxu0
      %v2064 = vadd.f32 %v1855, %v2063
      %2065 = vmatprep.mubr.f32.mxu0 0.0
      %2066 = vmatmul.mubr.f32.gmra.mrb[0].mxu0 %v1948
      %v2067 = vpop.f32.mrb[0].mxu0
      %v2068 = vadd.f32 %v1859, %v2067
      %v2069 = vpop.f32.mrb[0].mxu0
      %v2070 = vadd.f32 %v1861, %v2069
      %2071 = vmatprep.mubr.f32.mxu0 0.0
      %2072 = vmatmul.mubr.f32.gmra.mrb[0].mxu0 %v1951
      %v2073 = vpop.f32.mrb[0].mxu0
      %v2074 = vadd.f32 %v1865, %v2073
      %v2075 = vpop.f32.mrb[0].mxu0
      %v2076 = vadd.f32 %v1867, %v2075
      %2077 = vmatprep.mubr.f32.mxu0 0.0
      %2078 = vmatmul.mubr.f32.gmra.mrb[0].mxu0 %v1954
      %v2079 = vpop.f32.mrb[0].mxu0
      %v2080 = vadd.f32 %v1871, %v2079
      %v2081 = vpop.f32.mrb[0].mxu0
      %v2082 = vadd.f32 %v1873, %v2081
      %2083 = vmatprep.mubr.f32.mxu0 0.0
      %2084 = vmatmul.mubr.f32.gmra.mrb[0].mxu0 %v1957
      %v2085 = vpop.f32.mrb[0].mxu0
      %v2086 = vadd.f32 %v1877, %v2085
      %v2087 = vpop.f32.mrb[0].mxu0
      %v2088 = vadd.f32 %v1879, %v2087
      %2089 = vmatprep.mubr.f32.mxu0 0.0
      %2090 = vmatmul.mubr.f32.gmra.mrb[0].mxu0 %v1960
      %v2091 = vpop.f32.mrb[0].mxu0
      %v2092 = vadd.f32 %v1883, %v2091
      %v2093 = vpop.f32.mrb[0].mxu0
      %v2094 = vadd.f32 %v1885, %v2093
      %2095 = vmatprep.mubr.f32.mxu0 0.0
      %2096 = vmatmul.mubr.f32.gmra.mrb[0].mxu0 %v1963
      %v2097 = vpop.f32.mrb[0].mxu0
      %v2098 = vadd.f32 %v1889, %v2097
      %v2099 = vpop.f32.mrb[0].mxu0
      %v2100 = vadd.f32 %v1891, %v2099
      %2101 = vmatprep.mubr.f32.mxu0 0.0
      %2102 = vmatmul.mubr.f32.gmra.mrb[0].mxu0 %v1966
      %v2103 = vpop.f32.mrb[0].mxu0
      %v2104 = vadd.f32 %v1895, %v2103
      %v2105 = vpop.f32.mrb[0].mxu0
      %v2106 = vadd.f32 %v1897, %v2105
      %2107 = vmatprep.mubr.f32.mxu0 0.0
      %2108 = vmatmul.mubr.f32.gmra.mrb[0].mxu0 %v1969
      %v2109 = vpop.f32.mrb[0].mxu0
      %v2110 = vadd.f32 %v1901, %v2109
      %v2111 = vpop.f32.mrb[0].mxu0
      %v2112 = vadd.f32 %v1903, %v2111
      %2113 = vmatprep.mubr.f32.mxu0 0.0
      %2114 = vmatmul.mubr.f32.gmra.mrb[0].mxu0 %v1972
      %v2115 = vpop.f32.mrb[0].mxu0
      %v2116 = vadd.f32 %v1907, %v2115
      %v2117 = vpop.f32.mrb[0].mxu0
      %v2118 = vadd.f32 %v1909, %v2117
      %2119 = vmatprep.mubr.f32.mxu0 0.0
      %2120 = vmatmul.mubr.f32.gmra.mrb[0].mxu0 %v1975
      %v2121 = vpop.f32.mrb[0].mxu0
      %v2122 = vadd.f32 %v1913, %v2121
      %v2123 = vpop.f32.mrb[0].mxu0
      %v2124 = vadd.f32 %v1915, %v2123
      %2125 = vmatprep.mubr.f32.mxu0 0.0
      %2126 = vmatmul.mubr.f32.gmra.mrb[0].mxu0 %v1978
      %v2127 = vpop.f32.mrb[0].mxu0
      %v2128 = vadd.f32 %v1919, %v2127
      %v2129 = vpop.f32.mrb[0].mxu0
      %v2130 = vadd.f32 %v1921, %v2129
      %2131 = vmatprep.mubr.f32.mxu0 0.0
      %2132 = vmatmul.mubr.f32.gmra.mrb[0].mxu0 %v1981
      %v2133 = vpop.f32.mrb[0].mxu0
      %v2134 = vadd.f32 %v1925, %v2133
      %v2135 = vpop.f32.mrb[0].mxu0
      %v2136 = vadd.f32 %v1927, %v2135
      %2137 = vmatprep.mubr.f32.mxu0 0.0
      %2138 = vmatmul.mubr.f32.gmra.mrb[0].mxu0 %v1984
      %v2139 = vpop.f32.mrb[0].mxu0
      %v2140 = vadd.f32 %v1931, %v2139
      %v2141 = vpop.f32.mrb[0].mxu0
      %v2142 = vadd.f32 %v1933, %v2141
      %2143 = vmatprep.mubr.f32.mxu0 0.0
      %2144 = vmatmul.mubr.f32.gmra.mrb[0].mxu0 %v1987
      %v2145 = vpop.f32.mrb[0].mxu0
      %v2146 = vadd.f32 %v1937, %v2145
      %v2147 = vpop.f32.mrb[0].mxu0
      %v2148 = vadd.f32 %v1939, %v2147
      %2149 = vdwg.mxu0
      %v2150 = vmax.f32 %v2056, 0.0
      %v2151 = vmax.f32 %v2058, 0.0
      %v2152 = vmax.f32 %v2062, 0.0
      %v2153 = vmax.f32 %v2064, 0.0
      %v2154 = vmax.f32 %v2068, 0.0
      %v2155 = vmax.f32 %v2070, 0.0
      %v2156 = vmax.f32 %v2074, 0.0
      %v2157 = vmax.f32 %v2076, 0.0
      %v2158 = vmax.f32 %v2080, 0.0
      %v2159 = vmax.f32 %v2082, 0.0
      %v2160 = vmax.f32 %v2086, 0.0
      %v2161 = vmax.f32 %v2088, 0.0
      %v2162 = vmax.f32 %v2092, 0.0
      %v2163 = vmax.f32 %v2094, 0.0
      %v2164 = vmax.f32 %v2098, 0.0
      %v2165 = vmax.f32 %v2100, 0.0
      %v2166 = vmax.f32 %v2104, 0.0
      %v2167 = vmax.f32 %v2106, 0.0
      %v2168 = vmax.f32 %v2110, 0.0
      %v2169 = vmax.f32 %v2112, 0.0
      %v2170 = vmax.f32 %v2116, 0.0
      %v2171 = vmax.f32 %v2118, 0.0
      %v2172 = vmax.f32 %v2122, 0.0
      %v2173 = vmax.f32 %v2124, 0.0
      %v2174 = vmax.f32 %v2128, 0.0
      %v2175 = vmax.f32 %v2130, 0.0
      %v2176 = vmax.f32 %v2134, 0.0
      %v2177 = vmax.f32 %v2136, 0.0
      %v2178 = vmax.f32 %v2140, 0.0
      %v2179 = vmax.f32 %v2142, 0.0
      %v2180 = vmax.f32 %v2146, 0.0
      %v2181 = vmax.f32 %v2148, 0.0
      %v2182 = vld [vmem:[%s8] sm:$0xff]
      %v2183 = vld [vmem:[%s8 + $0x8] sm:$0xff]
      %v2184 = vld [vmem:[%s8 + $0x10] sm:$0xff]
      %v2185 = vld [vmem:[%s8 + $0x18] sm:$0xff]
      %v2186 = vld [vmem:[%s8 + $0x20] sm:$0xff]
      %v2187 = vld [vmem:[%s8 + $0x28] sm:$0xff]
      %v2188 = vld [vmem:[%s8 + $0x30] sm:$0xff]
      %v2189 = vld [vmem:[%s8 + $0x38] sm:$0xff]
      %v2190 = vld [vmem:[%s8 + $0x40] sm:$0xff]
      %v2191 = vld [vmem:[%s8 + $0x48] sm:$0xff]
      %v2192 = vld [vmem:[%s8 + $0x50] sm:$0xff]
      %v2193 = vld [vmem:[%s8 + $0x58] sm:$0xff]
      %v2194 = vld [vmem:[%s8 + $0x60] sm:$0xff]
      %v2195 = vld [vmem:[%s8 + $0x68] sm:$0xff]
      %v2196 = vld [vmem:[%s8 + $0x70] sm:$0xff]
      %v2197 = vld [vmem:[%s8 + $0x78] sm:$0xff]
      %v2198 = vld [vmem:[%s9] sm:$0xff]
      %v2199 = vld [vmem:[%s9 + $0x8] sm:$0xff]
      %v2200 = vld [vmem:[%s9 + $0x10] sm:$0xff]
      %v2201 = vld [vmem:[%s9 + $0x18] sm:$0xff]
      %v2202 = vld [vmem:[%s9 + $0x20] sm:$0xff]
      %v2203 = vld [vmem:[%s9 + $0x28] sm:$0xff]
      %v2204 = vld [vmem:[%s9 + $0x30] sm:$0xff]
      %v2205 = vld [vmem:[%s9 + $0x38] sm:$0xff]
      %v2206 = vld [vmem:[%s9 + $0x40] sm:$0xff]
      %v2207 = vld [vmem:[%s9 + $0x48] sm:$0xff]
      %v2208 = vld [vmem:[%s9 + $0x50] sm:$0xff]
      %v2209 = vld [vmem:[%s9 + $0x58] sm:$0xff]
      %v2210 = vld [vmem:[%s9 + $0x60] sm:$0xff]
      %v2211 = vld [vmem:[%s9 + $0x68] sm:$0xff]
      %v2212 = vld [vmem:[%s9 + $0x70] sm:$0xff]
      %v2213 = vld [vmem:[%s9 + $0x78] sm:$0xff]
      %2215 = vset.pattern.permute.xlu0 0
      %2216 = vperm.xlu0 %2215, %v2198
      %v2217 = vpop.permute.xlu0 %2216
      %2220 = vset.pattern.permute.xlu0 0
      %2221 = vperm.xlu0 %2220, %v2199
      %v2222 = vpop.permute.xlu0 %2221
      %2225 = vset.pattern.permute.xlu0 0
      %2226 = vperm.xlu0 %2225, %v2200
      %v2227 = vpop.permute.xlu0 %2226
      %2230 = vset.pattern.permute.xlu0 0
      %2231 = vperm.xlu0 %2230, %v2201
      %v2232 = vpop.permute.xlu0 %2231
      %2235 = vset.pattern.permute.xlu0 0
      %2236 = vperm.xlu0 %2235, %v2202
      %v2237 = vpop.permute.xlu0 %2236
      %2240 = vset.pattern.permute.xlu0 0
      %2241 = vperm.xlu0 %2240, %v2203
      %v2242 = vpop.permute.xlu0 %2241
      %2245 = vset.pattern.permute.xlu0 0
      %2246 = vperm.xlu0 %2245, %v2204
      %v2247 = vpop.permute.xlu0 %2246
      %2250 = vset.pattern.permute.xlu0 0
      %2251 = vperm.xlu0 %2250, %v2205
      %v2252 = vpop.permute.xlu0 %2251
      %2255 = vset.pattern.permute.xlu0 0
      %2256 = vperm.xlu0 %2255, %v2206
      %v2257 = vpop.permute.xlu0 %2256
      %2260 = vset.pattern.permute.xlu0 0
      %2261 = vperm.xlu0 %2260, %v2207
      %v2262 = vpop.permute.xlu0 %2261
      %2265 = vset.pattern.permute.xlu0 0
      %2266 = vperm.xlu0 %2265, %v2208
      %v2267 = vpop.permute.xlu0 %2266
      %2270 = vset.pattern.permute.xlu0 0
      %2271 = vperm.xlu0 %2270, %v2209
      %v2272 = vpop.permute.xlu0 %2271
      %2275 = vset.pattern.permute.xlu0 0
      %2276 = vperm.xlu0 %2275, %v2210
      %v2277 = vpop.permute.xlu0 %2276
      %2280 = vset.pattern.permute.xlu0 0
      %2281 = vperm.xlu0 %2280, %v2211
      %v2282 = vpop.permute.xlu0 %2281
      %2285 = vset.pattern.permute.xlu0 0
      %2286 = vperm.xlu0 %2285, %v2212
      %v2287 = vpop.permute.xlu0 %2286
      %2290 = vset.pattern.permute.xlu0 0
      %2291 = vperm.xlu0 %2290, %v2213
      %v2292 = vpop.permute.xlu0 %2291
      %2294 = vmatprep.subr.mxu0 %v2151
      %2295 = vmatpush1.msra.mxu0 %v2150
      %2296 = vmatprep.subr.mxu0 %v2153
      %2297 = vmatpush1.msra.mxu0 %v2152
      %2298 = vmatprep.subr.mxu0 %v2155
      %2299 = vmatpush1.msra.mxu0 %v2154
      %2300 = vmatprep.subr.mxu0 %v2157
      %2301 = vmatpush1.msra.mxu0 %v2156
      %2302 = vmatprep.subr.mxu0 %v2159
      %2303 = vmatpush1.msra.mxu0 %v2158
      %2304 = vmatprep.subr.mxu0 %v2161
      %2305 = vmatpush1.msra.mxu0 %v2160
      %2306 = vmatprep.subr.mxu0 %v2163
      %2307 = vmatpush1.msra.mxu0 %v2162
      %2308 = vmatprep.subr.mxu0 %v2165
      %2309 = vmatpush1.msra.mxu0 %v2164
      %2310 = vmatprep.subr.mxu0 %v2167
      %2311 = vmatpush1.msra.mxu0 %v2166
      %2312 = vmatprep.subr.mxu0 %v2169
      %2313 = vmatpush1.msra.mxu0 %v2168
      %2314 = vmatprep.subr.mxu0 %v2171
      %2315 = vmatpush1.msra.mxu0 %v2170
      %2316 = vmatprep.subr.mxu0 %v2173
      %2317 = vmatpush1.msra.mxu0 %v2172
      %2318 = vmatprep.subr.mxu0 %v2175
      %2319 = vmatpush1.msra.mxu0 %v2174
      %2320 = vmatprep.subr.mxu0 %v2177
      %2321 = vmatpush1.msra.mxu0 %v2176
      %2322 = vmatprep.subr.mxu0 %v2179
      %2323 = vmatpush1.msra.mxu0 %v2178
      %2324 = vmatprep.subr.mxu0 %v2181
      %2325 = vmatpush1.msra.mxu0 %v2180
      %2326 = vmatprep.subr.mxu0 0.0
      %2327 = vmatpush1.msra.mxu0 0.0
      %2328 = vmatprep.subr.mxu0 0.0
      %2329 = vmatpush1.msra.mxu0 0.0
      %2330 = vmatprep.subr.mxu0 0.0
      %2331 = vmatpush1.msra.mxu0 0.0
      %2332 = vmatprep.subr.mxu0 0.0
      %2333 = vmatpush1.msra.mxu0 0.0
      %2334 = vmatprep.subr.mxu0 0.0
      %2335 = vmatpush1.msra.mxu0 0.0
      %2336 = vmatprep.subr.mxu0 0.0
      %2337 = vmatpush1.msra.mxu0 0.0
      %2338 = vmatprep.subr.mxu0 0.0
      %2339 = vmatpush1.msra.mxu0 0.0
      %2340 = vmatprep.subr.mxu0 0.0
      %2341 = vmatpush1.msra.mxu0 0.0
      %2342 = vmatprep.subr.mxu0 0.0
      %2343 = vmatpush1.msra.mxu0 0.0
      %2344 = vmatprep.subr.mxu0 0.0
      %2345 = vmatpush1.msra.mxu0 0.0
      %2346 = vmatprep.subr.mxu0 0.0
      %2347 = vmatpush1.msra.mxu0 0.0
      %2348 = vmatprep.subr.mxu0 0.0
      %2349 = vmatpush1.msra.mxu0 0.0
      %2350 = vmatprep.subr.mxu0 0.0
      %2351 = vmatpush1.msra.mxu0 0.0
      %2352 = vmatprep.subr.mxu0 0.0
      %2353 = vmatpush1.msra.mxu0 0.0
      %2354 = vmatprep.subr.mxu0 0.0
      %2355 = vmatpush1.msra.mxu0 0.0
      %2356 = vmatprep.subr.mxu0 0.0
      %2357 = vmatpush1.msra.mxu0 0.0
      %2358 = vmatprep.mubr.f32.mxu0 0.0
      %2359 = vmatmul.mubr.f32.gmra.mrb[0].mxu0 %v2182
      %v2360 = vpop.f32.mrb[0].mxu0
      %v2361 = vadd.f32 %v2217, %v2360
      %v2362 = vpop.f32.mrb[0].mxu0
      %v2363 = vadd.f32 %v2217, %v2362
      %2364 = vmatprep.mubr.f32.mxu0 0.0
      %2365 = vmatmul.mubr.f32.gmra.mrb[0].mxu0 %v2183
      %v2366 = vpop.f32.mrb[0].mxu0
      %v2367 = vadd.f32 %v2222, %v2366
      %v2368 = vpop.f32.mrb[0].mxu0
      %v2369 = vadd.f32 %v2222, %v2368
      %2370 = vmatprep.mubr.f32.mxu0 0.0
      %2371 = vmatmul.mubr.f32.gmra.mrb[0].mxu0 %v2184
      %v2372 = vpop.f32.mrb[0].mxu0
      %v2373 = vadd.f32 %v2227, %v2372
      %v2374 = vpop.f32.mrb[0].mxu0
      %v2375 = vadd.f32 %v2227, %v2374
      %2376 = vmatprep.mubr.f32.mxu0 0.0
      %2377 = vmatmul.mubr.f32.gmra.mrb[0].mxu0 %v2185
      %v2378 = vpop.f32.mrb[0].mxu0
      %v2379 = vadd.f32 %v2232, %v2378
      %v2380 = vpop.f32.mrb[0].mxu0
      %v2381 = vadd.f32 %v2232, %v2380
      %2382 = vmatprep.mubr.f32.mxu0 0.0
      %2383 = vmatmul.mubr.f32.gmra.mrb[0].mxu0 %v2186
      %v2384 = vpop.f32.mrb[0].mxu0
      %v2385 = vadd.f32 %v2237, %v2384
      %v2386 = vpop.f32.mrb[0].mxu0
      %v2387 = vadd.f32 %v2237, %v2386
      %2388 = vmatprep.mubr.f32.mxu0 0.0
      %2389 = vmatmul.mubr.f32.gmra.mrb[0].mxu0 %v2187
      %v2390 = vpop.f32.mrb[0].mxu0
      %v2391 = vadd.f32 %v2242, %v2390
      %v2392 = vpop.f32.mrb[0].mxu0
      %v2393 = vadd.f32 %v2242, %v2392
      %2394 = vmatprep.mubr.f32.mxu0 0.0
      %2395 = vmatmul.mubr.f32.gmra.mrb[0].mxu0 %v2188
      %v2396 = vpop.f32.mrb[0].mxu0
      %v2397 = vadd.f32 %v2247, %v2396
      %v2398 = vpop.f32.mrb[0].mxu0
      %v2399 = vadd.f32 %v2247, %v2398
      %2400 = vmatprep.mubr.f32.mxu0 0.0
      %2401 = vmatmul.mubr.f32.gmra.mrb[0].mxu0 %v2189
      %v2402 = vpop.f32.mrb[0].mxu0
      %v2403 = vadd.f32 %v2252, %v2402
      %v2404 = vpop.f32.mrb[0].mxu0
      %v2405 = vadd.f32 %v2252, %v2404
      %2406 = vmatprep.mubr.f32.mxu0 0.0
      %2407 = vmatmul.mubr.f32.gmra.mrb[0].mxu0 %v2190
      %v2408 = vpop.f32.mrb[0].mxu0
      %v2409 = vadd.f32 %v2257, %v2408
      %v2410 = vpop.f32.mrb[0].mxu0
      %v2411 = vadd.f32 %v2257, %v2410
      %2412 = vmatprep.mubr.f32.mxu0 0.0
      %2413 = vmatmul.mubr.f32.gmra.mrb[0].mxu0 %v2191
      %v2414 = vpop.f32.mrb[0].mxu0
      %v2415 = vadd.f32 %v2262, %v2414
      %v2416 = vpop.f32.mrb[0].mxu0
      %v2417 = vadd.f32 %v2262, %v2416
      %2418 = vmatprep.mubr.f32.mxu0 0.0
      %2419 = vmatmul.mubr.f32.gmra.mrb[0].mxu0 %v2192
      %v2420 = vpop.f32.mrb[0].mxu0
      %v2421 = vadd.f32 %v2267, %v2420
      %v2422 = vpop.f32.mrb[0].mxu0
      %v2423 = vadd.f32 %v2267, %v2422
      %2424 = vmatprep.mubr.f32.mxu0 0.0
      %2425 = vmatmul.mubr.f32.gmra.mrb[0].mxu0 %v2193
      %v2426 = vpop.f32.mrb[0].mxu0
      %v2427 = vadd.f32 %v2272, %v2426
      %v2428 = vpop.f32.mrb[0].mxu0
      %v2429 = vadd.f32 %v2272, %v2428
      %2430 = vmatprep.mubr.f32.mxu0 0.0
      %2431 = vmatmul.mubr.f32.gmra.mrb[0].mxu0 %v2194
      %v2432 = vpop.f32.mrb[0].mxu0
      %v2433 = vadd.f32 %v2277, %v2432
      %v2434 = vpop.f32.mrb[0].mxu0
      %v2435 = vadd.f32 %v2277, %v2434
      %2436 = vmatprep.mubr.f32.mxu0 0.0
      %2437 = vmatmul.mubr.f32.gmra.mrb[0].mxu0 %v2195
      %v2438 = vpop.f32.mrb[0].mxu0
      %v2439 = vadd.f32 %v2282, %v2438
      %v2440 = vpop.f32.mrb[0].mxu0
      %v2441 = vadd.f32 %v2282, %v2440
      %2442 = vmatprep.mubr.f32.mxu0 0.0
      %2443 = vmatmul.mubr.f32.gmra.mrb[0].mxu0 %v2196
      %v2444 = vpop.f32.mrb[0].mxu0
      %v2445 = vadd.f32 %v2287, %v2444
      %v2446 = vpop.f32.mrb[0].mxu0
      %v2447 = vadd.f32 %v2287, %v2446
      %2448 = vmatprep.mubr.f32.mxu0 0.0
      %2449 = vmatmul.mubr.f32.gmra.mrb[0].mxu0 %v2197
      %v2450 = vpop.f32.mrb[0].mxu0
      %v2451 = vadd.f32 %v2292, %v2450
      %v2452 = vpop.f32.mrb[0].mxu0
      %v2453 = vadd.f32 %v2292, %v2452
      %2454 = vdwg.mxu0
      %v2455 = vsub.f32 0.0, %v2361
      %v2456 = vsub.f32 0.0, %v2363
      %v2457 = vsub.f32 0.0, %v2367
      %v2458 = vsub.f32 0.0, %v2369
      %v2459 = vsub.f32 0.0, %v2373
      %v2460 = vsub.f32 0.0, %v2375
      %v2461 = vsub.f32 0.0, %v2379
      %v2462 = vsub.f32 0.0, %v2381
      %v2463 = vsub.f32 0.0, %v2385
      %v2464 = vsub.f32 0.0, %v2387
      %v2465 = vsub.f32 0.0, %v2391
      %v2466 = vsub.f32 0.0, %v2393
      %v2467 = vsub.f32 0.0, %v2397
      %v2468 = vsub.f32 0.0, %v2399
      %v2469 = vsub.f32 0.0, %v2403
      %v2470 = vsub.f32 0.0, %v2405
      %v2471 = vsub.f32 0.0, %v2409
      %v2472 = vsub.f32 0.0, %v2411
      %v2473 = vsub.f32 0.0, %v2415
      %v2474 = vsub.f32 0.0, %v2417
      %v2475 = vsub.f32 0.0, %v2421
      %v2476 = vsub.f32 0.0, %v2423
      %v2477 = vsub.f32 0.0, %v2427
      %v2478 = vsub.f32 0.0, %v2429
      %v2479 = vsub.f32 0.0, %v2433
      %v2480 = vsub.f32 0.0, %v2435
      %v2481 = vsub.f32 0.0, %v2439
      %v2482 = vsub.f32 0.0, %v2441
      %v2483 = vsub.f32 0.0, %v2445
      %v2484 = vsub.f32 0.0, %v2447
      %v2485 = vsub.f32 0.0, %v2451
      %v2486 = vsub.f32 0.0, %v2453
      %v2487 = vmul.f32 %v2455, 1.442695
      %v2488 = vpow.pop %v2487
      %v2489 = vmul.f32 %v2456, 1.442695
      %v2490 = vpow.pop %v2489
      %v2491 = vmul.f32 %v2457, 1.442695
      %v2492 = vpow.pop %v2491
      %v2493 = vmul.f32 %v2458, 1.442695
      %v2494 = vpow.pop %v2493
      %v2495 = vmul.f32 %v2459, 1.442695
      %v2496 = vpow.pop %v2495
      %v2497 = vmul.f32 %v2460, 1.442695
      %v2498 = vpow.pop %v2497
      %v2499 = vmul.f32 %v2461, 1.442695
      %v2500 = vpow.pop %v2499
      %v2501 = vmul.f32 %v2462, 1.442695
      %v2502 = vpow.pop %v2501
      %v2503 = vmul.f32 %v2463, 1.442695
      %v2504 = vpow.pop %v2503
      %v2505 = vmul.f32 %v2464, 1.442695
      %v2506 = vpow.pop %v2505
      %v2507 = vmul.f32 %v2465, 1.442695
      %v2508 = vpow.pop %v2507
      %v2509 = vmul.f32 %v2466, 1.442695
      %v2510 = vpow.pop %v2509
      %v2511 = vmul.f32 %v2467, 1.442695
      %v2512 = vpow.pop %v2511
      %v2513 = vmul.f32 %v2468, 1.442695
      %v2514 = vpow.pop %v2513
      %v2515 = vmul.f32 %v2469, 1.442695
      %v2516 = vpow.pop %v2515
      %v2517 = vmul.f32 %v2470, 1.442695
      %v2518 = vpow.pop %v2517
      %v2519 = vmul.f32 %v2471, 1.442695
      %v2520 = vpow.pop %v2519
      %v2521 = vmul.f32 %v2472, 1.442695
      %v2522 = vpow.pop %v2521
      %v2523 = vmul.f32 %v2473, 1.442695
      %v2524 = vpow.pop %v2523
      %v2525 = vmul.f32 %v2474, 1.442695
      %v2526 = vpow.pop %v2525
      %v2527 = vmul.f32 %v2475, 1.442695
      %v2528 = vpow.pop %v2527
      %v2529 = vmul.f32 %v2476, 1.442695
      %v2530 = vpow.pop %v2529
      %v2531 = vmul.f32 %v2477, 1.442695
      %v2532 = vpow.pop %v2531
      %v2533 = vmul.f32 %v2478, 1.442695
      %v2534 = vpow.pop %v2533
      %v2535 = vmul.f32 %v2479, 1.442695
      %v2536 = vpow.pop %v2535
      %v2537 = vmul.f32 %v2480, 1.442695
      %v2538 = vpow.pop %v2537
      %v2539 = vmul.f32 %v2481, 1.442695
      %v2540 = vpow.pop %v2539
      %v2541 = vmul.f32 %v2482, 1.442695
      %v2542 = vpow.pop %v2541
      %v2543 = vmul.f32 %v2483, 1.442695
      %v2544 = vpow.pop %v2543
      %v2545 = vmul.f32 %v2484, 1.442695
      %v2546 = vpow.pop %v2545
      %v2547 = vmul.f32 %v2485, 1.442695
      %v2548 = vpow.pop %v2547
      %v2549 = vmul.f32 %v2486, 1.442695
      %v2550 = vpow.pop %v2549
      %v2551 = vadd.f32 %v2488, 1.0
      %v2552 = vadd.f32 %v2490, 1.0
      %v2553 = vadd.f32 %v2492, 1.0
      %v2554 = vadd.f32 %v2494, 1.0
      %v2555 = vadd.f32 %v2496, 1.0
      %v2556 = vadd.f32 %v2498, 1.0
      %v2557 = vadd.f32 %v2500, 1.0
      %v2558 = vadd.f32 %v2502, 1.0
      %v2559 = vadd.f32 %v2504, 1.0
      %v2560 = vadd.f32 %v2506, 1.0
      %v2561 = vadd.f32 %v2508, 1.0
      %v2562 = vadd.f32 %v2510, 1.0
      %v2563 = vadd.f32 %v2512, 1.0
      %v2564 = vadd.f32 %v2514, 1.0
      %v2565 = vadd.f32 %v2516, 1.0
      %v2566 = vadd.f32 %v2518, 1.0
      %v2567 = vadd.f32 %v2520, 1.0
      %v2568 = vadd.f32 %v2522, 1.0
      %v2569 = vadd.f32 %v2524, 1.0
      %v2570 = vadd.f32 %v2526, 1.0
      %v2571 = vadd.f32 %v2528, 1.0
      %v2572 = vadd.f32 %v2530, 1.0
      %v2573 = vadd.f32 %v2532, 1.0
      %v2574 = vadd.f32 %v2534, 1.0
      %v2575 = vadd.f32 %v2536, 1.0
      %v2576 = vadd.f32 %v2538, 1.0
      %v2577 = vadd.f32 %v2540, 1.0
      %v2578 = vadd.f32 %v2542, 1.0
      %v2579 = vadd.f32 %v2544, 1.0
      %v2580 = vadd.f32 %v2546, 1.0
      %v2581 = vadd.f32 %v2548, 1.0
      %v2582 = vadd.f32 %v2550, 1.0
      %v2583 = vrcp.pop %v2551
      %v2584 = vmul.f32 1.0, %v2583
      %v2585 = vrcp.pop %v2552
      %v2586 = vmul.f32 1.0, %v2585
      %v2587 = vrcp.pop %v2553
      %v2588 = vmul.f32 1.0, %v2587
      %v2589 = vrcp.pop %v2554
      %v2590 = vmul.f32 1.0, %v2589
      %v2591 = vrcp.pop %v2555
      %v2592 = vmul.f32 1.0, %v2591
      %v2593 = vrcp.pop %v2556
      %v2594 = vmul.f32 1.0, %v2593
      %v2595 = vrcp.pop %v2557
      %v2596 = vmul.f32 1.0, %v2595
      %v2597 = vrcp.pop %v2558
      %v2598 = vmul.f32 1.0, %v2597
      %v2599 = vrcp.pop %v2559
      %v2600 = vmul.f32 1.0, %v2599
      %v2601 = vrcp.pop %v2560
      %v2602 = vmul.f32 1.0, %v2601
      %v2603 = vrcp.pop %v2561
      %v2604 = vmul.f32 1.0, %v2603
      %v2605 = vrcp.pop %v2562
      %v2606 = vmul.f32 1.0, %v2605
      %v2607 = vrcp.pop %v2563
      %v2608 = vmul.f32 1.0, %v2607
      %v2609 = vrcp.pop %v2564
      %v2610 = vmul.f32 1.0, %v2609
      %v2611 = vrcp.pop %v2565
      %v2612 = vmul.f32 1.0, %v2611
      %v2613 = vrcp.pop %v2566
      %v2614 = vmul.f32 1.0, %v2613
      %v2615 = vrcp.pop %v2567
      %v2616 = vmul.f32 1.0, %v2615
      %v2617 = vrcp.pop %v2568
      %v2618 = vmul.f32 1.0, %v2617
      %v2619 = vrcp.pop %v2569
      %v2620 = vmul.f32 1.0, %v2619
      %v2621 = vrcp.pop %v2570
      %v2622 = vmul.f32 1.0, %v2621
      %v2623 = vrcp.pop %v2571
      %v2624 = vmul.f32 1.0, %v2623
      %v2625 = vrcp.pop %v2572
      %v2626 = vmul.f32 1.0, %v2625
      %v2627 = vrcp.pop %v2573
      %v2628 = vmul.f32 1.0, %v2627
      %v2629 = vrcp.pop %v2574
      %v2630 = vmul.f32 1.0, %v2629
      %v2631 = vrcp.pop %v2575
      %v2632 = vmul.f32 1.0, %v2631
      %v2633 = vrcp.pop %v2576
      %v2634 = vmul.f32 1.0, %v2633
      %v2635 = vrcp.pop %v2577
      %v2636 = vmul.f32 1.0, %v2635
      %v2637 = vrcp.pop %v2578
      %v2638 = vmul.f32 1.0, %v2637
      %v2639 = vrcp.pop %v2579
      %v2640 = vmul.f32 1.0, %v2639
      %v2641 = vrcp.pop %v2580
      %v2642 = vmul.f32 1.0, %v2641
      %v2643 = vrcp.pop %v2581
      %v2644 = vmul.f32 1.0, %v2643
      %v2645 = vrcp.pop %v2582
      %v2646 = vmul.f32 1.0, %v2645
      %vm2647 = vcmask 130048
      %v2648 = vsel %vm2647, %v553, 0.0
      %2649 = vadd.xlane.f32.xlu0 %v2648
      %v2650 = vpop.xlane.xlu0 %2649
      %v2651 = vsel %vm2647, %v558, 0.0
      %2652 = vadd.xlane.f32.xlu0 %v2651
      %v2653 = vpop.xlane.xlu0 %2652
      %v2654 = vsel %vm2647, %v563, 0.0
      %2655 = vadd.xlane.f32.xlu0 %v2654
      %v2656 = vpop.xlane.xlu0 %2655
      %v2657 = vsel %vm2647, %v568, 0.0
      %2658 = vadd.xlane.f32.xlu0 %v2657
      %v2659 = vpop.xlane.xlu0 %2658
      %v2660 = vsel %vm2647, %v573, 0.0
      %2661 = vadd.xlane.f32.xlu0 %v2660
      %v2662 = vpop.xlane.xlu0 %2661
      %v2663 = vsel %vm2647, %v578, 0.0
      %2664 = vadd.xlane.f32.xlu0 %v2663
      %v2665 = vpop.xlane.xlu0 %2664
      %v2666 = vsel %vm2647, %v583, 0.0
      %2667 = vadd.xlane.f32.xlu0 %v2666
      %v2668 = vpop.xlane.xlu0 %2667
      %v2669 = vsel %vm2647, %v588, 0.0
      %2670 = vadd.xlane.f32.xlu0 %v2669
      %v2671 = vpop.xlane.xlu0 %2670
      %v2672 = vsel %vm2647, %v593, 0.0
      %2673 = vadd.xlane.f32.xlu0 %v2672
      %v2674 = vpop.xlane.xlu0 %2673
      %v2675 = vsel %vm2647, %v598, 0.0
      %2676 = vadd.xlane.f32.xlu0 %v2675
      %v2677 = vpop.xlane.xlu0 %2676
      %v2678 = vsel %vm2647, %v603, 0.0
      %2679 = vadd.xlane.f32.xlu0 %v2678
      %v2680 = vpop.xlane.xlu0 %2679
      %v2681 = vsel %vm2647, %v608, 0.0
      %2682 = vadd.xlane.f32.xlu0 %v2681
      %v2683 = vpop.xlane.xlu0 %2682
      %v2684 = vsel %vm2647, %v613, 0.0
      %2685 = vadd.xlane.f32.xlu0 %v2684
      %v2686 = vpop.xlane.xlu0 %2685
      %v2687 = vsel %vm2647, %v618, 0.0
      %2688 = vadd.xlane.f32.xlu0 %v2687
      %v2689 = vpop.xlane.xlu0 %2688
      %v2690 = vsel %vm2647, %v623, 0.0
      %2691 = vadd.xlane.f32.xlu0 %v2690
      %v2692 = vpop.xlane.xlu0 %2691
      %v2693 = vsel %vm2647, %v628, 0.0
      %2694 = vadd.xlane.f32.xlu0 %v2693
      %v2695 = vpop.xlane.xlu0 %2694
      %v2696 = vmul.f32 %v2650, 0.0625
      %v2697 = vmul.f32 %v2653, 0.0625
      %v2698 = vmul.f32 %v2656, 0.0625
      %v2699 = vmul.f32 %v2659, 0.0625
      %v2700 = vmul.f32 %v2662, 0.0625
      %v2701 = vmul.f32 %v2665, 0.0625
      %v2702 = vmul.f32 %v2668, 0.0625
      %v2703 = vmul.f32 %v2671, 0.0625
      %v2704 = vmul.f32 %v2674, 0.0625
      %v2705 = vmul.f32 %v2677, 0.0625
      %v2706 = vmul.f32 %v2680, 0.0625
      %v2707 = vmul.f32 %v2683, 0.0625
      %v2708 = vmul.f32 %v2686, 0.0625
      %v2709 = vmul.f32 %v2689, 0.0625
      %v2710 = vmul.f32 %v2692, 0.0625
      %v2711 = vmul.f32 %v2695, 0.0625
      %v2712 = vld [vmem:[%s10] sm:$0xff]
      %2713 = vmatprep.subr.mxu0 0.0
      %2714 = vmatpush1.msra.mxu0 %v2696
      %2715 = vmatprep.subr.mxu0 0.0
      %2716 = vmatpush1.msra.mxu0 %v2697
      %2717 = vmatprep.subr.mxu0 0.0
      %2718 = vmatpush1.msra.mxu0 %v2698
      %2719 = vmatprep.subr.mxu0 0.0
      %2720 = vmatpush1.msra.mxu0 %v2699
      %2721 = vmatprep.subr.mxu0 0.0
      %2722 = vmatpush1.msra.mxu0 %v2700
      %2723 = vmatprep.subr.mxu0 0.0
      %2724 = vmatpush1.msra.mxu0 %v2701
      %2725 = vmatprep.subr.mxu0 0.0
      %2726 = vmatpush1.msra.mxu0 %v2702
      %2727 = vmatprep.subr.mxu0 0.0
      %2728 = vmatpush1.msra.mxu0 %v2703
      %2729 = vmatprep.subr.mxu0 0.0
      %2730 = vmatpush1.msra.mxu0 %v2704
      %2731 = vmatprep.subr.mxu0 0.0
      %2732 = vmatpush1.msra.mxu0 %v2705
      %2733 = vmatprep.subr.mxu0 0.0
      %2734 = vmatpush1.msra.mxu0 %v2706
      %2735 = vmatprep.subr.mxu0 0.0
      %2736 = vmatpush1.msra.mxu0 %v2707
      %2737 = vmatprep.subr.mxu0 0.0
      %2738 = vmatpush1.msra.mxu0 %v2708
      %2739 = vmatprep.subr.mxu0 0.0
      %2740 = vmatpush1.msra.mxu0 %v2709
      %2741 = vmatprep.subr.mxu0 0.0
      %2742 = vmatpush1.msra.mxu0 %v2710
      %2743 = vmatprep.subr.mxu0 0.0
      %2744 = vmatpush1.msra.mxu0 %v2711
      %2745 = vmatprep.subr.mxu0 0.0
      %2746 = vmatpush1.msra.mxu0 0.0
      %2747 = vmatprep.subr.mxu0 0.0
      %2748 = vmatpush1.msra.mxu0 0.0
      %2749 = vmatprep.subr.mxu0 0.0
      %2750 = vmatpush1.msra.mxu0 0.0
      %2751 = vmatprep.subr.mxu0 0.0
      %2752 = vmatpush1.msra.mxu0 0.0
      %2753 = vmatprep.subr.mxu0 0.0
      %2754 = vmatpush1.msra.mxu0 0.0
      %2755 = vmatprep.subr.mxu0 0.0
      %2756 = vmatpush1.msra.mxu0 0.0
      %2757 = vmatprep.subr.mxu0 0.0
      %2758 = vmatpush1.msra.mxu0 0.0
      %2759 = vmatprep.subr.mxu0 0.0
      %2760 = vmatpush1.msra.mxu0 0.0
      %2761 = vmatprep.subr.mxu0 0.0
      %2762 = vmatpush1.msra.mxu0 0.0
      %2763 = vmatprep.subr.mxu0 0.0
      %2764 = vmatpush1.msra.mxu0 0.0
      %2765 = vmatprep.subr.mxu0 0.0
      %2766 = vmatpush1.msra.mxu0 0.0
      %2767 = vmatprep.subr.mxu0 0.0
      %2768 = vmatpush1.msra.mxu0 0.0
      %2769 = vmatprep.subr.mxu0 0.0
      %2770 = vmatpush1.msra.mxu0 0.0
      %2771 = vmatprep.subr.mxu0 0.0
      %2772 = vmatpush1.msra.mxu0 0.0
      %2773 = vmatprep.subr.mxu0 0.0
      %2774 = vmatpush1.msra.mxu0 0.0
      %2775 = vmatprep.subr.mxu0 0.0
      %2776 = vmatpush1.msra.mxu0 0.0
      %2777 = vmatprep.mubr.f32.mxu0 0.0
      %2778 = vmatmul.mubr.f32.gmra.mrb[0].mxu0 %v2712
      %v2779 = vpop.f32.mrb[0].mxu0
      %v2780 = vadd.f32 0.0, %v2779
      %v2781 = vpop.f32.mrb[0].mxu0
      %2782 = vdwg.mxu0
      %v2783 = vmax.f32 %v2780, 0.0
      %v2784 = vld [vmem:[%s11] sm:$0xff]
      %v2785 = vld [vmem:[%s11 + $0x8] sm:$0xff]
      %v2786 = vld [vmem:[%s11 + $0x10] sm:$0xff]
      %v2787 = vld [vmem:[%s11 + $0x18] sm:$0xff]
      %v2788 = vld [vmem:[%s11 + $0x20] sm:$0xff]
      %v2789 = vld [vmem:[%s11 + $0x28] sm:$0xff]
      %v2790 = vld [vmem:[%s11 + $0x30] sm:$0xff]
      %v2791 = vld [vmem:[%s11 + $0x38] sm:$0xff]
      %v2792 = vld [vmem:[%s11 + $0x40] sm:$0xff]
      %v2793 = vld [vmem:[%s11 + $0x48] sm:$0xff]
      %v2794 = vld [vmem:[%s11 + $0x50] sm:$0xff]
      %v2795 = vld [vmem:[%s11 + $0x58] sm:$0xff]
      %v2796 = vld [vmem:[%s11 + $0x60] sm:$0xff]
      %v2797 = vld [vmem:[%s11 + $0x68] sm:$0xff]
      %v2798 = vld [vmem:[%s11 + $0x70] sm:$0xff]
      %v2799 = vld [vmem:[%s11 + $0x78] sm:$0xff]
      %vm2800 = vcmask 64512
      %v2802 = vsel %vm2800, %v2784, 0
      %v2805 = vsel %vm2800, %v2785, 0
      %v2808 = vsel %vm2800, %v2786, 0
      %v2811 = vsel %vm2800, %v2787, 0
      %v2814 = vsel %vm2800, %v2788, 0
      %v2817 = vsel %vm2800, %v2789, 0
      %v2820 = vsel %vm2800, %v2790, 0
      %v2823 = vsel %vm2800, %v2791, 0
      %v2826 = vsel %vm2800, %v2792, 0
      %v2829 = vsel %vm2800, %v2793, 0
      %v2832 = vsel %vm2800, %v2794, 0
      %v2835 = vsel %vm2800, %v2795, 0
      %v2838 = vsel %vm2800, %v2796, 0
      %v2841 = vsel %vm2800, %v2797, 0
      %v2844 = vsel %vm2800, %v2798, 0
      %v2847 = vsel %vm2800, %v2799, 0
      %2849 = vmatprep.subr.mxu0 0.0
      %2850 = vmatpush1.msra.mxu0 %v2783
      %2851 = vmatprep.subr.mxu0 0.0
      %2852 = vmatpush1.msra.mxu0 0.0
      %2853 = vmatprep.subr.mxu0 0.0
      %2854 = vmatpush1.msra.mxu0 0.0
      %2855 = vmatprep.subr.mxu0 0.0
      %2856 = vmatpush1.msra.mxu0 0.0
      %2857 = vmatprep.subr.mxu0 0.0
      %2858 = vmatpush1.msra.mxu0 0.0
      %2859 = vmatprep.subr.mxu0 0.0
      %2860 = vmatpush1.msra.mxu0 0.0
      %2861 = vmatprep.subr.mxu0 0.0
      %2862 = vmatpush1.msra.mxu0 0.0
      %2863 = vmatprep.subr.mxu0 0.0
      %2864 = vmatpush1.msra.mxu0 0.0
      %2865 = vmatprep.subr.mxu0 0.0
      %2866 = vmatpush1.msra.mxu0 0.0
      %2867 = vmatprep.subr.mxu0 0.0
      %2868 = vmatpush1.msra.mxu0 0.0
      %2869 = vmatprep.subr.mxu0 0.0
      %2870 = vmatpush1.msra.mxu0 0.0
      %2871 = vmatprep.subr.mxu0 0.0
      %2872 = vmatpush1.msra.mxu0 0.0
      %2873 = vmatprep.subr.mxu0 0.0
      %2874 = vmatpush1.msra.mxu0 0.0
      %2875 = vmatprep.subr.mxu0 0.0
      %2876 = vmatpush1.msra.mxu0 0.0
      %2877 = vmatprep.subr.mxu0 0.0
      %2878 = vmatpush1.msra.mxu0 0.0
      %2879 = vmatprep.subr.mxu0 0.0
      %2880 = vmatpush1.msra.mxu0 0.0
      %2881 = vmatprep.subr.mxu0 0.0
      %2882 = vmatpush1.msra.mxu0 0.0
      %2883 = vmatprep.subr.mxu0 0.0
      %2884 = vmatpush1.msra.mxu0 0.0
      %2885 = vmatprep.subr.mxu0 0.0
      %2886 = vmatpush1.msra.mxu0 0.0
      %2887 = vmatprep.subr.mxu0 0.0
      %2888 = vmatpush1.msra.mxu0 0.0
      %2889 = vmatprep.subr.mxu0 0.0
      %2890 = vmatpush1.msra.mxu0 0.0
      %2891 = vmatprep.subr.mxu0 0.0
      %2892 = vmatpush1.msra.mxu0 0.0
      %2893 = vmatprep.subr.mxu0 0.0
      %2894 = vmatpush1.msra.mxu0 0.0
      %2895 = vmatprep.subr.mxu0 0.0
      %2896 = vmatpush1.msra.mxu0 0.0
      %2897 = vmatprep.subr.mxu0 0.0
      %2898 = vmatpush1.msra.mxu0 0.0
      %2899 = vmatprep.subr.mxu0 0.0
      %2900 = vmatpush1.msra.mxu0 0.0
      %2901 = vmatprep.subr.mxu0 0.0
      %2902 = vmatpush1.msra.mxu0 0.0
      %2903 = vmatprep.subr.mxu0 0.0
      %2904 = vmatpush1.msra.mxu0 0.0
      %2905 = vmatprep.subr.mxu0 0.0
      %2906 = vmatpush1.msra.mxu0 0.0
      %2907 = vmatprep.subr.mxu0 0.0
      %2908 = vmatpush1.msra.mxu0 0.0
      %2909 = vmatprep.subr.mxu0 0.0
      %2910 = vmatpush1.msra.mxu0 0.0
      %2911 = vmatprep.subr.mxu0 0.0
      %2912 = vmatpush1.msra.mxu0 0.0
      %2913 = vmatprep.mubr.f32.mxu0 0.0
      %2914 = vmatmul.mubr.f32.gmra.mrb[0].mxu0 %v2802
      %v2915 = vpop.f32.mrb[0].mxu0
      %v2916 = vadd.f32 0.0, %v2915
      %v2917 = vpop.f32.mrb[0].mxu0
      %2918 = vmatprep.mubr.f32.mxu0 0.0
      %2919 = vmatmul.mubr.f32.gmra.mrb[0].mxu0 %v2805
      %v2920 = vpop.f32.mrb[0].mxu0
      %v2921 = vadd.f32 0.0, %v2920
      %v2922 = vpop.f32.mrb[0].mxu0
      %2923 = vmatprep.mubr.f32.mxu0 0.0
      %2924 = vmatmul.mubr.f32.gmra.mrb[0].mxu0 %v2808
      %v2925 = vpop.f32.mrb[0].mxu0
      %v2926 = vadd.f32 0.0, %v2925
      %v2927 = vpop.f32.mrb[0].mxu0
      %2928 = vmatprep.mubr.f32.mxu0 0.0
      %2929 = vmatmul.mubr.f32.gmra.mrb[0].mxu0 %v2811
      %v2930 = vpop.f32.mrb[0].mxu0
      %v2931 = vadd.f32 0.0, %v2930
      %v2932 = vpop.f32.mrb[0].mxu0
      %2933 = vmatprep.mubr.f32.mxu0 0.0
      %2934 = vmatmul.mubr.f32.gmra.mrb[0].mxu0 %v2814
      %v2935 = vpop.f32.mrb[0].mxu0
      %v2936 = vadd.f32 0.0, %v2935
      %v2937 = vpop.f32.mrb[0].mxu0
      %2938 = vmatprep.mubr.f32.mxu0 0.0
      %2939 = vmatmul.mubr.f32.gmra.mrb[0].mxu0 %v2817
      %v2940 = vpop.f32.mrb[0].mxu0
      %v2941 = vadd.f32 0.0, %v2940
      %v2942 = vpop.f32.mrb[0].mxu0
      %2943 = vmatprep.mubr.f32.mxu0 0.0
      %2944 = vmatmul.mubr.f32.gmra.mrb[0].mxu0 %v2820
      %v2945 = vpop.f32.mrb[0].mxu0
      %v2946 = vadd.f32 0.0, %v2945
      %v2947 = vpop.f32.mrb[0].mxu0
      %2948 = vmatprep.mubr.f32.mxu0 0.0
      %2949 = vmatmul.mubr.f32.gmra.mrb[0].mxu0 %v2823
      %v2950 = vpop.f32.mrb[0].mxu0
      %v2951 = vadd.f32 0.0, %v2950
      %v2952 = vpop.f32.mrb[0].mxu0
      %2953 = vmatprep.mubr.f32.mxu0 0.0
      %2954 = vmatmul.mubr.f32.gmra.mrb[0].mxu0 %v2826
      %v2955 = vpop.f32.mrb[0].mxu0
      %v2956 = vadd.f32 0.0, %v2955
      %v2957 = vpop.f32.mrb[0].mxu0
      %2958 = vmatprep.mubr.f32.mxu0 0.0
      %2959 = vmatmul.mubr.f32.gmra.mrb[0].mxu0 %v2829
      %v2960 = vpop.f32.mrb[0].mxu0
      %v2961 = vadd.f32 0.0, %v2960
      %v2962 = vpop.f32.mrb[0].mxu0
      %2963 = vmatprep.mubr.f32.mxu0 0.0
      %2964 = vmatmul.mubr.f32.gmra.mrb[0].mxu0 %v2832
      %v2965 = vpop.f32.mrb[0].mxu0
      %v2966 = vadd.f32 0.0, %v2965
      %v2967 = vpop.f32.mrb[0].mxu0
      %2968 = vmatprep.mubr.f32.mxu0 0.0
      %2969 = vmatmul.mubr.f32.gmra.mrb[0].mxu0 %v2835
      %v2970 = vpop.f32.mrb[0].mxu0
      %v2971 = vadd.f32 0.0, %v2970
      %v2972 = vpop.f32.mrb[0].mxu0
      %2973 = vmatprep.mubr.f32.mxu0 0.0
      %2974 = vmatmul.mubr.f32.gmra.mrb[0].mxu0 %v2838
      %v2975 = vpop.f32.mrb[0].mxu0
      %v2976 = vadd.f32 0.0, %v2975
      %v2977 = vpop.f32.mrb[0].mxu0
      %2978 = vmatprep.mubr.f32.mxu0 0.0
      %2979 = vmatmul.mubr.f32.gmra.mrb[0].mxu0 %v2841
      %v2980 = vpop.f32.mrb[0].mxu0
      %v2981 = vadd.f32 0.0, %v2980
      %v2982 = vpop.f32.mrb[0].mxu0
      %2983 = vmatprep.mubr.f32.mxu0 0.0
      %2984 = vmatmul.mubr.f32.gmra.mrb[0].mxu0 %v2844
      %v2985 = vpop.f32.mrb[0].mxu0
      %v2986 = vadd.f32 0.0, %v2985
      %v2987 = vpop.f32.mrb[0].mxu0
      %2988 = vmatprep.mubr.f32.mxu0 0.0
      %2989 = vmatmul.mubr.f32.gmra.mrb[0].mxu0 %v2847
      %v2990 = vpop.f32.mrb[0].mxu0
      %v2991 = vadd.f32 0.0, %v2990
      %v2992 = vpop.f32.mrb[0].mxu0
      %2993 = vdwg.mxu0
      %v2994 = vsub.f32 0.0, %v2916
      %v2995 = vsub.f32 0.0, %v2921
      %v2996 = vsub.f32 0.0, %v2926
      %v2997 = vsub.f32 0.0, %v2931
      %v2998 = vsub.f32 0.0, %v2936
      %v2999 = vsub.f32 0.0, %v2941
      %v3000 = vsub.f32 0.0, %v2946
      %v3001 = vsub.f32 0.0, %v2951
      %v3002 = vsub.f32 0.0, %v2956
      %v3003 = vsub.f32 0.0, %v2961
      %v3004 = vsub.f32 0.0, %v2966
      %v3005 = vsub.f32 0.0, %v2971
      %v3006 = vsub.f32 0.0, %v2976
      %v3007 = vsub.f32 0.0, %v2981
      %v3008 = vsub.f32 0.0, %v2986
      %v3009 = vsub.f32 0.0, %v2991
      %v3010 = vmul.f32 %v2994, 1.442695
      %v3011 = vpow.pop %v3010
      %v3012 = vmul.f32 %v2995, 1.442695
      %v3013 = vpow.pop %v3012
      %v3014 = vmul.f32 %v2996, 1.442695
      %v3015 = vpow.pop %v3014
      %v3016 = vmul.f32 %v2997, 1.442695
      %v3017 = vpow.pop %v3016
      %v3018 = vmul.f32 %v2998, 1.442695
      %v3019 = vpow.pop %v3018
      %v3020 = vmul.f32 %v2999, 1.442695
      %v3021 = vpow.pop %v3020
      %v3022 = vmul.f32 %v3000, 1.442695
      %v3023 = vpow.pop %v3022
      %v3024 = vmul.f32 %v3001, 1.442695
      %v3025 = vpow.pop %v3024
      %v3026 = vmul.f32 %v3002, 1.442695
      %v3027 = vpow.pop %v3026
      %v3028 = vmul.f32 %v3003, 1.442695
      %v3029 = vpow.pop %v3028
      %v3030 = vmul.f32 %v3004, 1.442695
      %v3031 = vpow.pop %v3030
      %v3032 = vmul.f32 %v3005, 1.442695
      %v3033 = vpow.pop %v3032
      %v3034 = vmul.f32 %v3006, 1.442695
      %v3035 = vpow.pop %v3034
      %v3036 = vmul.f32 %v3007, 1.442695
      %v3037 = vpow.pop %v3036
      %v3038 = vmul.f32 %v3008, 1.442695
      %v3039 = vpow.pop %v3038
      %v3040 = vmul.f32 %v3009, 1.442695
      %v3041 = vpow.pop %v3040
      %v3042 = vadd.f32 %v3011, 1.0
      %v3043 = vadd.f32 %v3013, 1.0
      %v3044 = vadd.f32 %v3015, 1.0
      %v3045 = vadd.f32 %v3017, 1.0
      %v3046 = vadd.f32 %v3019, 1.0
      %v3047 = vadd.f32 %v3021, 1.0
      %v3048 = vadd.f32 %v3023, 1.0
      %v3049 = vadd.f32 %v3025, 1.0
      %v3050 = vadd.f32 %v3027, 1.0
      %v3051 = vadd.f32 %v3029, 1.0
      %v3052 = vadd.f32 %v3031, 1.0
      %v3053 = vadd.f32 %v3033, 1.0
      %v3054 = vadd.f32 %v3035, 1.0
      %v3055 = vadd.f32 %v3037, 1.0
      %v3056 = vadd.f32 %v3039, 1.0
      %v3057 = vadd.f32 %v3041, 1.0
      %v3058 = vrcp.pop %v3042
      %v3059 = vmul.f32 1.0, %v3058
      %v3060 = vrcp.pop %v3043
      %v3061 = vmul.f32 1.0, %v3060
      %v3062 = vrcp.pop %v3044
      %v3063 = vmul.f32 1.0, %v3062
      %v3064 = vrcp.pop %v3045
      %v3065 = vmul.f32 1.0, %v3064
      %v3066 = vrcp.pop %v3046
      %v3067 = vmul.f32 1.0, %v3066
      %v3068 = vrcp.pop %v3047
      %v3069 = vmul.f32 1.0, %v3068
      %v3070 = vrcp.pop %v3048
      %v3071 = vmul.f32 1.0, %v3070
      %v3072 = vrcp.pop %v3049
      %v3073 = vmul.f32 1.0, %v3072
      %v3074 = vrcp.pop %v3050
      %v3075 = vmul.f32 1.0, %v3074
      %v3076 = vrcp.pop %v3051
      %v3077 = vmul.f32 1.0, %v3076
      %v3078 = vrcp.pop %v3052
      %v3079 = vmul.f32 1.0, %v3078
      %v3080 = vrcp.pop %v3053
      %v3081 = vmul.f32 1.0, %v3080
      %v3082 = vrcp.pop %v3054
      %v3083 = vmul.f32 1.0, %v3082
      %v3084 = vrcp.pop %v3055
      %v3085 = vmul.f32 1.0, %v3084
      %v3086 = vrcp.pop %v3056
      %v3087 = vmul.f32 1.0, %v3086
      %v3088 = vrcp.pop %v3057
      %v3089 = vmul.f32 1.0, %v3088
      %v3090 = vmul.f32 %v422, %v2584
      %v3091 = vmul.f32 %v423, %v2586
      %v3092 = vmul.f32 %v424, %v2588
      %v3093 = vmul.f32 %v425, %v2590
      %v3094 = vmul.f32 %v426, %v2592
      %v3095 = vmul.f32 %v427, %v2594
      %v3096 = vmul.f32 %v428, %v2596
      %v3097 = vmul.f32 %v429, %v2598
      %v3098 = vmul.f32 %v430, %v2600
      %v3099 = vmul.f32 %v431, %v2602
      %v3100 = vmul.f32 %v432, %v2604
      %v3101 = vmul.f32 %v433, %v2606
      %v3102 = vmul.f32 %v434, %v2608
      %v3103 = vmul.f32 %v435, %v2610
      %v3104 = vmul.f32 %v436, %v2612
      %v3105 = vmul.f32 %v437, %v2614
      %v3106 = vmul.f32 %v438, %v2616
      %v3107 = vmul.f32 %v439, %v2618
      %v3108 = vmul.f32 %v440, %v2620
      %v3109 = vmul.f32 %v441, %v2622
      %v3110 = vmul.f32 %v442, %v2624
      %v3111 = vmul.f32 %v443, %v2626
      %v3112 = vmul.f32 %v444, %v2628
      %v3113 = vmul.f32 %v445, %v2630
      %v3114 = vmul.f32 %v446, %v2632
      %v3115 = vmul.f32 %v447, %v2634
      %v3116 = vmul.f32 %v448, %v2636
      %v3117 = vmul.f32 %v449, %v2638
      %v3118 = vmul.f32 %v450, %v2640
      %v3119 = vmul.f32 %v451, %v2642
      %v3120 = vmul.f32 %v452, %v2644
      %v3121 = vmul.f32 %v453, %v2646
      %3123 = vset.pattern.permute.xlu0 0
      %3124 = vperm.xlu0 %3123, %v3059
      %v3125 = vpop.permute.xlu0 %3124
      %3128 = vset.pattern.permute.xlu0 0
      %3129 = vperm.xlu0 %3128, %v3061
      %v3130 = vpop.permute.xlu0 %3129
      %3133 = vset.pattern.permute.xlu0 0
      %3134 = vperm.xlu0 %3133, %v3063
      %v3135 = vpop.permute.xlu0 %3134
      %3138 = vset.pattern.permute.xlu0 0
      %3139 = vperm.xlu0 %3138, %v3065
      %v3140 = vpop.permute.xlu0 %3139
      %3143 = vset.pattern.permute.xlu0 0
      %3144 = vperm.xlu0 %3143, %v3067
      %v3145 = vpop.permute.xlu0 %3144
      %3148 = vset.pattern.permute.xlu0 0
      %3149 = vperm.xlu0 %3148, %v3069
      %v3150 = vpop.permute.xlu0 %3149
      %3153 = vset.pattern.permute.xlu0 0
      %3154 = vperm.xlu0 %3153, %v3071
      %v3155 = vpop.permute.xlu0 %3154
      %3158 = vset.pattern.permute.xlu0 0
      %3159 = vperm.xlu0 %3158, %v3073
      %v3160 = vpop.permute.xlu0 %3159
      %3163 = vset.pattern.permute.xlu0 0
      %3164 = vperm.xlu0 %3163, %v3075
      %v3165 = vpop.permute.xlu0 %3164
      %3168 = vset.pattern.permute.xlu0 0
      %3169 = vperm.xlu0 %3168, %v3077
      %v3170 = vpop.permute.xlu0 %3169
      %3173 = vset.pattern.permute.xlu0 0
      %3174 = vperm.xlu0 %3173, %v3079
      %v3175 = vpop.permute.xlu0 %3174
      %3178 = vset.pattern.permute.xlu0 0
      %3179 = vperm.xlu0 %3178, %v3081
      %v3180 = vpop.permute.xlu0 %3179
      %3183 = vset.pattern.permute.xlu0 0
      %3184 = vperm.xlu0 %3183, %v3083
      %v3185 = vpop.permute.xlu0 %3184
      %3188 = vset.pattern.permute.xlu0 0
      %3189 = vperm.xlu0 %3188, %v3085
      %v3190 = vpop.permute.xlu0 %3189
      %3193 = vset.pattern.permute.xlu0 0
      %3194 = vperm.xlu0 %3193, %v3087
      %v3195 = vpop.permute.xlu0 %3194
      %3198 = vset.pattern.permute.xlu0 0
      %3199 = vperm.xlu0 %3198, %v3089
      %v3200 = vpop.permute.xlu0 %3199
      %v3202 = vmul.f32 %v3090, %v3125
      %v3203 = vmul.f32 %v3091, %v3125
      %v3204 = vmul.f32 %v3092, %v3130
      %v3205 = vmul.f32 %v3093, %v3130
      %v3206 = vmul.f32 %v3094, %v3135
      %v3207 = vmul.f32 %v3095, %v3135
      %v3208 = vmul.f32 %v3096, %v3140
      %v3209 = vmul.f32 %v3097, %v3140
      %v3210 = vmul.f32 %v3098, %v3145
      %v3211 = vmul.f32 %v3099, %v3145
      %v3212 = vmul.f32 %v3100, %v3150
      %v3213 = vmul.f32 %v3101, %v3150
      %v3214 = vmul.f32 %v3102, %v3155
      %v3215 = vmul.f32 %v3103, %v3155
      %v3216 = vmul.f32 %v3104, %v3160
      %v3217 = vmul.f32 %v3105, %v3160
      %v3218 = vmul.f32 %v3106, %v3165
      %v3219 = vmul.f32 %v3107, %v3165
      %v3220 = vmul.f32 %v3108, %v3170
      %v3221 = vmul.f32 %v3109, %v3170
      %v3222 = vmul.f32 %v3110, %v3175
      %v3223 = vmul.f32 %v3111, %v3175
      %v3224 = vmul.f32 %v3112, %v3180
      %v3225 = vmul.f32 %v3113, %v3180
      %v3226 = vmul.f32 %v3114, %v3185
      %v3227 = vmul.f32 %v3115, %v3185
      %v3228 = vmul.f32 %v3116, %v3190
      %v3229 = vmul.f32 %v3117, %v3190
      %v3230 = vmul.f32 %v3118, %v3195
      %v3231 = vmul.f32 %v3119, %v3195
      %v3232 = vmul.f32 %v3120, %v3200
      %v3233 = vmul.f32 %v3121, %v3200
      %3234 = vst [vmem:[%s420] sm:$0xff] %v3202
      %3235 = vst [vmem:[%s420 + $0x8] sm:$0xff] %v3203
      %3236 = vst [vmem:[%s420 + $0x10] sm:$0xff] %v3204
      %3237 = vst [vmem:[%s420 + $0x18] sm:$0xff] %v3205
      %3238 = vst [vmem:[%s420 + $0x20] sm:$0xff] %v3206
      %3239 = vst [vmem:[%s420 + $0x28] sm:$0xff] %v3207
      %3240 = vst [vmem:[%s420 + $0x30] sm:$0xff] %v3208
      %3241 = vst [vmem:[%s420 + $0x38] sm:$0xff] %v3209
      %3242 = vst [vmem:[%s420 + $0x40] sm:$0xff] %v3210
      %3243 = vst [vmem:[%s420 + $0x48] sm:$0xff] %v3211
      %3244 = vst [vmem:[%s420 + $0x50] sm:$0xff] %v3212
      %3245 = vst [vmem:[%s420 + $0x58] sm:$0xff] %v3213
      %3246 = vst [vmem:[%s420 + $0x60] sm:$0xff] %v3214
      %3247 = vst [vmem:[%s420 + $0x68] sm:$0xff] %v3215
      %3248 = vst [vmem:[%s420 + $0x70] sm:$0xff] %v3216
      %3249 = vst [vmem:[%s420 + $0x78] sm:$0xff] %v3217
      %3250 = vst [vmem:[%s420 + $0x80] sm:$0xff] %v3218
      %3251 = vst [vmem:[%s420 + $0x88] sm:$0xff] %v3219
      %3252 = vst [vmem:[%s420 + $0x90] sm:$0xff] %v3220
      %3253 = vst [vmem:[%s420 + $0x98] sm:$0xff] %v3221
      %3254 = vst [vmem:[%s420 + $0xa0] sm:$0xff] %v3222
      %3255 = vst [vmem:[%s420 + $0xa8] sm:$0xff] %v3223
      %3256 = vst [vmem:[%s420 + $0xb0] sm:$0xff] %v3224
      %3257 = vst [vmem:[%s420 + $0xb8] sm:$0xff] %v3225
      %3258 = vst [vmem:[%s420 + $0xc0] sm:$0xff] %v3226
      %3259 = vst [vmem:[%s420 + $0xc8] sm:$0xff] %v3227
      %3260 = vst [vmem:[%s420 + $0xd0] sm:$0xff] %v3228
      %3261 = vst [vmem:[%s420 + $0xd8] sm:$0xff] %v3229
      %3262 = vst [vmem:[%s420 + $0xe0] sm:$0xff] %v3230
      %3263 = vst [vmem:[%s420 + $0xe8] sm:$0xff] %v3231
      %3264 = vst [vmem:[%s420 + $0xf0] sm:$0xff] %v3232
      %3265 = vst [vmem:[%s420 + $0xf8] sm:$0xff] %v3233
      %s3266 = smul.u32 16, %s23
      %p3267 = scmp.lt.s32.totalorder %s3266, 31
      %s3268 = scalar_select %p3267, %s3266, 31
      %s3269 = smul.addr %s3268, 2
      %s3270 = smul.addr %s3269, 8
      %s3271 = scalar_lea.vmem %s12, %s3270
      // Predicated region
      $region69: #{spbdislock_forward.1} parent=67 // pred_check
        %p3272 = pneg %p298
      $region70: #{spbdislock_forward.1} parent=67 // pred_check_branch
        %3274 = sbr.rel (%p3272) target = $region72
      $region71: #{spbdislock_forward.1} parent=67 // pred_region
        %s3275 = smul.u32 16, %s23
      $region72: #{spbdislock_forward.1} parent=67 // pred_fallthru
        _
    $region68: #{spbdislock_forward.1} parent=5 // pred_fallthru
      _
    %p3276 = scmp.le.s32.totalorder 2, %s18
    // Predicated region
    $region73: #{spbdislock_forward.1} parent=5 // pred_check
      %p3277 = pneg %p3276
    $region74: #{spbdislock_forward.1} parent=5 // pred_check_branch
      %3279 = sbr.rel (%p3277) target = $region76
    $region75: #{spbdislock_forward.1} parent=5 // pred_region
      %s3280 = ssub.s32 %s18, 2
      // Predicated region
      $region77: #{spbdislock_forward.1} parent=75 // pred_check
        %p3281 = pneg %p304
      $region78: #{spbdislock_forward.1} parent=75 // pred_check_branch
        %3283 = sbr.rel (%p3281) target = $region80
      $region79: #{spbdislock_forward.1} parent=75 // pred_region
        %s3284 = smul.u32 16, %s24
        %p3285 = scmp.lt.s32.totalorder %s3284, 31
        %s3286 = scalar_select %p3285, %s3284, 31
        %s3287 = smul.addr %s3286, 2
        %s3288 = smul.addr %s3287, 8
        %s3289 = scalar_lea.vmem %s12, %s3288
      $region80: #{spbdislock_forward.1} parent=75 // pred_fallthru
        _
    $region76: #{spbdislock_forward.1} parent=5 // pred_fallthru
      _
  $region6: #{spbdislock_forward.1} parent=0 // loop_footer
    %s22 = sadd.s32 1, %s18
  $region7: #{spbdislock_forward.1} parent=0 // loop_footer_branch
    %17 = sbr.rel target = $region3
  $region8: #{spbdislock_forward.1} parent=0 // loop_exit
    _

</llo_original>
